<compile_context>
chip_gen: v6e
topology: v6e:2x2x1
jax: 0.10.0
libtpu: 0.0.40
codegen_flags: <defaults>
</compile_context>

<pallas_src>
import functools
import math

import jax
import jax.numpy as jnp
from jax.experimental import pallas as pl
from jax.experimental.pallas import tpu as pltpu

NUM_FEATURES = 32
AG_NUM_FEATURES = 32
BN_EPS = 1e-5
F = NUM_FEATURES
HALO = 8          # zero halo at both ends of the row-stacked scratch (>= max dilation 4)
GAP = 8           # zero gap between stacked sequences (>= max dilation 4)

assert NUM_FEATURES == AG_NUM_FEATURES


# ---------------------------------------------------------------------------
# Fused forward kernel (single grid step; both samples row-stacked)
# ---------------------------------------------------------------------------
def epitope_fused_kernel(
    ab_ref, ag_ref, abm_ref, agm_ref,                 # inputs / masks
    w1_ref, w2_ref, w3_ref,                           # tap-stacked bf16 conv weights
    s1_ref, h1_ref, s2_ref, h2_ref, s3_ref, h3_ref,   # eval-BN scale/shift (row0=ab,row1=ag)
    a12w_ref, a12b_ref, bn4s_ref, bn4h_ref,           # merged attention 1x1 convs, bn4
    fcw_ref, fcb_ref,                                 # final fc
    out_ref, attn_ref,                                # outputs
    scr_ref, mrow_ref,                                # VMEM scratch (row stack, row mask)
    *, seq_len):
  L = seq_len
  M = 4 * L + 3 * GAP                        # stacked interior rows: ab0|ab1|ag0|ag1
  AG0 = 2 * (L + GAP)                        # first interior row of the ag branch
  bf16, f32 = jnp.bfloat16, jnp.float32

  def srow(s):   # absolute scratch row where stacked sequence s starts
    return HALO + s * (L + GAP)

  def irow(s):   # interior-relative row slice of stacked sequence s
    return slice(s * (L + GAP), s * (L + GAP) + L)

  # ---- stage the 4 sequences into one zero-padded row stack -------------------
  # Halo/gap rows stay zero and provide the conv zero padding for every sequence
  # and every dilation (<= GAP).  Single grid step -> zeroed exactly once.
  scr_ref[...] = jnp.zeros(scr_ref.shape, scr_ref.dtype)
  mrow_ref[...] = jnp.zeros(mrow_ref.shape, mrow_ref.dtype)
  zf = jnp.zeros((L, F), f32)
  scr_ref[srow(0):srow(0) + L, 0:2 * F] = jnp.concatenate([ab_ref[0], zf], axis=1)
  scr_ref[srow(1):srow(1) + L, 0:2 * F] = jnp.concatenate([ab_ref[1], zf], axis=1)
  scr_ref[srow(2):srow(2) + L, 0:2 * F] = jnp.concatenate([zf, ag_ref[0]], axis=1)
  scr_ref[srow(3):srow(3) + L, 0:2 * F] = jnp.concatenate([zf, ag_ref[1]], axis=1)
  mrow_ref[irow(0), :] = abm_ref[0]
  mrow_ref[irow(1), :] = abm_ref[1]
  mrow_ref[irow(2), :] = agm_ref[0]
  mrow_ref[irow(3), :] = agm_ref[1]
  mrow = mrow_ref[...]                                           # (M, 1)
  is_ab = jax.lax.broadcasted_iota(jnp.int32, (M, 1), 0) < AG0   # row -> branch

  def branch(ref):                       # (2, C) param -> per-row (M, C) select
    return jnp.where(is_ab, ref[0:1, :], ref[1:2, :])

  def dconv(d, cin, w_ref):
    # Dilated k=3 conv over the whole row stack as 3 accumulated bf16 MXU matmuls
    # (one per tap) -- no lane-concatenated (M, 3*cin) slab is materialised.
    acc = None
    for k in range(3):
      r0 = HALO + (k - 1) * d
      tap = jnp.dot(scr_ref[r0:r0 + M, 0:cin].astype(bf16),
                    w_ref[k * cin:(k + 1) * cin, :],
                    preferred_element_type=f32)
      acc = tap if acc is None else acc + tap
    return acc

  def bn_relu_mask(y, s_ref, h_ref):
    # torch order: conv -> *mask -> BN(eval) -> ReLU -> *mask
    # (conv bias pre-folded into the shift; exact for 0/1 masks, biases are 0)
    y = y * mrow
    y = y * branch(s_ref) + branch(h_ref)
    return jnp.maximum(y, 0.0) * mrow          # self.elu = nn.ReLU()

  # ---- layer 1: conv1/agconv1 merged (ab lanes 0:F, ag lanes F:2F, dilation 1) --
  y = bn_relu_mask(dconv(1, 2 * F, w1_ref), s1_ref, h1_ref)       # (M, 64)
  scr_ref[HALO:HALO + M, 0:64] = y
  # TODO(synk): self.dropout is identity here (eval mode).
  # ---- layer 2: shared conv2 (dilation 2) --------------------------------------
  y = bn_relu_mask(dconv(2, 64, w2_ref), s2_ref, h2_ref)          # (M, 128)
  scr_ref[HALO:HALO + M, 0:128] = y
  # ---- layer 3: shared conv3 (dilation 4) --------------------------------------
  x3 = bn_relu_mask(dconv(4, 128, w3_ref), s3_ref, h3_ref)        # (M, 256)

  # ---- cross-attention head -----------------------------------------------------
  # merged 1x1 convs (aconvi1 | aconvi2): one (M, 256) @ (256, 2) matmul
  a12 = jnp.dot(x3.astype(bf16), a12w_ref[...],
                preferred_element_type=f32) + a12b_ref[...]       # (M, 2)

  h_rows = []
  for b in range(2):
    w1b = a12[irow(b), 0:1]            # aconvi1(x_b)   (L, 1)   -- static slices,
    w2b = a12[irow(2 + b), 1:2]        # aconvi2(agx_b) (L, 1)   -- no iota/where/reduce
    logits = jax.lax.dot_general(w1b, w2b, (((1,), (1,)), ((), ())),
                                 preferred_element_type=f32)      # (L, L)
    logits = jnp.where(logits > 0, logits, 0.2 * logits)          # LeakyReLU(0.2)
    p = jnp.exp(logits - jnp.max(logits, axis=-1, keepdims=True))
    attn = p / jnp.sum(p, axis=-1, keepdims=True)                 # softmax over ag pos
    attn_ref[b] = attn
    # TODO(synk): attention dropout (self.dropout) is identity in eval mode.
    xb = x3[irow(b), :]                                           # (L, 256) ab feats
    agb = x3[irow(2 + b), :]                                      # (L, 256) ag feats
    loop_x = jnp.dot(attn, xb, preferred_element_type=f32)        # (L, 256)
    h_rows.append(jnp.concatenate([loop_x, agb], axis=1))         # (L, 512)

  # concat -> *mask -> bn4 -> relu -> *mask -> fc (one (2L, 512) @ (512, 1) matmul)
  h = jnp.concatenate(h_rows, axis=0)                             # (2L, 512)
  mag = jnp.concatenate([mrow[irow(2)], mrow[irow(3)]], axis=0)   # (2L, 1)
  h = h * mag
  h = h * bn4s_ref[...] + bn4h_ref[...]
  h = jnp.maximum(h, 0.0) * mag
  # TODO(synk): self.dropout2 is identity here (eval mode).
  out_ref[...] = (jnp.dot(h.astype(bf16), fcw_ref[...],
                          preferred_element_type=f32) + fcb_ref[...])


def epitope_x_forward(params, ag_input, ag_masks, ab_input, ab_masks):
  B, L, _ = ab_input.shape
  assert B == 2, "kernel folds the batch of 2 into one grid step"
  M = 4 * L + 3 * GAP
  R = M + 2 * HALO
  kern = functools.partial(epitope_fused_kernel, seq_len=L)

  full2 = lambda shp: pl.BlockSpec(shp, lambda i: (0, 0))
  full3 = lambda shp: pl.BlockSpec(shp, lambda i: (0, 0, 0))

  # Single grid step (v5e/v6e: one TensorCore, so a per-sample grid would only add
  # ~0.35us/step and halve MXU row fill; on v7x the bf16/trimmed weights keep the
  # one-core weight DMA tiny, so the same single-step kernel is used there too).
  grid_spec = pltpu.PrefetchScalarGridSpec(
      num_scalar_prefetch=0,
      grid=(1,),
      in_specs=[
          full3((B, L, NUM_FEATURES)),        # ab_input
          full3((B, L, AG_NUM_FEATURES)),     # ag_input
          full3((B, L, 1)),                   # ab_masks
          full3((B, L, 1)),                   # ag_masks
          full2(params["w1"].shape),          # (192, 64)  bf16
          full2(params["w2"].shape),          # (192, 128) bf16
          full2(params["w3"].shape),          # (384, 256) bf16
          full2(params["s1"].shape), full2(params["h1"].shape),
          full2(params["s2"].shape), full2(params["h2"].shape),
          full2(params["s3"].shape), full2(params["h3"].shape),
          full2(params["a12w"].shape),        # (256, 2) bf16
          full2(params["a12b"].shape),        # (1, 2)
          full2(params["bn4s"].shape), full2(params["bn4h"].shape),
          full2(params["fcw"].shape),         # (512, 1) bf16
          full2(params["fcb"].shape),         # (1, 1)
      ],
      out_specs=[
          full2((B * L, 1)),                  # binding logits (row-stacked)
          full3((B, L, L)),                   # attention coefficients
      ],
      scratch_shapes=[pltpu.VMEM((R, 128), jnp.float32),
                      pltpu.VMEM((M, 1), jnp.float32)],
  )

  out_flat, attn = pl.pallas_call(
      kern,
      out_shape=(jax.ShapeDtypeStruct((B * L, 1), jnp.float32),
                 jax.ShapeDtypeStruct((B, L, L), jnp.float32)),
      grid_spec=grid_spec,
      compiler_params=pltpu.CompilerParams(dimension_semantics=("arbitrary",)),
  )(ab_input, ag_input, ab_masks, ag_masks,
    params["w1"], params["w2"], params["w3"],
    params["s1"], params["h1"], params["s2"], params["h2"],
    params["s3"], params["h3"],
    params["a12w"], params["a12b"], params["bn4s"], params["bn4h"],
    params["fcw"], params["fcb"])
  return out_flat.reshape(B, L, 1), attn


# ---------------------------------------------------------------------------
# Parameter construction (deterministic Xavier-uniform, as the module init)
# ---------------------------------------------------------------------------
def _xavier_uniform(key, shape, fan_in, fan_out):
  bound = math.sqrt(6.0 / (fan_in + fan_out))
  return jax.random.uniform(key, shape, jnp.float32, -bound, bound)


def _conv_taps(key, cout, cin, k=3):
  """torch Conv1d weight (cout, cin, k), xavier-uniform -> tap-major (k, cin, cout)."""
  w = _xavier_uniform(key, (cout, cin, k), cin * k, cout * k)
  return jnp.transpose(w, (2, 1, 0))


def _bn_rows(rows, c, conv_bias=None):
  """Eval-mode BatchNorm1d (mu=0, var=1, gamma=1, beta=0); a preceding conv bias is
  folded into the shift (exact for 0/1 masks)."""
  scale = jnp.full((rows, c), 1.0 / math.sqrt(1.0 + BN_EPS), jnp.float32)
  shift = jnp.zeros((rows, c), jnp.float32)
  if conv_bias is not None:
    shift = conv_bias * scale
  return scale, shift


def init_params(key):
  ks = jax.random.split(key, 7)
  bf16 = jnp.bfloat16
  p = {}
  # layer 1: conv1 / agconv1 merged into ONE block-stacked weight: input lanes 0:F
  # hold ab features, lanes F:2F hold ag features, so one (3*2F, 64) weight applies
  # conv1 on ab rows and agconv1 on ag rows of the row-stacked matmul.
  w1ab = _conv_taps(ks[0], 64, NUM_FEATURES)        # (3, 32, 64)
  w1ag = _conv_taps(ks[1], 64, AG_NUM_FEATURES)     # (3, 32, 64)
  p["w1"] = (jnp.concatenate([w1ab, w1ag], axis=1)
             .reshape(6 * NUM_FEATURES, 64).astype(bf16))
  # layers 2/3: conv2 / conv3 are shared between the ab and ag branches
  p["w2"] = _conv_taps(ks[2], 128, 64).reshape(3 * 64, 128).astype(bf16)
  p["w3"] = _conv_taps(ks[3], 256, 128).reshape(3 * 128, 256).astype(bf16)
  # eval-mode BN (row 0 = ab-branch bn*, row 1 = ag-branch agbn*); conv biases are 0
  p["s1"], p["h1"] = _bn_rows(2, 64)
  p["s2"], p["h2"] = _bn_rows(2, 128)
  p["s3"], p["h3"] = _bn_rows(2, 256)
  p["bn4s"], p["bn4h"] = _bn_rows(1, 512)
  # aconvi1 / aconvi2 (1x1 convs created inside forward) merged into one (256, 2)
  a1 = _xavier_uniform(ks[4], (256, 1), 256, 1)
  a2 = _xavier_uniform(ks[5], (256, 1), 256, 1)
  p["a12w"] = jnp.concatenate([a1, a2], axis=1).astype(bf16)
  p["a12b"] = jnp.zeros((1, 2), jnp.float32)
  p["fcw"] = _xavier_uniform(ks[6], (512, 1), 512, 1).astype(bf16)   # nn.Linear(512,1)
  p["fcb"] = jnp.zeros((1, 1), jnp.float32)
  return p


# ---------------------------------------------------------------------------
# Plain-JAX reference (same math, same bf16 operand casts) for the numeric check
# ---------------------------------------------------------------------------
def _reference_forward(params, ag_input, ag_masks, ab_input, ab_masks):
  bf16, f32 = jnp.bfloat16, jnp.float32
  B, L, Fi = ab_input.shape

  def conv(x, d, w, cin):
    xp = jnp.pad(x, ((d, d), (0, 0)))
    y = None
    for k in range(3):
      t = jnp.dot(xp[k * d:k * d + L].astype(bf16), w[k * cin:(k + 1) * cin, :],
                  preferred_element_type=f32)
      y = t if y is None else y + t
    return y

  def block(x, m, d, w, cin, s, h, br):
    y = conv(x, d, w, cin) * m
    y = y * s[br:br + 1] + h[br:br + 1]
    return jnp.maximum(y, 0.0) * m

  outs, attns = [], []
  for b in range(B):
    mab, mag = ab_masks[b], ag_masks[b]
    zf = jnp.zeros((L, Fi), f32)
    x = jnp.concatenate([ab_input[b], zf], axis=1)      # ab in lanes 0:F
    agx = jnp.concatenate([zf, ag_input[b]], axis=1)    # ag in lanes F:2F
    x = block(x, mab, 1, params["w1"], 2 * Fi, params["s1"], params["h1"], 0)
    agx = block(agx, mag, 1, params["w1"], 2 * Fi, params["s1"], params["h1"], 1)
    x = block(x, mab, 2, params["w2"], 64, params["s2"], params["h2"], 0)
    agx = block(agx, mag, 2, params["w2"], 64, params["s2"], params["h2"], 1)
    x = block(x, mab, 4, params["w3"], 128, params["s3"], params["h3"], 0)
    agx = block(agx, mag, 4, params["w3"], 128, params["s3"], params["h3"], 1)
    a12x = jnp.dot(x.astype(bf16), params["a12w"],
                   preferred_element_type=f32) + params["a12b"]
    a12g = jnp.dot(agx.astype(bf16), params["a12w"],
                   preferred_element_type=f32) + params["a12b"]
    logits = a12x[:, 0:1] @ a12g[:, 1:2].T
    logits = jnp.where(logits > 0, logits, 0.2 * logits)
    attn = jax.nn.softmax(logits, axis=-1)
    loop_x = attn @ x
    h = jnp.concatenate([loop_x, agx], axis=1) * mag
    h = h * params["bn4s"] + params["bn4h"]
    h = jnp.maximum(h, 0.0) * mag
    outs.append(jnp.dot(h.astype(bf16), params["fcw"],
                        preferred_element_type=f32) + params["fcb"])
    attns.append(attn)
  return jnp.stack(outs), jnp.stack(attns)


if __name__ == "__main__":
  B, L = 2, 16
  key = jax.random.PRNGKey(0)
  k_ab, k_ag, k_par = jax.random.split(key, 3)

  ab_input = jax.random.normal(k_ab, (B, L, NUM_FEATURES), jnp.float32)
  ag_input = jax.random.normal(k_ag, (B, L, AG_NUM_FEATURES), jnp.float32)

  pos = jnp.arange(L, dtype=jnp.int32)[None, :, None]                 # (1, L, 1)
  ab_masks = (pos < jnp.array([16, 12], jnp.int32)[:, None, None]).astype(jnp.float32)
  ag_masks = (pos < jnp.array([16, 10], jnp.int32)[:, None, None]).astype(jnp.float32)

  params = init_params(k_par)

  out, attn = epitope_x_forward(params, ag_input, ag_masks, ab_input, ab_masks)
  jax.block_until_ready((out, attn))
  assert out.shape == (B, L, 1)
  assert attn.shape == (B, L, L)

  # Reference is run at float32 matmul precision and mirrors the kernel's bf16
  # operand casts, so the tolerance only has to cover accumulation-order / exp ulps.
  with jax.default_matmul_precision("float32"):
    out_ref, attn_ref = _reference_forward(params, ag_input, ag_masks,
                                           ab_input, ab_masks)
    out_ref, attn_ref = jax.block_until_ready((out_ref, attn_ref))

  err_out = float(jnp.max(jnp.abs(out - out_ref)))
  err_attn = float(jnp.max(jnp.abs(attn - attn_ref)))
  assert err_out < 5e-3, "out mismatch: %e" % err_out
  assert err_attn < 5e-3, "attn mismatch: %e" % err_attn

  print("KERNEL_OK")
</pallas_src>

<mosaic_0001>
module attributes {stable_mosaic.version = 11 : i64} {
  func.func @epitope_fused_kernel(%arg0: i32, %arg1: memref<2x16x32xf32, #tpu.memory_space<vmem>>, %arg2: memref<2x16x32xf32, #tpu.memory_space<vmem>>, %arg3: memref<2x16x1xf32, #tpu.memory_space<vmem>>, %arg4: memref<2x16x1xf32, #tpu.memory_space<vmem>>, %arg5: memref<192x64xbf16, #tpu.memory_space<vmem>>, %arg6: memref<192x128xbf16, #tpu.memory_space<vmem>>, %arg7: memref<384x256xbf16, #tpu.memory_space<vmem>>, %arg8: memref<2x64xf32, #tpu.memory_space<vmem>>, %arg9: memref<2x64xf32, #tpu.memory_space<vmem>>, %arg10: memref<2x128xf32, #tpu.memory_space<vmem>>, %arg11: memref<2x128xf32, #tpu.memory_space<vmem>>, %arg12: memref<2x256xf32, #tpu.memory_space<vmem>>, %arg13: memref<2x256xf32, #tpu.memory_space<vmem>>, %arg14: memref<256x2xbf16, #tpu.memory_space<vmem>>, %arg15: memref<1x2xf32, #tpu.memory_space<vmem>>, %arg16: memref<1x512xf32, #tpu.memory_space<vmem>>, %arg17: memref<1x512xf32, #tpu.memory_space<vmem>>, %arg18: memref<512x1xbf16, #tpu.memory_space<vmem>>, %arg19: memref<1x1xf32, #tpu.memory_space<vmem>>, %arg20: memref<32x1xf32, #tpu.memory_space<vmem>>, %arg21: memref<2x16x16xf32, #tpu.memory_space<vmem>>, %arg22: memref<104x128xf32, #tpu.memory_space<vmem>>, %arg23: memref<88x1xf32, #tpu.memory_space<vmem>>) attributes {dimension_semantics = [#tpu.dimension_semantics<arbitrary>], iteration_bounds = array<i64: 1>, scalar_prefetch = 0 : i64, scratch_operands = 2 : i64, tpu.core_type = #tpu.core_type<tc>, window_params = [{pipeline_mode = #tpu.pipeline_mode<synchronous>, transform_indices = @transform_0, window_bounds = array<i64: 2, 16, 32>}, {pipeline_mode = #tpu.pipeline_mode<synchronous>, transform_indices = @transform_1, window_bounds = array<i64: 2, 16, 32>}, {pipeline_mode = #tpu.pipeline_mode<synchronous>, transform_indices = @transform_2, window_bounds = array<i64: 2, 16, 1>}, {pipeline_mode = #tpu.pipeline_mode<synchronous>, transform_indices = @transform_3, window_bounds = array<i64: 2, 16, 1>}, {pipeline_mode = #tpu.pipeline_mode<synchronous>, transform_indices = @transform_4, window_bounds = array<i64: 192, 64>}, {pipeline_mode = #tpu.pipeline_mode<synchronous>, transform_indices = @transform_5, window_bounds = array<i64: 192, 128>}, {pipeline_mode = #tpu.pipeline_mode<synchronous>, transform_indices = @transform_6, window_bounds = array<i64: 384, 256>}, {pipeline_mode = #tpu.pipeline_mode<synchronous>, transform_indices = @transform_7, window_bounds = array<i64: 2, 64>}, {pipeline_mode = #tpu.pipeline_mode<synchronous>, transform_indices = @transform_8, window_bounds = array<i64: 2, 64>}, {pipeline_mode = #tpu.pipeline_mode<synchronous>, transform_indices = @transform_9, window_bounds = array<i64: 2, 128>}, {pipeline_mode = #tpu.pipeline_mode<synchronous>, transform_indices = @transform_10, window_bounds = array<i64: 2, 128>}, {pipeline_mode = #tpu.pipeline_mode<synchronous>, transform_indices = @transform_11, window_bounds = array<i64: 2, 256>}, {pipeline_mode = #tpu.pipeline_mode<synchronous>, transform_indices = @transform_12, window_bounds = array<i64: 2, 256>}, {pipeline_mode = #tpu.pipeline_mode<synchronous>, transform_indices = @transform_13, window_bounds = array<i64: 256, 2>}, {pipeline_mode = #tpu.pipeline_mode<synchronous>, transform_indices = @transform_14, window_bounds = array<i64: 1, 2>}, {pipeline_mode = #tpu.pipeline_mode<synchronous>, transform_indices = @transform_15, window_bounds = array<i64: 1, 512>}, {pipeline_mode = #tpu.pipeline_mode<synchronous>, transform_indices = @transform_16, window_bounds = array<i64: 1, 512>}, {pipeline_mode = #tpu.pipeline_mode<synchronous>, transform_indices = @transform_17, window_bounds = array<i64: 512, 1>}, {pipeline_mode = #tpu.pipeline_mode<synchronous>, transform_indices = @transform_18, window_bounds = array<i64: 1, 1>}, {pipeline_mode = #tpu.pipeline_mode<synchronous>, transform_indices = @transform_19, window_bounds = array<i64: 32, 1>}, {pipeline_mode = #tpu.pipeline_mode<synchronous>, transform_indices = @transform_20, window_bounds = array<i64: 2, 16, 16>}]} {
    %cst = arith.constant 0.000000e+00 : f32
    %0 = vector.broadcast %cst : f32 to vector<104x128xf32>
    %c0 = arith.constant 0 : index
    %c0_0 = arith.constant 0 : index
    %1 = vector.load %arg22[%c0, %c0_0] : memref<104x128xf32, #tpu.memory_space<vmem>>, vector<104x128xf32>
    tpu.vector_store %arg22[%c0, %c0_0], %0 {strides = array<i32>} : memref<104x128xf32, #tpu.memory_space<vmem>>, vector<104x128xf32>,
    %cst_1 = arith.constant 0.000000e+00 : f32
    %2 = vector.broadcast %cst_1 : f32 to vector<88x1xf32>
    %c0_2 = arith.constant 0 : index
    %c0_3 = arith.constant 0 : index
    %3 = vector.load %arg23[%c0_2, %c0_3] : memref<88x1xf32, #tpu.memory_space<vmem>>, vector<88x1xf32>
    tpu.vector_store %arg23[%c0_2, %c0_3], %2 {strides = array<i32>} : memref<88x1xf32, #tpu.memory_space<vmem>>, vector<88x1xf32>,
    %cst_4 = arith.constant 0.000000e+00 : f32
    %4 = vector.broadcast %cst_4 : f32 to vector<16x32xf32>
    %c0_5 = arith.constant 0 : index
    %c0_6 = arith.constant 0 : index
    %c0_7 = arith.constant 0 : index
    %5 = vector.load %arg1[%c0_5, %c0_6, %c0_7] : memref<2x16x32xf32, #tpu.memory_space<vmem>>, vector<1x16x32xf32>
    %6 = vector.shape_cast %5 : vector<1x16x32xf32> to vector<16x32xf32>
    %7 = tpu.concatenate %6, %4 in 1 : vector<16x32xf32>, vector<16x32xf32> -> vector<16x64xf32>
    %c8 = arith.constant 8 : index
    %c0_8 = arith.constant 0 : index
    %8 = vector.load %arg22[%c8, %c0_8] : memref<104x128xf32, #tpu.memory_space<vmem>>, vector<16x64xf32>
    tpu.vector_store %arg22[%c8, %c0_8], %7 {strides = array<i32>} : memref<104x128xf32, #tpu.memory_space<vmem>>, vector<16x64xf32>,
    %c1 = arith.constant 1 : index
    %c0_9 = arith.constant 0 : index
    %c0_10 = arith.constant 0 : index
    %9 = vector.load %arg1[%c1, %c0_9, %c0_10] : memref<2x16x32xf32, #tpu.memory_space<vmem>>, vector<1x16x32xf32>
    %10 = vector.shape_cast %9 : vector<1x16x32xf32> to vector<16x32xf32>
    %11 = tpu.concatenate %10, %4 in 1 : vector<16x32xf32>, vector<16x32xf32> -> vector<16x64xf32>
    %c32 = arith.constant 32 : index
    %c0_11 = arith.constant 0 : index
    %12 = vector.load %arg22[%c32, %c0_11] : memref<104x128xf32, #tpu.memory_space<vmem>>, vector<16x64xf32>
    tpu.vector_store %arg22[%c32, %c0_11], %11 {strides = array<i32>} : memref<104x128xf32, #tpu.memory_space<vmem>>, vector<16x64xf32>,
    %c0_12 = arith.constant 0 : index
    %c0_13 = arith.constant 0 : index
    %c0_14 = arith.constant 0 : index
    %13 = vector.load %arg2[%c0_12, %c0_13, %c0_14] : memref<2x16x32xf32, #tpu.memory_space<vmem>>, vector<1x16x32xf32>
    %14 = vector.shape_cast %13 : vector<1x16x32xf32> to vector<16x32xf32>
    %15 = tpu.concatenate %4, %14 in 1 : vector<16x32xf32>, vector<16x32xf32> -> vector<16x64xf32>
    %c56 = arith.constant 56 : index
    %c0_15 = arith.constant 0 : index
    %16 = vector.load %arg22[%c56, %c0_15] : memref<104x128xf32, #tpu.memory_space<vmem>>, vector<16x64xf32>
    tpu.vector_store %arg22[%c56, %c0_15], %15 {strides = array<i32>} : memref<104x128xf32, #tpu.memory_space<vmem>>, vector<16x64xf32>,
    %c1_16 = arith.constant 1 : index
    %c0_17 = arith.constant 0 : index
    %c0_18 = arith.constant 0 : index
    %17 = vector.load %arg2[%c1_16, %c0_17, %c0_18] : memref<2x16x32xf32, #tpu.memory_space<vmem>>, vector<1x16x32xf32>
    %18 = vector.shape_cast %17 : vector<1x16x32xf32> to vector<16x32xf32>
    %19 = tpu.concatenate %4, %18 in 1 : vector<16x32xf32>, vector<16x32xf32> -> vector<16x64xf32>
    %c80 = arith.constant 80 : index
    %c0_19 = arith.constant 0 : index
    %20 = vector.load %arg22[%c80, %c0_19] : memref<104x128xf32, #tpu.memory_space<vmem>>, vector<16x64xf32>
    tpu.vector_store %arg22[%c80, %c0_19], %19 {strides = array<i32>} : memref<104x128xf32, #tpu.memory_space<vmem>>, vector<16x64xf32>,
    %c0_20 = arith.constant 0 : index
    %c0_21 = arith.constant 0 : index
    %c0_22 = arith.constant 0 : index
    %21 = vector.load %arg3[%c0_20, %c0_21, %c0_22] : memref<2x16x1xf32, #tpu.memory_space<vmem>>, vector<1x16x1xf32>
    %22 = vector.shape_cast %21 : vector<1x16x1xf32> to vector<16x1xf32>
    %c0_23 = arith.constant 0 : index
    %c0_24 = arith.constant 0 : index
    %23 = vector.load %arg23[%c0_23, %c0_24] : memref<88x1xf32, #tpu.memory_space<vmem>>, vector<16x1xf32>
    tpu.vector_store %arg23[%c0_23, %c0_24], %22 {strides = array<i32>} : memref<88x1xf32, #tpu.memory_space<vmem>>, vector<16x1xf32>,
    %c1_25 = arith.constant 1 : index
    %c0_26 = arith.constant 0 : index
    %c0_27 = arith.constant 0 : index
    %24 = vector.load %arg3[%c1_25, %c0_26, %c0_27] : memref<2x16x1xf32, #tpu.memory_space<vmem>>, vector<1x16x1xf32>
    %25 = vector.shape_cast %24 : vector<1x16x1xf32> to vector<16x1xf32>
    %c24 = arith.constant 24 : index
    %c0_28 = arith.constant 0 : index
    %26 = vector.load %arg23[%c24, %c0_28] : memref<88x1xf32, #tpu.memory_space<vmem>>, vector<16x1xf32>
    tpu.vector_store %arg23[%c24, %c0_28], %25 {strides = array<i32>} : memref<88x1xf32, #tpu.memory_space<vmem>>, vector<16x1xf32>,
    %c0_29 = arith.constant 0 : index
    %c0_30 = arith.constant 0 : index
    %c0_31 = arith.constant 0 : index
    %27 = vector.load %arg4[%c0_29, %c0_30, %c0_31] : memref<2x16x1xf32, #tpu.memory_space<vmem>>, vector<1x16x1xf32>
    %28 = vector.shape_cast %27 : vector<1x16x1xf32> to vector<16x1xf32>
    %c48 = arith.constant 48 : index
    %c0_32 = arith.constant 0 : index
    %29 = vector.load %arg23[%c48, %c0_32] : memref<88x1xf32, #tpu.memory_space<vmem>>, vector<16x1xf32>
    tpu.vector_store %arg23[%c48, %c0_32], %28 {strides = array<i32>} : memref<88x1xf32, #tpu.memory_space<vmem>>, vector<16x1xf32>,
    %c1_33 = arith.constant 1 : index
    %c0_34 = arith.constant 0 : index
    %c0_35 = arith.constant 0 : index
    %30 = vector.load %arg4[%c1_33, %c0_34, %c0_35] : memref<2x16x1xf32, #tpu.memory_space<vmem>>, vector<1x16x1xf32>
    %31 = vector.shape_cast %30 : vector<1x16x1xf32> to vector<16x1xf32>
    %c72 = arith.constant 72 : index
    %c0_36 = arith.constant 0 : index
    %32 = vector.load %arg23[%c72, %c0_36] : memref<88x1xf32, #tpu.memory_space<vmem>>, vector<16x1xf32>
    tpu.vector_store %arg23[%c72, %c0_36], %31 {strides = array<i32>} : memref<88x1xf32, #tpu.memory_space<vmem>>, vector<16x1xf32>,
    %c0_37 = arith.constant 0 : index
    %c0_38 = arith.constant 0 : index
    %33 = vector.load %arg23[%c0_37, %c0_38] : memref<88x1xf32, #tpu.memory_space<vmem>>, vector<88x1xf32>
    %34 = tpu.iota {dimensions = array<i32: 0>} : vector<88x1xi32>
    %c48_i32 = arith.constant 48 : i32
    %35 = vector.broadcast %c48_i32 : i32 to vector<88x1xi32>
    %36 = arith.cmpi slt, %34, %35 : vector<88x1xi32>
    %c7 = arith.constant 7 : index
    %c0_39 = arith.constant 0 : index
    %37 = vector.load %arg22[%c7, %c0_39] : memref<104x128xf32, #tpu.memory_space<vmem>>, vector<88x64xf32>
    %38 = arith.truncf %37 : vector<88x64xf32> to vector<88x64xbf16>
    %c0_40 = arith.constant 0 : index
    %c0_41 = arith.constant 0 : index
    %39 = vector.load %arg5[%c0_40, %c0_41] : memref<192x64xbf16, #tpu.memory_space<vmem>>, vector<64x64xbf16>
    %cst_42 = arith.constant dense<0.000000e+00> : vector<88x64xf32>
    %40 = tpu.matmul %38, %39, %cst_42 {dimension_numbers = #tpu.dot_dimension_numbers<[1], [0], [0], [1], [0, 0, 1, 1], [], []>} : vector<88x64xbf16>, vector<64x64xbf16>, vector<88x64xf32> -> vector<88x64xf32>
    %c8_43 = arith.constant 8 : index
    %c0_44 = arith.constant 0 : index
    %41 = vector.load %arg22[%c8_43, %c0_44] : memref<104x128xf32, #tpu.memory_space<vmem>>, vector<88x64xf32>
    %42 = arith.truncf %41 : vector<88x64xf32> to vector<88x64xbf16>
    %c64 = arith.constant 64 : index
    %c0_45 = arith.constant 0 : index
    %43 = vector.load %arg5[%c64, %c0_45] : memref<192x64xbf16, #tpu.memory_space<vmem>>, vector<64x64xbf16>
    %cst_46 = arith.constant dense<0.000000e+00> : vector<88x64xf32>
    %44 = tpu.matmul %42, %43, %cst_46 {dimension_numbers = #tpu.dot_dimension_numbers<[1], [0], [0], [1], [0, 0, 1, 1], [], []>} : vector<88x64xbf16>, vector<64x64xbf16>, vector<88x64xf32> -> vector<88x64xf32>
    %45 = arith.addf %40, %44 : vector<88x64xf32>
    %c9 = arith.constant 9 : index
    %c0_47 = arith.constant 0 : index
    %46 = vector.load %arg22[%c9, %c0_47] : memref<104x128xf32, #tpu.memory_space<vmem>>, vector<88x64xf32>
    %47 = arith.truncf %46 : vector<88x64xf32> to vector<88x64xbf16>
    %c128 = arith.constant 128 : index
    %c0_48 = arith.constant 0 : index
    %48 = vector.load %arg5[%c128, %c0_48] : memref<192x64xbf16, #tpu.memory_space<vmem>>, vector<64x64xbf16>
    %cst_49 = arith.constant dense<0.000000e+00> : vector<88x64xf32>
    %49 = tpu.matmul %47, %48, %cst_49 {dimension_numbers = #tpu.dot_dimension_numbers<[1], [0], [0], [1], [0, 0, 1, 1], [], []>} : vector<88x64xbf16>, vector<64x64xbf16>, vector<88x64xf32> -> vector<88x64xf32>
    %50 = arith.addf %45, %49 : vector<88x64xf32>
    %51 = vector.broadcast %33 : vector<88x1xf32> to vector<88x64xf32>
    %52 = arith.mulf %50, %51 : vector<88x64xf32>
    %c0_50 = arith.constant 0 : index
    %c0_51 = arith.constant 0 : index
    %53 = vector.load %arg8[%c0_50, %c0_51] : memref<2x64xf32, #tpu.memory_space<vmem>>, vector<1x64xf32>
    %c1_52 = arith.constant 1 : index
    %c0_53 = arith.constant 0 : index
    %54 = vector.load %arg8[%c1_52, %c0_53] : memref<2x64xf32, #tpu.memory_space<vmem>>, vector<1x64xf32>
    %55 = vector.shape_cast %36 : vector<88x1xi1> to vector<88x1xi1>
    %56 = vector.broadcast %55 : vector<88x1xi1> to vector<88x64xi1>
    %57 = vector.shape_cast %53 : vector<1x64xf32> to vector<1x64xf32>
    %58 = vector.broadcast %57 : vector<1x64xf32> to vector<88x64xf32>
    %59 = vector.shape_cast %54 : vector<1x64xf32> to vector<1x64xf32>
    %60 = vector.broadcast %59 : vector<1x64xf32> to vector<88x64xf32>
    %61 = arith.select %56, %58, %60 : vector<88x64xi1>, vector<88x64xf32>
    %62 = arith.mulf %52, %61 : vector<88x64xf32>
    %c0_54 = arith.constant 0 : index
    %c0_55 = arith.constant 0 : index
    %63 = vector.load %arg9[%c0_54, %c0_55] : memref<2x64xf32, #tpu.memory_space<vmem>>, vector<1x64xf32>
    %c1_56 = arith.constant 1 : index
    %c0_57 = arith.constant 0 : index
    %64 = vector.load %arg9[%c1_56, %c0_57] : memref<2x64xf32, #tpu.memory_space<vmem>>, vector<1x64xf32>
    %65 = vector.shape_cast %36 : vector<88x1xi1> to vector<88x1xi1>
    %66 = vector.broadcast %65 : vector<88x1xi1> to vector<88x64xi1>
    %67 = vector.shape_cast %63 : vector<1x64xf32> to vector<1x64xf32>
    %68 = vector.broadcast %67 : vector<1x64xf32> to vector<88x64xf32>
    %69 = vector.shape_cast %64 : vector<1x64xf32> to vector<1x64xf32>
    %70 = vector.broadcast %69 : vector<1x64xf32> to vector<88x64xf32>
    %71 = arith.select %66, %68, %70 : vector<88x64xi1>, vector<88x64xf32>
    %72 = arith.addf %62, %71 : vector<88x64xf32>
    %cst_58 = arith.constant 0.000000e+00 : f32
    %73 = vector.broadcast %cst_58 : f32 to vector<88x64xf32>
    %74 = arith.maximumf %72, %73 : vector<88x64xf32>
    %75 = vector.broadcast %33 : vector<88x1xf32> to vector<88x64xf32>
    %76 = arith.mulf %74, %75 : vector<88x64xf32>
    %c8_59 = arith.constant 8 : index
    %c0_60 = arith.constant 0 : index
    %77 = vector.load %arg22[%c8_59, %c0_60] : memref<104x128xf32, #tpu.memory_space<vmem>>, vector<88x64xf32>
    tpu.vector_store %arg22[%c8_59, %c0_60], %76 {strides = array<i32>} : memref<104x128xf32, #tpu.memory_space<vmem>>, vector<88x64xf32>,
    %c6 = arith.constant 6 : index
    %c0_61 = arith.constant 0 : index
    %78 = vector.load %arg22[%c6, %c0_61] : memref<104x128xf32, #tpu.memory_space<vmem>>, vector<88x64xf32>
    %79 = arith.truncf %78 : vector<88x64xf32> to vector<88x64xbf16>
    %c0_62 = arith.constant 0 : index
    %c0_63 = arith.constant 0 : index
    %80 = vector.load %arg6[%c0_62, %c0_63] : memref<192x128xbf16, #tpu.memory_space<vmem>>, vector<64x128xbf16>
    %cst_64 = arith.constant dense<0.000000e+00> : vector<88x128xf32>
    %81 = tpu.matmul %79, %80, %cst_64 {dimension_numbers = #tpu.dot_dimension_numbers<[1], [0], [0], [1], [0, 0, 1, 1], [], []>} : vector<88x64xbf16>, vector<64x128xbf16>, vector<88x128xf32> -> vector<88x128xf32>
    %c8_65 = arith.constant 8 : index
    %c0_66 = arith.constant 0 : index
    %82 = vector.load %arg22[%c8_65, %c0_66] : memref<104x128xf32, #tpu.memory_space<vmem>>, vector<88x64xf32>
    %83 = arith.truncf %82 : vector<88x64xf32> to vector<88x64xbf16>
    %c64_67 = arith.constant 64 : index
    %c0_68 = arith.constant 0 : index
    %84 = vector.load %arg6[%c64_67, %c0_68] : memref<192x128xbf16, #tpu.memory_space<vmem>>, vector<64x128xbf16>
    %cst_69 = arith.constant dense<0.000000e+00> : vector<88x128xf32>
    %85 = tpu.matmul %83, %84, %cst_69 {dimension_numbers = #tpu.dot_dimension_numbers<[1], [0], [0], [1], [0, 0, 1, 1], [], []>} : vector<88x64xbf16>, vector<64x128xbf16>, vector<88x128xf32> -> vector<88x128xf32>
    %86 = arith.addf %81, %85 : vector<88x128xf32>
    %c10 = arith.constant 10 : index
    %c0_70 = arith.constant 0 : index
    %87 = vector.load %arg22[%c10, %c0_70] : memref<104x128xf32, #tpu.memory_space<vmem>>, vector<88x64xf32>
    %88 = arith.truncf %87 : vector<88x64xf32> to vector<88x64xbf16>
    %c128_71 = arith.constant 128 : index
    %c0_72 = arith.constant 0 : index
    %89 = vector.load %arg6[%c128_71, %c0_72] : memref<192x128xbf16, #tpu.memory_space<vmem>>, vector<64x128xbf16>
    %cst_73 = arith.constant dense<0.000000e+00> : vector<88x128xf32>
    %90 = tpu.matmul %88, %89, %cst_73 {dimension_numbers = #tpu.dot_dimension_numbers<[1], [0], [0], [1], [0, 0, 1, 1], [], []>} : vector<88x64xbf16>, vector<64x128xbf16>, vector<88x128xf32> -> vector<88x128xf32>
    %91 = arith.addf %86, %90 : vector<88x128xf32>
    %92 = vector.broadcast %33 : vector<88x1xf32> to vector<88x128xf32>
    %93 = arith.mulf %91, %92 : vector<88x128xf32>
    %c0_74 = arith.constant 0 : index
    %c0_75 = arith.constant 0 : index
    %94 = vector.load %arg10[%c0_74, %c0_75] : memref<2x128xf32, #tpu.memory_space<vmem>>, vector<1x128xf32>
    %c1_76 = arith.constant 1 : index
    %c0_77 = arith.constant 0 : index
    %95 = vector.load %arg10[%c1_76, %c0_77] : memref<2x128xf32, #tpu.memory_space<vmem>>, vector<1x128xf32>
    %96 = vector.shape_cast %36 : vector<88x1xi1> to vector<88x1xi1>
    %97 = vector.broadcast %96 : vector<88x1xi1> to vector<88x128xi1>
    %98 = vector.shape_cast %94 : vector<1x128xf32> to vector<1x128xf32>
    %99 = vector.broadcast %98 : vector<1x128xf32> to vector<88x128xf32>
    %100 = vector.shape_cast %95 : vector<1x128xf32> to vector<1x128xf32>
    %101 = vector.broadcast %100 : vector<1x128xf32> to vector<88x128xf32>
    %102 = arith.select %97, %99, %101 : vector<88x128xi1>, vector<88x128xf32>
    %103 = arith.mulf %93, %102 : vector<88x128xf32>
    %c0_78 = arith.constant 0 : index
    %c0_79 = arith.constant 0 : index
    %104 = vector.load %arg11[%c0_78, %c0_79] : memref<2x128xf32, #tpu.memory_space<vmem>>, vector<1x128xf32>
    %c1_80 = arith.constant 1 : index
    %c0_81 = arith.constant 0 : index
    %105 = vector.load %arg11[%c1_80, %c0_81] : memref<2x128xf32, #tpu.memory_space<vmem>>, vector<1x128xf32>
    %106 = vector.shape_cast %36 : vector<88x1xi1> to vector<88x1xi1>
    %107 = vector.broadcast %106 : vector<88x1xi1> to vector<88x128xi1>
    %108 = vector.shape_cast %104 : vector<1x128xf32> to vector<1x128xf32>
    %109 = vector.broadcast %108 : vector<1x128xf32> to vector<88x128xf32>
    %110 = vector.shape_cast %105 : vector<1x128xf32> to vector<1x128xf32>
    %111 = vector.broadcast %110 : vector<1x128xf32> to vector<88x128xf32>
    %112 = arith.select %107, %109, %111 : vector<88x128xi1>, vector<88x128xf32>
    %113 = arith.addf %103, %112 : vector<88x128xf32>
    %cst_82 = arith.constant 0.000000e+00 : f32
    %114 = vector.broadcast %cst_82 : f32 to vector<88x128xf32>
    %115 = arith.maximumf %113, %114 : vector<88x128xf32>
    %116 = vector.broadcast %33 : vector<88x1xf32> to vector<88x128xf32>
    %117 = arith.mulf %115, %116 : vector<88x128xf32>
    %c8_83 = arith.constant 8 : index
    %c0_84 = arith.constant 0 : index
    %118 = vector.load %arg22[%c8_83, %c0_84] : memref<104x128xf32, #tpu.memory_space<vmem>>, vector<88x128xf32>
    tpu.vector_store %arg22[%c8_83, %c0_84], %117 {strides = array<i32>} : memref<104x128xf32, #tpu.memory_space<vmem>>, vector<88x128xf32>,
    %c4 = arith.constant 4 : index
    %c0_85 = arith.constant 0 : index
    %119 = vector.load %arg22[%c4, %c0_85] : memref<104x128xf32, #tpu.memory_space<vmem>>, vector<88x128xf32>
    %120 = arith.truncf %119 : vector<88x128xf32> to vector<88x128xbf16>
    %c0_86 = arith.constant 0 : index
    %c0_87 = arith.constant 0 : index
    %121 = vector.load %arg7[%c0_86, %c0_87] : memref<384x256xbf16, #tpu.memory_space<vmem>>, vector<128x256xbf16>
    %cst_88 = arith.constant dense<0.000000e+00> : vector<88x256xf32>
    %122 = tpu.matmul %120, %121, %cst_88 {dimension_numbers = #tpu.dot_dimension_numbers<[1], [0], [0], [1], [0, 0, 1, 1], [], []>} : vector<88x128xbf16>, vector<128x256xbf16>, vector<88x256xf32> -> vector<88x256xf32>
    %c8_89 = arith.constant 8 : index
    %c0_90 = arith.constant 0 : index
    %123 = vector.load %arg22[%c8_89, %c0_90] : memref<104x128xf32, #tpu.memory_space<vmem>>, vector<88x128xf32>
    %124 = arith.truncf %123 : vector<88x128xf32> to vector<88x128xbf16>
    %c128_91 = arith.constant 128 : index
    %c0_92 = arith.constant 0 : index
    %125 = vector.load %arg7[%c128_91, %c0_92] : memref<384x256xbf16, #tpu.memory_space<vmem>>, vector<128x256xbf16>
    %cst_93 = arith.constant dense<0.000000e+00> : vector<88x256xf32>
    %126 = tpu.matmul %124, %125, %cst_93 {dimension_numbers = #tpu.dot_dimension_numbers<[1], [0], [0], [1], [0, 0, 1, 1], [], []>} : vector<88x128xbf16>, vector<128x256xbf16>, vector<88x256xf32> -> vector<88x256xf32>
    %127 = arith.addf %122, %126 : vector<88x256xf32>
    %c12 = arith.constant 12 : index
    %c0_94 = arith.constant 0 : index
    %128 = vector.load %arg22[%c12, %c0_94] : memref<104x128xf32, #tpu.memory_space<vmem>>, vector<88x128xf32>
    %129 = arith.truncf %128 : vector<88x128xf32> to vector<88x128xbf16>
    %c256 = arith.constant 256 : index
    %c0_95 = arith.constant 0 : index
    %130 = vector.load %arg7[%c256, %c0_95] : memref<384x256xbf16, #tpu.memory_space<vmem>>, vector<128x256xbf16>
    %cst_96 = arith.constant dense<0.000000e+00> : vector<88x256xf32>
    %131 = tpu.matmul %129, %130, %cst_96 {dimension_numbers = #tpu.dot_dimension_numbers<[1], [0], [0], [1], [0, 0, 1, 1], [], []>} : vector<88x128xbf16>, vector<128x256xbf16>, vector<88x256xf32> -> vector<88x256xf32>
    %132 = arith.addf %127, %131 : vector<88x256xf32>
    %133 = vector.broadcast %33 : vector<88x1xf32> to vector<88x256xf32>
    %134 = arith.mulf %132, %133 : vector<88x256xf32>
    %c0_97 = arith.constant 0 : index
    %c0_98 = arith.constant 0 : index
    %135 = vector.load %arg12[%c0_97, %c0_98] : memref<2x256xf32, #tpu.memory_space<vmem>>, vector<1x256xf32>
    %c1_99 = arith.constant 1 : index
    %c0_100 = arith.constant 0 : index
    %136 = vector.load %arg12[%c1_99, %c0_100] : memref<2x256xf32, #tpu.memory_space<vmem>>, vector<1x256xf32>
    %137 = vector.shape_cast %36 : vector<88x1xi1> to vector<88x1xi1>
    %138 = vector.broadcast %137 : vector<88x1xi1> to vector<88x256xi1>
    %139 = vector.shape_cast %135 : vector<1x256xf32> to vector<1x256xf32>
    %140 = vector.broadcast %139 : vector<1x256xf32> to vector<88x256xf32>
    %141 = vector.shape_cast %136 : vector<1x256xf32> to vector<1x256xf32>
    %142 = vector.broadcast %141 : vector<1x256xf32> to vector<88x256xf32>
    %143 = arith.select %138, %140, %142 : vector<88x256xi1>, vector<88x256xf32>
    %144 = arith.mulf %134, %143 : vector<88x256xf32>
    %c0_101 = arith.constant 0 : index
    %c0_102 = arith.constant 0 : index
    %145 = vector.load %arg13[%c0_101, %c0_102] : memref<2x256xf32, #tpu.memory_space<vmem>>, vector<1x256xf32>
    %c1_103 = arith.constant 1 : index
    %c0_104 = arith.constant 0 : index
    %146 = vector.load %arg13[%c1_103, %c0_104] : memref<2x256xf32, #tpu.memory_space<vmem>>, vector<1x256xf32>
    %147 = vector.shape_cast %36 : vector<88x1xi1> to vector<88x1xi1>
    %148 = vector.broadcast %147 : vector<88x1xi1> to vector<88x256xi1>
    %149 = vector.shape_cast %145 : vector<1x256xf32> to vector<1x256xf32>
    %150 = vector.broadcast %149 : vector<1x256xf32> to vector<88x256xf32>
    %151 = vector.shape_cast %146 : vector<1x256xf32> to vector<1x256xf32>
    %152 = vector.broadcast %151 : vector<1x256xf32> to vector<88x256xf32>
    %153 = arith.select %148, %150, %152 : vector<88x256xi1>, vector<88x256xf32>
    %154 = arith.addf %144, %153 : vector<88x256xf32>
    %cst_105 = arith.constant 0.000000e+00 : f32
    %155 = vector.broadcast %cst_105 : f32 to vector<88x256xf32>
    %156 = arith.maximumf %154, %155 : vector<88x256xf32>
    %157 = vector.broadcast %33 : vector<88x1xf32> to vector<88x256xf32>
    %158 = arith.mulf %156, %157 : vector<88x256xf32>
    %159 = arith.truncf %158 : vector<88x256xf32> to vector<88x256xbf16>
    %c0_106 = arith.constant 0 : index
    %c0_107 = arith.constant 0 : index
    %160 = vector.load %arg14[%c0_106, %c0_107] : memref<256x2xbf16, #tpu.memory_space<vmem>>, vector<256x2xbf16>
    %cst_108 = arith.constant dense<0.000000e+00> : vector<88x2xf32>
    %161 = tpu.matmul %159, %160, %cst_108 {dimension_numbers = #tpu.dot_dimension_numbers<[1], [0], [0], [1], [0, 0, 1, 1], [], []>} : vector<88x256xbf16>, vector<256x2xbf16>, vector<88x2xf32> -> vector<88x2xf32>
    %c0_109 = arith.constant 0 : index
    %c0_110 = arith.constant 0 : index
    %162 = vector.load %arg15[%c0_109, %c0_110] : memref<1x2xf32, #tpu.memory_space<vmem>>, vector<1x2xf32>
    %163 = vector.broadcast %162 : vector<1x2xf32> to vector<88x2xf32>
    %164 = arith.addf %161, %163 : vector<88x2xf32>
    %165 = vector.extract_strided_slice %164 {offsets = [0, 0], sizes = [16, 1], strides = [1, 1]} : vector<88x2xf32> to vector<16x1xf32>
    %166 = vector.extract_strided_slice %164 {offsets = [48, 1], sizes = [16, 1], strides = [1, 1]} : vector<88x2xf32> to vector<16x1xf32>
    %cst_111 = arith.constant dense<0.000000e+00> : vector<16x16xf32>
    %167 = tpu.matmul %165, %166, %cst_111 {dimension_numbers = #tpu.dot_dimension_numbers<[1], [1], [0], [0], [0, 0, 1, 0], [], []>} : vector<16x1xf32>, vector<16x1xf32>, vector<16x16xf32> -> vector<16x16xf32>
    %cst_112 = arith.constant 0.000000e+00 : f32
    %168 = vector.broadcast %cst_112 : f32 to vector<16x16xf32>
    %169 = arith.cmpf ogt, %167, %168 : vector<16x16xf32>
    %cst_113 = arith.constant 2.000000e-01 : f32
    %170 = vector.broadcast %cst_113 : f32 to vector<16x16xf32>
    %171 = arith.mulf %170, %167 : vector<16x16xf32>
    %172 = arith.select %169, %167, %171 : vector<16x16xi1>, vector<16x16xf32>
    %cst_114 = arith.constant dense<0xFF800000> : vector<16xf32>
    %173 = vector.multi_reduction <maximumf>, %172, %cst_114 [1] : vector<16x16xf32> to vector<16xf32>
    %174 = vector.shape_cast %173 : vector<16xf32> to vector<16x1xf32>
    %175 = vector.broadcast %174 : vector<16x1xf32> to vector<16x16xf32>
    %176 = arith.subf %172, %175 : vector<16x16xf32>
    %177 = math.exp %176 : vector<16x16xf32>
    %cst_115 = arith.constant dense<0.000000e+00> : vector<16xf32>
    %178 = vector.multi_reduction <add>, %177, %cst_115 [1] : vector<16x16xf32> to vector<16xf32>
    %179 = vector.shape_cast %178 : vector<16xf32> to vector<16x1xf32>
    %180 = vector.broadcast %179 : vector<16x1xf32> to vector<16x16xf32>
    %181 = arith.divf %177, %180 : vector<16x16xf32>
    %c0_116 = arith.constant 0 : index
    %c0_117 = arith.constant 0 : index
    %c0_118 = arith.constant 0 : index
    %182 = vector.load %arg21[%c0_116, %c0_117, %c0_118] : memref<2x16x16xf32, #tpu.memory_space<vmem>>, vector<1x16x16xf32>
    %183 = vector.shape_cast %182 : vector<1x16x16xf32> to vector<16x16xf32>
    %184 = vector.shape_cast %181 : vector<16x16xf32> to vector<1x16x16xf32>
    tpu.vector_store %arg21[%c0_116, %c0_117, %c0_118], %184 {strides = array<i32>} : memref<2x16x16xf32, #tpu.memory_space<vmem>>, vector<1x16x16xf32>,
    %185 = vector.extract_strided_slice %158 {offsets = [0, 0], sizes = [16, 256], strides = [1, 1]} : vector<88x256xf32> to vector<16x256xf32>
    %186 = vector.extract_strided_slice %158 {offsets = [48, 0], sizes = [16, 256], strides = [1, 1]} : vector<88x256xf32> to vector<16x256xf32>
    %cst_119 = arith.constant dense<0.000000e+00> : vector<16x256xf32>
    %187 = tpu.matmul %181, %185, %cst_119 {dimension_numbers = #tpu.dot_dimension_numbers<[1], [0], [0], [1], [0, 0, 1, 1], [], []>} : vector<16x16xf32>, vector<16x256xf32>, vector<16x256xf32> -> vector<16x256xf32>
    %188 = tpu.concatenate %187, %186 in 1 : vector<16x256xf32>, vector<16x256xf32> -> vector<16x512xf32>
    %189 = vector.extract_strided_slice %164 {offsets = [24, 0], sizes = [16, 1], strides = [1, 1]} : vector<88x2xf32> to vector<16x1xf32>
    %190 = vector.extract_strided_slice %164 {offsets = [72, 1], sizes = [16, 1], strides = [1, 1]} : vector<88x2xf32> to vector<16x1xf32>
    %cst_120 = arith.constant dense<0.000000e+00> : vector<16x16xf32>
    %191 = tpu.matmul %189, %190, %cst_120 {dimension_numbers = #tpu.dot_dimension_numbers<[1], [1], [0], [0], [0, 0, 1, 0], [], []>} : vector<16x1xf32>, vector<16x1xf32>, vector<16x16xf32> -> vector<16x16xf32>
    %cst_121 = arith.constant 0.000000e+00 : f32
    %192 = vector.broadcast %cst_121 : f32 to vector<16x16xf32>
    %193 = arith.cmpf ogt, %191, %192 : vector<16x16xf32>
    %cst_122 = arith.constant 2.000000e-01 : f32
    %194 = vector.broadcast %cst_122 : f32 to vector<16x16xf32>
    %195 = arith.mulf %194, %191 : vector<16x16xf32>
    %196 = arith.select %193, %191, %195 : vector<16x16xi1>, vector<16x16xf32>
    %cst_123 = arith.constant dense<0xFF800000> : vector<16xf32>
    %197 = vector.multi_reduction <maximumf>, %196, %cst_123 [1] : vector<16x16xf32> to vector<16xf32>
    %198 = vector.shape_cast %197 : vector<16xf32> to vector<16x1xf32>
    %199 = vector.broadcast %198 : vector<16x1xf32> to vector<16x16xf32>
    %200 = arith.subf %196, %199 : vector<16x16xf32>
    %201 = math.exp %200 : vector<16x16xf32>
    %cst_124 = arith.constant dense<0.000000e+00> : vector<16xf32>
    %202 = vector.multi_reduction <add>, %201, %cst_124 [1] : vector<16x16xf32> to vector<16xf32>
    %203 = vector.shape_cast %202 : vector<16xf32> to vector<16x1xf32>
    %204 = vector.broadcast %203 : vector<16x1xf32> to vector<16x16xf32>
    %205 = arith.divf %201, %204 : vector<16x16xf32>
    %c1_125 = arith.constant 1 : index
    %c0_126 = arith.constant 0 : index
    %c0_127 = arith.constant 0 : index
    %206 = vector.load %arg21[%c1_125, %c0_126, %c0_127] : memref<2x16x16xf32, #tpu.memory_space<vmem>>, vector<1x16x16xf32>
    %207 = vector.shape_cast %206 : vector<1x16x16xf32> to vector<16x16xf32>
    %208 = vector.shape_cast %205 : vector<16x16xf32> to vector<1x16x16xf32>
    tpu.vector_store %arg21[%c1_125, %c0_126, %c0_127], %208 {strides = array<i32>} : memref<2x16x16xf32, #tpu.memory_space<vmem>>, vector<1x16x16xf32>,
    %209 = vector.extract_strided_slice %158 {offsets = [24, 0], sizes = [16, 256], strides = [1, 1]} : vector<88x256xf32> to vector<16x256xf32>
    %210 = vector.extract_strided_slice %158 {offsets = [72, 0], sizes = [16, 256], strides = [1, 1]} : vector<88x256xf32> to vector<16x256xf32>
    %cst_128 = arith.constant dense<0.000000e+00> : vector<16x256xf32>
    %211 = tpu.matmul %205, %209, %cst_128 {dimension_numbers = #tpu.dot_dimension_numbers<[1], [0], [0], [1], [0, 0, 1, 1], [], []>} : vector<16x16xf32>, vector<16x256xf32>, vector<16x256xf32> -> vector<16x256xf32>
    %212 = tpu.concatenate %211, %210 in 1 : vector<16x256xf32>, vector<16x256xf32> -> vector<16x512xf32>
    %213 = tpu.concatenate %188, %212 in 0 : vector<16x512xf32>, vector<16x512xf32> -> vector<32x512xf32>
    %214 = vector.extract_strided_slice %33 {offsets = [48, 0], sizes = [16, 1], strides = [1, 1]} : vector<88x1xf32> to vector<16x1xf32>
    %215 = vector.extract_strided_slice %33 {offsets = [72, 0], sizes = [16, 1], strides = [1, 1]} : vector<88x1xf32> to vector<16x1xf32>
    %216 = tpu.concatenate %214, %215 in 0 : vector<16x1xf32>, vector<16x1xf32> -> vector<32x1xf32>
    %217 = vector.broadcast %216 : vector<32x1xf32> to vector<32x512xf32>
    %218 = arith.mulf %213, %217 : vector<32x512xf32>
    %c0_129 = arith.constant 0 : index
    %c0_130 = arith.constant 0 : index
    %219 = vector.load %arg16[%c0_129, %c0_130] : memref<1x512xf32, #tpu.memory_space<vmem>>, vector<1x512xf32>
    %220 = vector.broadcast %219 : vector<1x512xf32> to vector<32x512xf32>
    %221 = arith.mulf %218, %220 : vector<32x512xf32>
    %c0_131 = arith.constant 0 : index
    %c0_132 = arith.constant 0 : index
    %222 = vector.load %arg17[%c0_131, %c0_132] : memref<1x512xf32, #tpu.memory_space<vmem>>, vector<1x512xf32>
    %223 = vector.broadcast %222 : vector<1x512xf32> to vector<32x512xf32>
    %224 = arith.addf %221, %223 : vector<32x512xf32>
    %cst_133 = arith.constant 0.000000e+00 : f32
    %225 = vector.broadcast %cst_133 : f32 to vector<32x512xf32>
    %226 = arith.maximumf %224, %225 : vector<32x512xf32>
    %227 = vector.broadcast %216 : vector<32x1xf32> to vector<32x512xf32>
    %228 = arith.mulf %226, %227 : vector<32x512xf32>
    %229 = arith.truncf %228 : vector<32x512xf32> to vector<32x512xbf16>
    %c0_134 = arith.constant 0 : index
    %c0_135 = arith.constant 0 : index
    %230 = vector.load %arg18[%c0_134, %c0_135] : memref<512x1xbf16, #tpu.memory_space<vmem>>, vector<512x1xbf16>
    %cst_136 = arith.constant dense<0.000000e+00> : vector<32x1xf32>
    %231 = tpu.matmul %229, %230, %cst_136 {dimension_numbers = #tpu.dot_dimension_numbers<[1], [0], [0], [1], [0, 0, 1, 1], [], []>} : vector<32x512xbf16>, vector<512x1xbf16>, vector<32x1xf32> -> vector<32x1xf32>
    %c0_137 = arith.constant 0 : index
    %c0_138 = arith.constant 0 : index
    %232 = vector.load %arg19[%c0_137, %c0_138] : memref<1x1xf32, #tpu.memory_space<vmem>>, vector<1x1xf32>
    %233 = vector.broadcast %232 : vector<1x1xf32> to vector<32x1xf32>
    %234 = arith.addf %231, %233 : vector<32x1xf32>
    %c0_139 = arith.constant 0 : index
    %c0_140 = arith.constant 0 : index
    %235 = vector.load %arg20[%c0_139, %c0_140] : memref<32x1xf32, #tpu.memory_space<vmem>>, vector<32x1xf32>
    tpu.vector_store %arg20[%c0_139, %c0_140], %234 {strides = array<i32>} : memref<32x1xf32, #tpu.memory_space<vmem>>, vector<32x1xf32>,
    return
  }
  func.func @transform_0(%arg0: i32) -> (i32, i32, i32) {
    %c0_i32 = arith.constant 0 : i32
    %c0_i32_0 = arith.constant 0 : i32
    %c0_i32_1 = arith.constant 0 : i32
    %c0_i32_2 = arith.constant 0 : i32
    return %c0_i32, %c0_i32_0, %c0_i32_1 : i32, i32, i32
  }
  func.func @transform_1(%arg0: i32) -> (i32, i32, i32) {
    %c0_i32 = arith.constant 0 : i32
    %c0_i32_0 = arith.constant 0 : i32
    %c0_i32_1 = arith.constant 0 : i32
    %c0_i32_2 = arith.constant 0 : i32
    return %c0_i32, %c0_i32_0, %c0_i32_1 : i32, i32, i32
  }
  func.func @transform_2(%arg0: i32) -> (i32, i32, i32) {
    %c0_i32 = arith.constant 0 : i32
    %c0_i32_0 = arith.constant 0 : i32
    %c0_i32_1 = arith.constant 0 : i32
    %c0_i32_2 = arith.constant 0 : i32
    return %c0_i32, %c0_i32_0, %c0_i32_1 : i32, i32, i32
  }
  func.func @transform_3(%arg0: i32) -> (i32, i32, i32) {
    %c0_i32 = arith.constant 0 : i32
    %c0_i32_0 = arith.constant 0 : i32
    %c0_i32_1 = arith.constant 0 : i32
    %c0_i32_2 = arith.constant 0 : i32
    return %c0_i32, %c0_i32_0, %c0_i32_1 : i32, i32, i32
  }
  func.func @transform_4(%arg0: i32) -> (i32, i32) {
    %c0_i32 = arith.constant 0 : i32
    %c0_i32_0 = arith.constant 0 : i32
    %c0_i32_1 = arith.constant 0 : i32
    return %c0_i32, %c0_i32_0 : i32, i32
  }
  func.func @transform_5(%arg0: i32) -> (i32, i32) {
    %c0_i32 = arith.constant 0 : i32
    %c0_i32_0 = arith.constant 0 : i32
    %c0_i32_1 = arith.constant 0 : i32
    return %c0_i32, %c0_i32_0 : i32, i32
  }
  func.func @transform_6(%arg0: i32) -> (i32, i32) {
    %c0_i32 = arith.constant 0 : i32
    %c0_i32_0 = arith.constant 0 : i32
    %c0_i32_1 = arith.constant 0 : i32
    return %c0_i32, %c0_i32_0 : i32, i32
  }
  func.func @transform_7(%arg0: i32) -> (i32, i32) {
    %c0_i32 = arith.constant 0 : i32
    %c0_i32_0 = arith.constant 0 : i32
    %c0_i32_1 = arith.constant 0 : i32
    return %c0_i32, %c0_i32_0 : i32, i32
  }
  func.func @transform_8(%arg0: i32) -> (i32, i32) {
    %c0_i32 = arith.constant 0 : i32
    %c0_i32_0 = arith.constant 0 : i32
    %c0_i32_1 = arith.constant 0 : i32
    return %c0_i32, %c0_i32_0 : i32, i32
  }
  func.func @transform_9(%arg0: i32) -> (i32, i32) {
    %c0_i32 = arith.constant 0 : i32
    %c0_i32_0 = arith.constant 0 : i32
    %c0_i32_1 = arith.constant 0 : i32
    return %c0_i32, %c0_i32_0 : i32, i32
  }
  func.func @transform_10(%arg0: i32) -> (i32, i32) {
    %c0_i32 = arith.constant 0 : i32
    %c0_i32_0 = arith.constant 0 : i32
    %c0_i32_1 = arith.constant 0 : i32
    return %c0_i32, %c0_i32_0 : i32, i32
  }
  func.func @transform_11(%arg0: i32) -> (i32, i32) {
    %c0_i32 = arith.constant 0 : i32
    %c0_i32_0 = arith.constant 0 : i32
    %c0_i32_1 = arith.constant 0 : i32
    return %c0_i32, %c0_i32_0 : i32, i32
  }
  func.func @transform_12(%arg0: i32) -> (i32, i32) {
    %c0_i32 = arith.constant 0 : i32
    %c0_i32_0 = arith.constant 0 : i32
    %c0_i32_1 = arith.constant 0 : i32
    return %c0_i32, %c0_i32_0 : i32, i32
  }
  func.func @transform_13(%arg0: i32) -> (i32, i32) {
    %c0_i32 = arith.constant 0 : i32
    %c0_i32_0 = arith.constant 0 : i32
    %c0_i32_1 = arith.constant 0 : i32
    return %c0_i32, %c0_i32_0 : i32, i32
  }
  func.func @transform_14(%arg0: i32) -> (i32, i32) {
    %c0_i32 = arith.constant 0 : i32
    %c0_i32_0 = arith.constant 0 : i32
    %c0_i32_1 = arith.constant 0 : i32
    return %c0_i32, %c0_i32_0 : i32, i32
  }
  func.func @transform_15(%arg0: i32) -> (i32, i32) {
    %c0_i32 = arith.constant 0 : i32
    %c0_i32_0 = arith.constant 0 : i32
    %c0_i32_1 = arith.constant 0 : i32
    return %c0_i32, %c0_i32_0 : i32, i32
  }
  func.func @transform_16(%arg0: i32) -> (i32, i32) {
    %c0_i32 = arith.constant 0 : i32
    %c0_i32_0 = arith.constant 0 : i32
    %c0_i32_1 = arith.constant 0 : i32
    return %c0_i32, %c0_i32_0 : i32, i32
  }
  func.func @transform_17(%arg0: i32) -> (i32, i32) {
    %c0_i32 = arith.constant 0 : i32
    %c0_i32_0 = arith.constant 0 : i32
    %c0_i32_1 = arith.constant 0 : i32
    return %c0_i32, %c0_i32_0 : i32, i32
  }
  func.func @transform_18(%arg0: i32) -> (i32, i32) {
    %c0_i32 = arith.constant 0 : i32
    %c0_i32_0 = arith.constant 0 : i32
    %c0_i32_1 = arith.constant 0 : i32
    return %c0_i32, %c0_i32_0 : i32, i32
  }
  func.func @transform_19(%arg0: i32) -> (i32, i32) {
    %c0_i32 = arith.constant 0 : i32
    %c0_i32_0 = arith.constant 0 : i32
    %c0_i32_1 = arith.constant 0 : i32
    return %c0_i32, %c0_i32_0 : i32, i32
  }
  func.func @transform_20(%arg0: i32) -> (i32, i32, i32) {
    %c0_i32 = arith.constant 0 : i32
    %c0_i32_0 = arith.constant 0 : i32
    %c0_i32_1 = arith.constant 0 : i32
    %c0_i32_2 = arith.constant 0 : i32
    return %c0_i32, %c0_i32_0, %c0_i32_1 : i32, i32, i32
  }
}

</mosaic_0001>

<llo_original>
// kernel: tpu_custom_call.1
$region0: #{tpu_custom_call.1}
  #allocation0 [shape = 'u32[]', space=smem, size = 0x4, offset = 0x4, fixed_abs, tag = 'smem constant byte address 0x4 - core index']
  #allocation1 [shape = 'u32[144,128]{1,0:T(1,128)}', space=vmem, size = 0x12000, scoped, tag = 'internal scratch']
  #allocation2 [shape = 'f32[104,128]{1,0:T(8,128)}', space=vmem, size = 0xd000, scoped, tag = 'scratch operand']
  #allocation3 [shape = 'f32[88,1]{1,0:T(8,128)}', space=vmem, size = 0xb000, scoped, tag = 'scratch operand']
  #allocation4 [shape = 'f32[1,1]{1,0:T(1,128)S(1)}', space=vmem, size = 0x200, scoped, tag = 'scoped memory for tpu_custom_call.1']
  %s0 = inlined_call_operand.vmem [shape: f32[2,16,32], index: 0, kind: input, shape index: {}]
  %s1 = inlined_call_operand.vmem [shape: f32[2,16,32], index: 1, kind: input, shape index: {}]
  %s2 = inlined_call_operand.vmem [shape: f32[2,16,1], index: 2, kind: input, shape index: {}]
  %s3 = inlined_call_operand.vmem [shape: f32[2,16,1], index: 3, kind: input, shape index: {}]
  %s4 = inlined_call_operand.vmem [shape: bf16[192,64], index: 4, kind: input, shape index: {}]
  %s5 = inlined_call_operand.vmem [shape: bf16[192,128], index: 5, kind: input, shape index: {}]
  %s6 = inlined_call_operand.vmem [shape: bf16[384,256], index: 6, kind: input, shape index: {}]
  %s7 = inlined_call_operand.vmem [shape: f32[2,64], index: 7, kind: input, shape index: {}]
  %s8 = inlined_call_operand.vmem [shape: f32[2,64], index: 8, kind: input, shape index: {}]
  %s9 = inlined_call_operand.vmem [shape: f32[2,128], index: 9, kind: input, shape index: {}]
  %s10 = inlined_call_operand.vmem [shape: f32[2,128], index: 10, kind: input, shape index: {}]
  %s11 = inlined_call_operand.vmem [shape: f32[2,256], index: 11, kind: input, shape index: {}]
  %s12 = inlined_call_operand.vmem [shape: f32[2,256], index: 12, kind: input, shape index: {}]
  %s13 = inlined_call_operand.vmem [shape: bf16[256,2], index: 13, kind: input, shape index: {}]
  %s14 = inlined_call_operand.vmem [shape: f32[1,2], index: 14, kind: input, shape index: {}]
  %s15 = inlined_call_operand.vmem [shape: f32[1,512], index: 15, kind: input, shape index: {}]
  %s16 = inlined_call_operand.vmem [shape: f32[1,512], index: 16, kind: input, shape index: {}]
  %s17 = inlined_call_operand.vmem [shape: bf16[512,1], index: 17, kind: input, shape index: {}]
  %s18 = inlined_call_operand.<no memory space> [shape: f32[1,1], index: 18, kind: input, shape index: {}]
  %s19 = inlined_call_operand.vmem [shape: f32[32,1], index: 19, kind: output, shape index: {0}]
  %s20 = inlined_call_operand.hbm [shape: f32[2,16,16], index: 20, kind: output, shape index: {1}]
  %21 = xla_tuple %s19, %s20
  %s22 = sld [smem:[#allocation0]]
  $region94: #{tpu_custom_call.1} parent=0
    _
  %s24 = ssub.s32 1, %s22
  %s25 = scalar_select 0, %s24, %s22
  %v26 = vstv %s18
  %27 = vst [vmem:[#allocation4] sm:$0x1] %v26
  $region1: #{tpu_custom_call.1} parent=0
    #allocation5 [shape = 'u8[16384]{0}', space=vmem, size = 0x4000, scoped, tag = 'output window, operand 1, single buffered']
    #allocation6 [shape = 's32[1]{0}', space=sflag, size = 0x4, scoped, tag = 'scoped memory for tpu_custom_call.1']
    %28 = vsyncpa [#allocation6], 0
    // Predicated region
    $region2: #{tpu_custom_call.1} parent=1 // pred_check
      _
    $region3: #{tpu_custom_call.1} parent=1 // pred_check_branch
      %30 = sbr.rel (0) target = $region5
    $region4: #{tpu_custom_call.1} parent=1 // pred_region
      _
    $region5: #{tpu_custom_call.1} parent=1 // pred_fallthru
      _
    // Predicated region
    $region6: #{tpu_custom_call.1} parent=1 // pred_check
      _
    $region7: #{tpu_custom_call.1} parent=1 // pred_check_branch
      %32 = sbr.rel (0) target = $region9
    $region8: #{tpu_custom_call.1} parent=1 // pred_region
      _
    $region9: #{tpu_custom_call.1} parent=1 // pred_fallthru
      _
    // Predicated region
    $region10: #{tpu_custom_call.1} parent=1 // pred_check
      _
    $region11: #{tpu_custom_call.1} parent=1 // pred_check_branch
      %34 = sbr.rel (0) target = $region13
    $region12: #{tpu_custom_call.1} parent=1 // pred_region
      _
    $region13: #{tpu_custom_call.1} parent=1 // pred_fallthru
      _
    // Predicated region
    $region14: #{tpu_custom_call.1} parent=1 // pred_check
      _
    $region15: #{tpu_custom_call.1} parent=1 // pred_check_branch
      %36 = sbr.rel (0) target = $region17
    $region16: #{tpu_custom_call.1} parent=1 // pred_region
      _
    $region17: #{tpu_custom_call.1} parent=1 // pred_fallthru
      _
    // Predicated region
    $region18: #{tpu_custom_call.1} parent=1 // pred_check
      _
    $region19: #{tpu_custom_call.1} parent=1 // pred_check_branch
      %38 = sbr.rel (0) target = $region21
    $region20: #{tpu_custom_call.1} parent=1 // pred_region
      _
    $region21: #{tpu_custom_call.1} parent=1 // pred_fallthru
      _
    // Predicated region
    $region22: #{tpu_custom_call.1} parent=1 // pred_check
      _
    $region23: #{tpu_custom_call.1} parent=1 // pred_check_branch
      %40 = sbr.rel (0) target = $region25
    $region24: #{tpu_custom_call.1} parent=1 // pred_region
      _
    $region25: #{tpu_custom_call.1} parent=1 // pred_fallthru
      _
    // Predicated region
    $region26: #{tpu_custom_call.1} parent=1 // pred_check
      _
    $region27: #{tpu_custom_call.1} parent=1 // pred_check_branch
      %42 = sbr.rel (0) target = $region29
    $region28: #{tpu_custom_call.1} parent=1 // pred_region
      _
    $region29: #{tpu_custom_call.1} parent=1 // pred_fallthru
      _
    // Predicated region
    $region30: #{tpu_custom_call.1} parent=1 // pred_check
      _
    $region31: #{tpu_custom_call.1} parent=1 // pred_check_branch
      %44 = sbr.rel (0) target = $region33
    $region32: #{tpu_custom_call.1} parent=1 // pred_region
      _
    $region33: #{tpu_custom_call.1} parent=1 // pred_fallthru
      _
    // Predicated region
    $region34: #{tpu_custom_call.1} parent=1 // pred_check
      _
    $region35: #{tpu_custom_call.1} parent=1 // pred_check_branch
      %46 = sbr.rel (0) target = $region37
    $region36: #{tpu_custom_call.1} parent=1 // pred_region
      _
    $region37: #{tpu_custom_call.1} parent=1 // pred_fallthru
      _
    // Predicated region
    $region38: #{tpu_custom_call.1} parent=1 // pred_check
      _
    $region39: #{tpu_custom_call.1} parent=1 // pred_check_branch
      %48 = sbr.rel (0) target = $region41
    $region40: #{tpu_custom_call.1} parent=1 // pred_region
      _
    $region41: #{tpu_custom_call.1} parent=1 // pred_fallthru
      _
    // Predicated region
    $region42: #{tpu_custom_call.1} parent=1 // pred_check
      _
    $region43: #{tpu_custom_call.1} parent=1 // pred_check_branch
      %50 = sbr.rel (0) target = $region45
    $region44: #{tpu_custom_call.1} parent=1 // pred_region
      _
    $region45: #{tpu_custom_call.1} parent=1 // pred_fallthru
      _
    // Predicated region
    $region46: #{tpu_custom_call.1} parent=1 // pred_check
      _
    $region47: #{tpu_custom_call.1} parent=1 // pred_check_branch
      %52 = sbr.rel (0) target = $region49
    $region48: #{tpu_custom_call.1} parent=1 // pred_region
      _
    $region49: #{tpu_custom_call.1} parent=1 // pred_fallthru
      _
    // Predicated region
    $region50: #{tpu_custom_call.1} parent=1 // pred_check
      _
    $region51: #{tpu_custom_call.1} parent=1 // pred_check_branch
      %54 = sbr.rel (0) target = $region53
    $region52: #{tpu_custom_call.1} parent=1 // pred_region
      _
    $region53: #{tpu_custom_call.1} parent=1 // pred_fallthru
      _
    // Predicated region
    $region54: #{tpu_custom_call.1} parent=1 // pred_check
      _
    $region55: #{tpu_custom_call.1} parent=1 // pred_check_branch
      %56 = sbr.rel (0) target = $region57
    $region56: #{tpu_custom_call.1} parent=1 // pred_region
      _
    $region57: #{tpu_custom_call.1} parent=1 // pred_fallthru
      _
    // Predicated region
    $region58: #{tpu_custom_call.1} parent=1 // pred_check
      _
    $region59: #{tpu_custom_call.1} parent=1 // pred_check_branch
      %58 = sbr.rel (0) target = $region61
    $region60: #{tpu_custom_call.1} parent=1 // pred_region
      _
    $region61: #{tpu_custom_call.1} parent=1 // pred_fallthru
      _
    // Predicated region
    $region62: #{tpu_custom_call.1} parent=1 // pred_check
      _
    $region63: #{tpu_custom_call.1} parent=1 // pred_check_branch
      %60 = sbr.rel (0) target = $region65
    $region64: #{tpu_custom_call.1} parent=1 // pred_region
      _
    $region65: #{tpu_custom_call.1} parent=1 // pred_fallthru
      _
    // Predicated region
    $region66: #{tpu_custom_call.1} parent=1 // pred_check
      _
    $region67: #{tpu_custom_call.1} parent=1 // pred_check_branch
      %62 = sbr.rel (0) target = $region69
    $region68: #{tpu_custom_call.1} parent=1 // pred_region
      _
    $region69: #{tpu_custom_call.1} parent=1 // pred_fallthru
      _
    // Predicated region
    $region70: #{tpu_custom_call.1} parent=1 // pred_check
      _
    $region71: #{tpu_custom_call.1} parent=1 // pred_check_branch
      %64 = sbr.rel (0) target = $region73
    $region72: #{tpu_custom_call.1} parent=1 // pred_region
      _
    $region73: #{tpu_custom_call.1} parent=1 // pred_fallthru
      _
    // Predicated region
    $region74: #{tpu_custom_call.1} parent=1 // pred_check
      _
    $region75: #{tpu_custom_call.1} parent=1 // pred_check_branch
      %66 = sbr.rel (0) target = $region77
    $region76: #{tpu_custom_call.1} parent=1 // pred_region
      _
    $region77: #{tpu_custom_call.1} parent=1 // pred_fallthru
      _
    %68 = vst [vmem:[#allocation2] sm:$0xff] 0.0
    %69 = vst [vmem:[#allocation2 + $0x8] sm:$0xff] 0.0
    %70 = vst [vmem:[#allocation2 + $0x10] sm:$0xff] 0.0
    %71 = vst [vmem:[#allocation2 + $0x18] sm:$0xff] 0.0
    %72 = vst [vmem:[#allocation2 + $0x20] sm:$0xff] 0.0
    %73 = vst [vmem:[#allocation2 + $0x28] sm:$0xff] 0.0
    %74 = vst [vmem:[#allocation2 + $0x30] sm:$0xff] 0.0
    %75 = vst [vmem:[#allocation2 + $0x38] sm:$0xff] 0.0
    %76 = vst [vmem:[#allocation2 + $0x40] sm:$0xff] 0.0
    %77 = vst [vmem:[#allocation2 + $0x48] sm:$0xff] 0.0
    %78 = vst [vmem:[#allocation2 + $0x50] sm:$0xff] 0.0
    %79 = vst [vmem:[#allocation2 + $0x58] sm:$0xff] 0.0
    %80 = vst [vmem:[#allocation2 + $0x60] sm:$0xff] 0.0
    %vm81 = vcmask 7168
    %82 = vst.msk [vmem:[#allocation3] sm:$0xff] %vm81, 0.0
    %83 = vst.msk [vmem:[#allocation3 + $0x8] sm:$0xff] %vm81, 0.0
    %84 = vst.msk [vmem:[#allocation3 + $0x10] sm:$0xff] %vm81, 0.0
    %85 = vst.msk [vmem:[#allocation3 + $0x18] sm:$0xff] %vm81, 0.0
    %86 = vst.msk [vmem:[#allocation3 + $0x20] sm:$0xff] %vm81, 0.0
    %87 = vst.msk [vmem:[#allocation3 + $0x28] sm:$0xff] %vm81, 0.0
    %88 = vst.msk [vmem:[#allocation3 + $0x30] sm:$0xff] %vm81, 0.0
    %89 = vst.msk [vmem:[#allocation3 + $0x38] sm:$0xff] %vm81, 0.0
    %90 = vst.msk [vmem:[#allocation3 + $0x40] sm:$0xff] %vm81, 0.0
    %91 = vst.msk [vmem:[#allocation3 + $0x48] sm:$0xff] %vm81, 0.0
    %92 = vst.msk [vmem:[#allocation3 + $0x50] sm:$0xff] %vm81, 0.0
    %v93 = vld [vmem:[%s0] sm:$0xff]
    %v94 = vld [vmem:[%s0 + $0x8] sm:$0xff]
    %vm95 = vcmask 261120
    %v96 = vsel %vm95, %v93, 0.0
    %v97 = vsel %vm95, %v94, 0.0
    %vm98 = vcmask 523264
    %99 = vst.msk [vmem:[#allocation2 + $0x8] sm:$0xff] %vm98, %v96
    %100 = vst.msk [vmem:[#allocation2 + $0x10] sm:$0xff] %vm98, %v97
    %s101 = scalar_lea.vmem %s0, 16
    %v102 = vld [vmem:[%s101] sm:$0xff]
    %v103 = vld [vmem:[%s101 + $0x8] sm:$0xff]
    %v104 = vsel %vm95, %v102, 0.0
    %v105 = vsel %vm95, %v103, 0.0
    %106 = vst.msk [vmem:[#allocation2 + $0x20] sm:$0xff] %vm98, %v104
    %107 = vst.msk [vmem:[#allocation2 + $0x28] sm:$0xff] %vm98, %v105
    %v108 = vld [vmem:[%s1] sm:$0xff]
    %v109 = vld [vmem:[%s1 + $0x8] sm:$0xff]
    %112 = vrot.lane.b32.xlu0 %v108, 32
    %v113 = vpop.permute.xlu0 %112
    %114 = vrot.lane.b32.xlu0 %v109, 32
    %v115 = vpop.permute.xlu0 %114
    %v118 = vsel %vm95, 0.0, %v113
    %v119 = vsel %vm95, 0.0, %v115
    %120 = vst.msk [vmem:[#allocation2 + $0x38] sm:$0xff] %vm98, %v118
    %121 = vst.msk [vmem:[#allocation2 + $0x40] sm:$0xff] %vm98, %v119
    %s122 = scalar_lea.vmem %s1, 16
    %v123 = vld [vmem:[%s122] sm:$0xff]
    %v124 = vld [vmem:[%s122 + $0x8] sm:$0xff]
    %127 = vrot.lane.b32.xlu0 %v123, 32
    %v128 = vpop.permute.xlu0 %127
    %129 = vrot.lane.b32.xlu0 %v124, 32
    %v130 = vpop.permute.xlu0 %129
    %v133 = vsel %vm95, 0.0, %v128
    %v134 = vsel %vm95, 0.0, %v130
    %135 = vst.msk [vmem:[#allocation2 + $0x50] sm:$0xff] %vm98, %v133
    %136 = vst.msk [vmem:[#allocation2 + $0x58] sm:$0xff] %vm98, %v134
    %v137 = vld [vmem:[%s2] sm:$0xff]
    %v138 = vld [vmem:[%s2 + $0x8] sm:$0xff]
    %139 = vst.msk [vmem:[#allocation3] sm:$0xff] %vm81, %v137
    %140 = vst.msk [vmem:[#allocation3 + $0x8] sm:$0xff] %vm81, %v138
    %s141 = scalar_lea.vmem %s2, 16
    %v142 = vld [vmem:[%s141] sm:$0xff]
    %v143 = vld [vmem:[%s141 + $0x8] sm:$0xff]
    %144 = vst.msk [vmem:[#allocation3 + $0x18] sm:$0xff] %vm81, %v142
    %145 = vst.msk [vmem:[#allocation3 + $0x20] sm:$0xff] %vm81, %v143
    %v146 = vld [vmem:[%s3] sm:$0xff]
    %v147 = vld [vmem:[%s3 + $0x8] sm:$0xff]
    %148 = vst.msk [vmem:[#allocation3 + $0x30] sm:$0xff] %vm81, %v146
    %149 = vst.msk [vmem:[#allocation3 + $0x38] sm:$0xff] %vm81, %v147
    %s150 = scalar_lea.vmem %s3, 16
    %v151 = vld [vmem:[%s150] sm:$0xff]
    %v152 = vld [vmem:[%s150 + $0x8] sm:$0xff]
    %153 = vst.msk [vmem:[#allocation3 + $0x48] sm:$0xff] %vm81, %v151
    %154 = vst.msk [vmem:[#allocation3 + $0x50] sm:$0xff] %vm81, %v152
    %v155 = vld [vmem:[#allocation3] sm:$0xff]
    %v156 = vld [vmem:[#allocation3 + $0x8] sm:$0xff]
    %v157 = vld [vmem:[#allocation3 + $0x10] sm:$0xff]
    %v158 = vld [vmem:[#allocation3 + $0x18] sm:$0xff]
    %v159 = vld [vmem:[#allocation3 + $0x20] sm:$0xff]
    %v160 = vld [vmem:[#allocation3 + $0x28] sm:$0xff]
    %v161 = vld [vmem:[#allocation3 + $0x30] sm:$0xff]
    %v162 = vld [vmem:[#allocation3 + $0x38] sm:$0xff]
    %v163 = vld [vmem:[#allocation3 + $0x40] sm:$0xff]
    %v164 = vld [vmem:[#allocation3 + $0x48] sm:$0xff]
    %v165 = vld [vmem:[#allocation3 + $0x50] sm:$0xff]
    %v166 = vlaneseq
    %v167 = vshrl.u32 %v166, 7
    %v168 = vadd.s32 %v167, 8
    %v169 = vadd.s32 %v167, 16
    %v170 = vadd.s32 %v167, 24
    %v171 = vadd.s32 %v167, 32
    %v172 = vadd.s32 %v167, 40
    %v173 = vadd.s32 %v167, 48
    %v174 = vadd.s32 %v167, 56
    %v175 = vadd.s32 %v167, 64
    %v176 = vadd.s32 %v167, 72
    %v177 = vadd.s32 %v167, 80
    %vm178 = vcmp.lt.s32.totalorder %v167, 48
    %vm179 = vcmp.lt.s32.totalorder %v168, 48
    %vm180 = vcmp.lt.s32.totalorder %v169, 48
    %vm181 = vcmp.lt.s32.totalorder %v170, 48
    %vm182 = vcmp.lt.s32.totalorder %v171, 48
    %vm183 = vcmp.lt.s32.totalorder %v172, 48
    %vm184 = vcmp.lt.s32.totalorder %v173, 48
    %vm185 = vcmp.lt.s32.totalorder %v174, 48
    %vm186 = vcmp.lt.s32.totalorder %v175, 48
    %vm187 = vcmp.lt.s32.totalorder %v176, 48
    %vm188 = vcmp.lt.s32.totalorder %v177, 48
    %v189 = vld [vmem:[#allocation2 + $0x7] sm:$0xff]
    %v190 = vld [vmem:[#allocation2 + $0xf] sm:$0xff]
    %v191 = vld [vmem:[#allocation2 + $0x17] sm:$0xff]
    %v192 = vld [vmem:[#allocation2 + $0x1f] sm:$0xff]
    %v193 = vld [vmem:[#allocation2 + $0x27] sm:$0xff]
    %v194 = vld [vmem:[#allocation2 + $0x2f] sm:$0xff]
    %v195 = vld [vmem:[#allocation2 + $0x37] sm:$0xff]
    %v196 = vld [vmem:[#allocation2 + $0x3f] sm:$0xff]
    %v197 = vld [vmem:[#allocation2 + $0x47] sm:$0xff]
    %v198 = vld [vmem:[#allocation2 + $0x4f] sm:$0xff]
    %v199 = vld [vmem:[#allocation2 + $0x57] sm:$0xff]
    %v200 = vpack.c.bf16 %v190, %v189
    %v201 = vpack.c.bf16 %v192, %v191
    %v202 = vpack.c.bf16 %v194, %v193
    %v203 = vpack.c.bf16 %v196, %v195
    %v204 = vpack.c.bf16 %v198, %v197
    %v205 = vpack.c.bf16 %v199, %v199
    %v206 = vld [vmem:[%s4] sm:$0xf]
    %v207 = vld [vmem:[%s4 + $0x4] sm:$0xf]
    %v208 = vld [vmem:[%s4 + $0x8] sm:$0xf]
    %v209 = vld [vmem:[%s4 + $0xc] sm:$0xf]
    %v210 = vld [vmem:[%s4 + $0x10] sm:$0xf]
    %v211 = vld [vmem:[%s4 + $0x14] sm:$0xf]
    %v212 = vld [vmem:[%s4 + $0x18] sm:$0xf]
    %v213 = vld [vmem:[%s4 + $0x1c] sm:$0xf]
    %v214 = vld [vmem:[#allocation2 + $0x8] sm:$0xff]
    %v215 = vld [vmem:[#allocation2 + $0x10] sm:$0xff]
    %v216 = vld [vmem:[#allocation2 + $0x18] sm:$0xff]
    %v217 = vld [vmem:[#allocation2 + $0x20] sm:$0xff]
    %v218 = vld [vmem:[#allocation2 + $0x28] sm:$0xff]
    %v219 = vld [vmem:[#allocation2 + $0x30] sm:$0xff]
    %v220 = vld [vmem:[#allocation2 + $0x38] sm:$0xff]
    %v221 = vld [vmem:[#allocation2 + $0x40] sm:$0xff]
    %v222 = vld [vmem:[#allocation2 + $0x48] sm:$0xff]
    %v223 = vld [vmem:[#allocation2 + $0x50] sm:$0xff]
    %v224 = vld [vmem:[#allocation2 + $0x58] sm:$0xff]
    %v225 = vpack.c.bf16 %v215, %v214
    %v226 = vpack.c.bf16 %v217, %v216
    %v227 = vpack.c.bf16 %v219, %v218
    %v228 = vpack.c.bf16 %v221, %v220
    %v229 = vpack.c.bf16 %v223, %v222
    %v230 = vpack.c.bf16 %v224, %v224
    %v231 = vld [vmem:[%s4 + $0x20] sm:$0xf]
    %v232 = vld [vmem:[%s4 + $0x24] sm:$0xf]
    %v233 = vld [vmem:[%s4 + $0x28] sm:$0xf]
    %v234 = vld [vmem:[%s4 + $0x2c] sm:$0xf]
    %v235 = vld [vmem:[%s4 + $0x30] sm:$0xf]
    %v236 = vld [vmem:[%s4 + $0x34] sm:$0xf]
    %v237 = vld [vmem:[%s4 + $0x38] sm:$0xf]
    %v238 = vld [vmem:[%s4 + $0x3c] sm:$0xf]
    %v247 = vunpack.c.l.b16 %v231
    %v248 = vunpack.c.l.b16 %v232
    %v249 = vunpack.c.l.b16 %v233
    %v250 = vunpack.c.l.b16 %v234
    %v251 = vunpack.c.l.b16 %v235
    %v252 = vunpack.c.l.b16 %v236
    %v253 = vunpack.c.l.b16 %v237
    %v254 = vunpack.c.l.b16 %v238
    %v255 = vpack.c.b16 %v248, %v247
    %v256 = vpack.c.b16 %v250, %v249
    %v257 = vpack.c.b16 %v252, %v251
    %v258 = vpack.c.b16 %v254, %v253
    %v264 = vsel %vm98, %v225, 0
    %v267 = vsel %vm98, %v226, 0
    %v270 = vsel %vm98, %v227, 0
    %v273 = vsel %vm98, %v228, 0
    %v276 = vsel %vm98, %v229, 0
    %v279 = vsel %vm98, %v230, 0
    %281 = vmatprep.subr.bf16.mxu0 0
    %282 = vmatpush1.bf16.msra.mxu0 0
    %283 = vmatprep.subr.bf16.mxu0 0
    %284 = vmatpush1.bf16.msra.mxu0 0
    %285 = vmatprep.subr.bf16.mxu0 0
    %286 = vmatpush1.bf16.msra.mxu0 0
    %287 = vmatprep.subr.bf16.mxu0 0
    %288 = vmatpush1.bf16.msra.mxu0 0
    %289 = vmatprep.subr.bf16.mxu0 0
    %290 = vmatpush1.bf16.msra.mxu0 %v258
    %291 = vmatprep.subr.bf16.mxu0 0
    %292 = vmatpush1.bf16.msra.mxu0 %v257
    %293 = vmatprep.subr.bf16.mxu0 0
    %294 = vmatpush1.bf16.msra.mxu0 %v256
    %295 = vmatprep.subr.bf16.mxu0 0
    %296 = vmatpush1.bf16.msra.mxu0 %v255
    %297 = vmatprep.subr.bf16.mxu0 0
    %298 = vmatpush2.bf16.msra.mxu0 0
    %299 = vmatprep.subr.bf16.mxu0 0
    %300 = vmatpush2.bf16.msra.mxu0 0
    %301 = vmatprep.subr.bf16.mxu0 0
    %302 = vmatpush2.bf16.msra.mxu0 0
    %303 = vmatprep.subr.bf16.mxu0 0
    %304 = vmatpush2.bf16.msra.mxu0 0
    %305 = vmatprep.subr.bf16.mxu0 0
    %306 = vmatpush2.bf16.msra.mxu0 0
    %307 = vmatprep.subr.bf16.mxu0 0
    %308 = vmatpush2.bf16.msra.mxu0 0
    %309 = vmatprep.subr.bf16.mxu0 0
    %310 = vmatpush2.bf16.msra.mxu0 0
    %311 = vmatprep.subr.bf16.mxu0 0
    %312 = vmatpush2.bf16.msra.mxu0 0
    %313 = vmatprep.mubr.bf16.mxu0 0
    %314 = vmatmul.mubr.bf16.gmra.mxu0 %v264
    %v315 = vpop.f32.mrf.mxu0
    %v316 = vadd.f32 0.0, %v315
    %v317 = vpop.f32.mrf.mxu0
    %v318 = vpop.f32.mrf.mxu0
    %v319 = vadd.f32 0.0, %v318
    %v320 = vpop.f32.mrf.mxu0
    %321 = vmatprep.mubr.bf16.mxu0 0
    %322 = vmatmul.mubr.bf16.gmra.mxu0 %v267
    %v323 = vpop.f32.mrf.mxu0
    %v324 = vadd.f32 0.0, %v323
    %v325 = vpop.f32.mrf.mxu0
    %v326 = vpop.f32.mrf.mxu0
    %v327 = vadd.f32 0.0, %v326
    %v328 = vpop.f32.mrf.mxu0
    %329 = vmatprep.mubr.bf16.mxu0 0
    %330 = vmatmul.mubr.bf16.gmra.mxu0 %v270
    %v331 = vpop.f32.mrf.mxu0
    %v332 = vadd.f32 0.0, %v331
    %v333 = vpop.f32.mrf.mxu0
    %v334 = vpop.f32.mrf.mxu0
    %v335 = vadd.f32 0.0, %v334
    %v336 = vpop.f32.mrf.mxu0
    %337 = vmatprep.mubr.bf16.mxu0 0
    %338 = vmatmul.mubr.bf16.gmra.mxu0 %v273
    %v339 = vpop.f32.mrf.mxu0
    %v340 = vadd.f32 0.0, %v339
    %v341 = vpop.f32.mrf.mxu0
    %v342 = vpop.f32.mrf.mxu0
    %v343 = vadd.f32 0.0, %v342
    %v344 = vpop.f32.mrf.mxu0
    %345 = vmatprep.mubr.bf16.mxu0 0
    %346 = vmatmul.mubr.bf16.gmra.mxu0 %v276
    %v347 = vpop.f32.mrf.mxu0
    %v348 = vadd.f32 0.0, %v347
    %v349 = vpop.f32.mrf.mxu0
    %v350 = vpop.f32.mrf.mxu0
    %v351 = vadd.f32 0.0, %v350
    %v352 = vpop.f32.mrf.mxu0
    %353 = vmatprep.mubr.bf16.mxu0 0
    %354 = vmatmul.mubr.bf16.gmra.mxu0 %v279
    %v355 = vpop.f32.mrf.mxu0
    %v356 = vadd.f32 0.0, %v355
    %v357 = vpop.f32.mrf.mxu0
    %v358 = vpop.f32.mrf.mxu0
    %v359 = vpop.f32.mrf.mxu0
    %360 = vdwg.mxu0
    %v369 = vunpack.c.l.b16 %v206
    %v370 = vunpack.c.l.b16 %v207
    %v371 = vunpack.c.l.b16 %v208
    %v372 = vunpack.c.l.b16 %v209
    %v373 = vunpack.c.l.b16 %v210
    %v374 = vunpack.c.l.b16 %v211
    %v375 = vunpack.c.l.b16 %v212
    %v376 = vunpack.c.l.b16 %v213
    %v377 = vpack.c.b16 %v370, %v369
    %v378 = vpack.c.b16 %v372, %v371
    %v379 = vpack.c.b16 %v374, %v373
    %v380 = vpack.c.b16 %v376, %v375
    %v386 = vsel %vm98, %v200, 0
    %v389 = vsel %vm98, %v201, 0
    %v392 = vsel %vm98, %v202, 0
    %v395 = vsel %vm98, %v203, 0
    %v398 = vsel %vm98, %v204, 0
    %v401 = vsel %vm98, %v205, 0
    %403 = vmatprep.subr.bf16.mxu0 0
    %404 = vmatpush1.bf16.msra.mxu0 0
    %405 = vmatprep.subr.bf16.mxu0 0
    %406 = vmatpush1.bf16.msra.mxu0 0
    %407 = vmatprep.subr.bf16.mxu0 0
    %408 = vmatpush1.bf16.msra.mxu0 0
    %409 = vmatprep.subr.bf16.mxu0 0
    %410 = vmatpush1.bf16.msra.mxu0 0
    %411 = vmatprep.subr.bf16.mxu0 0
    %412 = vmatpush1.bf16.msra.mxu0 %v380
    %413 = vmatprep.subr.bf16.mxu0 0
    %414 = vmatpush1.bf16.msra.mxu0 %v379
    %415 = vmatprep.subr.bf16.mxu0 0
    %416 = vmatpush1.bf16.msra.mxu0 %v378
    %417 = vmatprep.subr.bf16.mxu0 0
    %418 = vmatpush1.bf16.msra.mxu0 %v377
    %419 = vmatprep.subr.bf16.mxu0 0
    %420 = vmatpush2.bf16.msra.mxu0 0
    %421 = vmatprep.subr.bf16.mxu0 0
    %422 = vmatpush2.bf16.msra.mxu0 0
    %423 = vmatprep.subr.bf16.mxu0 0
    %424 = vmatpush2.bf16.msra.mxu0 0
    %425 = vmatprep.subr.bf16.mxu0 0
    %426 = vmatpush2.bf16.msra.mxu0 0
    %427 = vmatprep.subr.bf16.mxu0 0
    %428 = vmatpush2.bf16.msra.mxu0 0
    %429 = vmatprep.subr.bf16.mxu0 0
    %430 = vmatpush2.bf16.msra.mxu0 0
    %431 = vmatprep.subr.bf16.mxu0 0
    %432 = vmatpush2.bf16.msra.mxu0 0
    %433 = vmatprep.subr.bf16.mxu0 0
    %434 = vmatpush2.bf16.msra.mxu0 0
    %435 = vmatprep.mubr.bf16.mxu0 0
    %436 = vmatmul.mubr.bf16.gmra.mxu0 %v386
    %v437 = vpop.f32.mrf.mxu0
    %v438 = vadd.f32 %v316, %v437
    %v439 = vpop.f32.mrf.mxu0
    %v440 = vpop.f32.mrf.mxu0
    %v441 = vadd.f32 %v319, %v440
    %v442 = vpop.f32.mrf.mxu0
    %443 = vmatprep.mubr.bf16.mxu0 0
    %444 = vmatmul.mubr.bf16.gmra.mxu0 %v389
    %v445 = vpop.f32.mrf.mxu0
    %v446 = vadd.f32 %v324, %v445
    %v447 = vpop.f32.mrf.mxu0
    %v448 = vpop.f32.mrf.mxu0
    %v449 = vadd.f32 %v327, %v448
    %v450 = vpop.f32.mrf.mxu0
    %451 = vmatprep.mubr.bf16.mxu0 0
    %452 = vmatmul.mubr.bf16.gmra.mxu0 %v392
    %v453 = vpop.f32.mrf.mxu0
    %v454 = vadd.f32 %v332, %v453
    %v455 = vpop.f32.mrf.mxu0
    %v456 = vpop.f32.mrf.mxu0
    %v457 = vadd.f32 %v335, %v456
    %v458 = vpop.f32.mrf.mxu0
    %459 = vmatprep.mubr.bf16.mxu0 0
    %460 = vmatmul.mubr.bf16.gmra.mxu0 %v395
    %v461 = vpop.f32.mrf.mxu0
    %v462 = vadd.f32 %v340, %v461
    %v463 = vpop.f32.mrf.mxu0
    %v464 = vpop.f32.mrf.mxu0
    %v465 = vadd.f32 %v343, %v464
    %v466 = vpop.f32.mrf.mxu0
    %467 = vmatprep.mubr.bf16.mxu0 0
    %468 = vmatmul.mubr.bf16.gmra.mxu0 %v398
    %v469 = vpop.f32.mrf.mxu0
    %v470 = vadd.f32 %v348, %v469
    %v471 = vpop.f32.mrf.mxu0
    %v472 = vpop.f32.mrf.mxu0
    %v473 = vadd.f32 %v351, %v472
    %v474 = vpop.f32.mrf.mxu0
    %475 = vmatprep.mubr.bf16.mxu0 0
    %476 = vmatmul.mubr.bf16.gmra.mxu0 %v401
    %v477 = vpop.f32.mrf.mxu0
    %v478 = vadd.f32 %v356, %v477
    %v479 = vpop.f32.mrf.mxu0
    %v480 = vpop.f32.mrf.mxu0
    %v481 = vpop.f32.mrf.mxu0
    %482 = vdwg.mxu0
    %v483 = vld [vmem:[#allocation2 + $0x9] sm:$0xff]
    %v484 = vld [vmem:[#allocation2 + $0x11] sm:$0xff]
    %v485 = vld [vmem:[#allocation2 + $0x19] sm:$0xff]
    %v486 = vld [vmem:[#allocation2 + $0x21] sm:$0xff]
    %v487 = vld [vmem:[#allocation2 + $0x29] sm:$0xff]
    %v488 = vld [vmem:[#allocation2 + $0x31] sm:$0xff]
    %v489 = vld [vmem:[#allocation2 + $0x39] sm:$0xff]
    %v490 = vld [vmem:[#allocation2 + $0x41] sm:$0xff]
    %v491 = vld [vmem:[#allocation2 + $0x49] sm:$0xff]
    %v492 = vld [vmem:[#allocation2 + $0x51] sm:$0xff]
    %v493 = vld [vmem:[#allocation2 + $0x59] sm:$0xff]
    %v494 = vpack.c.bf16 %v484, %v483
    %v495 = vpack.c.bf16 %v486, %v485
    %v496 = vpack.c.bf16 %v488, %v487
    %v497 = vpack.c.bf16 %v490, %v489
    %v498 = vpack.c.bf16 %v492, %v491
    %v499 = vpack.c.bf16 %v493, %v493
    %v500 = vld [vmem:[%s4 + $0x40] sm:$0xf]
    %v501 = vld [vmem:[%s4 + $0x44] sm:$0xf]
    %v502 = vld [vmem:[%s4 + $0x48] sm:$0xf]
    %v503 = vld [vmem:[%s4 + $0x4c] sm:$0xf]
    %v504 = vld [vmem:[%s4 + $0x50] sm:$0xf]
    %v505 = vld [vmem:[%s4 + $0x54] sm:$0xf]
    %v506 = vld [vmem:[%s4 + $0x58] sm:$0xf]
    %v507 = vld [vmem:[%s4 + $0x5c] sm:$0xf]
    %v516 = vunpack.c.l.b16 %v500
    %v517 = vunpack.c.l.b16 %v501
    %v518 = vunpack.c.l.b16 %v502
    %v519 = vunpack.c.l.b16 %v503
    %v520 = vunpack.c.l.b16 %v504
    %v521 = vunpack.c.l.b16 %v505
    %v522 = vunpack.c.l.b16 %v506
    %v523 = vunpack.c.l.b16 %v507
    %v524 = vpack.c.b16 %v517, %v516
    %v525 = vpack.c.b16 %v519, %v518
    %v526 = vpack.c.b16 %v521, %v520
    %v527 = vpack.c.b16 %v523, %v522
    %v533 = vsel %vm98, %v494, 0
    %v536 = vsel %vm98, %v495, 0
    %v539 = vsel %vm98, %v496, 0
    %v542 = vsel %vm98, %v497, 0
    %v545 = vsel %vm98, %v498, 0
    %v548 = vsel %vm98, %v499, 0
    %550 = vmatprep.subr.bf16.mxu0 0
    %551 = vmatpush1.bf16.msra.mxu0 0
    %552 = vmatprep.subr.bf16.mxu0 0
    %553 = vmatpush1.bf16.msra.mxu0 0
    %554 = vmatprep.subr.bf16.mxu0 0
    %555 = vmatpush1.bf16.msra.mxu0 0
    %556 = vmatprep.subr.bf16.mxu0 0
    %557 = vmatpush1.bf16.msra.mxu0 0
    %558 = vmatprep.subr.bf16.mxu0 0
    %559 = vmatpush1.bf16.msra.mxu0 %v527
    %560 = vmatprep.subr.bf16.mxu0 0
    %561 = vmatpush1.bf16.msra.mxu0 %v526
    %562 = vmatprep.subr.bf16.mxu0 0
    %563 = vmatpush1.bf16.msra.mxu0 %v525
    %564 = vmatprep.subr.bf16.mxu0 0
    %565 = vmatpush1.bf16.msra.mxu0 %v524
    %566 = vmatprep.subr.bf16.mxu0 0
    %567 = vmatpush2.bf16.msra.mxu0 0
    %568 = vmatprep.subr.bf16.mxu0 0
    %569 = vmatpush2.bf16.msra.mxu0 0
    %570 = vmatprep.subr.bf16.mxu0 0
    %571 = vmatpush2.bf16.msra.mxu0 0
    %572 = vmatprep.subr.bf16.mxu0 0
    %573 = vmatpush2.bf16.msra.mxu0 0
    %574 = vmatprep.subr.bf16.mxu0 0
    %575 = vmatpush2.bf16.msra.mxu0 0
    %576 = vmatprep.subr.bf16.mxu0 0
    %577 = vmatpush2.bf16.msra.mxu0 0
    %578 = vmatprep.subr.bf16.mxu0 0
    %579 = vmatpush2.bf16.msra.mxu0 0
    %580 = vmatprep.subr.bf16.mxu0 0
    %581 = vmatpush2.bf16.msra.mxu0 0
    %582 = vmatprep.mubr.bf16.mxu0 0
    %583 = vmatmul.mubr.bf16.gmra.mxu0 %v533
    %v584 = vpop.f32.mrf.mxu0
    %v585 = vadd.f32 0.0, %v584
    %v586 = vpop.f32.mrf.mxu0
    %v587 = vpop.f32.mrf.mxu0
    %v588 = vadd.f32 0.0, %v587
    %v589 = vpop.f32.mrf.mxu0
    %590 = vmatprep.mubr.bf16.mxu0 0
    %591 = vmatmul.mubr.bf16.gmra.mxu0 %v536
    %v592 = vpop.f32.mrf.mxu0
    %v593 = vadd.f32 0.0, %v592
    %v594 = vpop.f32.mrf.mxu0
    %v595 = vpop.f32.mrf.mxu0
    %v596 = vadd.f32 0.0, %v595
    %v597 = vpop.f32.mrf.mxu0
    %598 = vmatprep.mubr.bf16.mxu0 0
    %599 = vmatmul.mubr.bf16.gmra.mxu0 %v539
    %v600 = vpop.f32.mrf.mxu0
    %v601 = vadd.f32 0.0, %v600
    %v602 = vpop.f32.mrf.mxu0
    %v603 = vpop.f32.mrf.mxu0
    %v604 = vadd.f32 0.0, %v603
    %v605 = vpop.f32.mrf.mxu0
    %606 = vmatprep.mubr.bf16.mxu0 0
    %607 = vmatmul.mubr.bf16.gmra.mxu0 %v542
    %v608 = vpop.f32.mrf.mxu0
    %v609 = vadd.f32 0.0, %v608
    %v610 = vpop.f32.mrf.mxu0
    %v611 = vpop.f32.mrf.mxu0
    %v612 = vadd.f32 0.0, %v611
    %v613 = vpop.f32.mrf.mxu0
    %614 = vmatprep.mubr.bf16.mxu0 0
    %615 = vmatmul.mubr.bf16.gmra.mxu0 %v545
    %v616 = vpop.f32.mrf.mxu0
    %v617 = vadd.f32 0.0, %v616
    %v618 = vpop.f32.mrf.mxu0
    %v619 = vpop.f32.mrf.mxu0
    %v620 = vadd.f32 0.0, %v619
    %v621 = vpop.f32.mrf.mxu0
    %622 = vmatprep.mubr.bf16.mxu0 0
    %623 = vmatmul.mubr.bf16.gmra.mxu0 %v548
    %v624 = vpop.f32.mrf.mxu0
    %v625 = vadd.f32 0.0, %v624
    %v626 = vpop.f32.mrf.mxu0
    %v627 = vpop.f32.mrf.mxu0
    %v628 = vpop.f32.mrf.mxu0
    %629 = vdwg.mxu0
    %v630 = vadd.f32 %v438, %v585
    %v631 = vadd.f32 %v441, %v588
    %v632 = vadd.f32 %v446, %v593
    %v633 = vadd.f32 %v449, %v596
    %v634 = vadd.f32 %v454, %v601
    %v635 = vadd.f32 %v457, %v604
    %v636 = vadd.f32 %v462, %v609
    %v637 = vadd.f32 %v465, %v612
    %v638 = vadd.f32 %v470, %v617
    %v639 = vadd.f32 %v473, %v620
    %v640 = vadd.f32 %v478, %v625
    %642 = vset.pattern.permute.xlu0 0
    %643 = vperm.xlu0 %642, %v155
    %v644 = vpop.permute.xlu0 %643
    %647 = vset.pattern.permute.xlu0 0
    %648 = vperm.xlu0 %647, %v156
    %v649 = vpop.permute.xlu0 %648
    %652 = vset.pattern.permute.xlu0 0
    %653 = vperm.xlu0 %652, %v157
    %v654 = vpop.permute.xlu0 %653
    %657 = vset.pattern.permute.xlu0 0
    %658 = vperm.xlu0 %657, %v158
    %v659 = vpop.permute.xlu0 %658
    %662 = vset.pattern.permute.xlu0 0
    %663 = vperm.xlu0 %662, %v159
    %v664 = vpop.permute.xlu0 %663
    %667 = vset.pattern.permute.xlu0 0
    %668 = vperm.xlu0 %667, %v160
    %v669 = vpop.permute.xlu0 %668
    %672 = vset.pattern.permute.xlu0 0
    %673 = vperm.xlu0 %672, %v161
    %v674 = vpop.permute.xlu0 %673
    %677 = vset.pattern.permute.xlu0 0
    %678 = vperm.xlu0 %677, %v162
    %v679 = vpop.permute.xlu0 %678
    %682 = vset.pattern.permute.xlu0 0
    %683 = vperm.xlu0 %682, %v163
    %v684 = vpop.permute.xlu0 %683
    %687 = vset.pattern.permute.xlu0 0
    %688 = vperm.xlu0 %687, %v164
    %v689 = vpop.permute.xlu0 %688
    %692 = vset.pattern.permute.xlu0 0
    %693 = vperm.xlu0 %692, %v165
    %v694 = vpop.permute.xlu0 %693
    %v696 = vmul.f32 %v630, %v644
    %v697 = vmul.f32 %v631, %v649
    %v698 = vmul.f32 %v632, %v654
    %v699 = vmul.f32 %v633, %v659
    %v700 = vmul.f32 %v634, %v664
    %v701 = vmul.f32 %v635, %v669
    %v702 = vmul.f32 %v636, %v674
    %v703 = vmul.f32 %v637, %v679
    %v704 = vmul.f32 %v638, %v684
    %v705 = vmul.f32 %v639, %v689
    %v706 = vmul.f32 %v640, %v694
    %v707 = vld [vmem:[%s7] sm:$0x1]
    %v708 = vld [vmem:[%s7 + $0x1] sm:$0x1]
    %v709 = vsel %vm178, 1, 0
    %v710 = vsel %vm179, 1, 0
    %v711 = vsel %vm180, 1, 0
    %v712 = vsel %vm181, 1, 0
    %v713 = vsel %vm182, 1, 0
    %v714 = vsel %vm183, 1, 0
    %v715 = vsel %vm184, 1, 0
    %v716 = vsel %vm185, 1, 0
    %v717 = vsel %vm186, 1, 0
    %v718 = vsel %vm187, 1, 0
    %v719 = vsel %vm188, 1, 0
    %vm720 = vcmp.eq.s32.totalorder %v709, 1
    %vm721 = vcmp.eq.s32.totalorder %v710, 1
    %vm722 = vcmp.eq.s32.totalorder %v711, 1
    %vm723 = vcmp.eq.s32.totalorder %v712, 1
    %vm724 = vcmp.eq.s32.totalorder %v713, 1
    %vm725 = vcmp.eq.s32.totalorder %v714, 1
    %vm726 = vcmp.eq.s32.totalorder %v715, 1
    %vm727 = vcmp.eq.s32.totalorder %v716, 1
    %vm728 = vcmp.eq.s32.totalorder %v717, 1
    %vm729 = vcmp.eq.s32.totalorder %v718, 1
    %vm730 = vcmp.eq.s32.totalorder %v719, 1
    %v731 = vlaneseq
    %v732 = vshrl.u32 %v731, 7
    %v733 = vsub.s32 0, %v732
    %v734 = vrot.slane %v707, %v733
    %v735 = vlaneseq
    %v736 = vshrl.u32 %v735, 7
    %v737 = vsub.s32 0, %v736
    %v738 = vrot.slane %v708, %v737
    %v739 = vsel %vm720, %v734, %v738
    %v740 = vsel %vm721, %v734, %v738
    %v741 = vsel %vm722, %v734, %v738
    %v742 = vsel %vm723, %v734, %v738
    %v743 = vsel %vm724, %v734, %v738
    %v744 = vsel %vm725, %v734, %v738
    %v745 = vsel %vm726, %v734, %v738
    %v746 = vsel %vm727, %v734, %v738
    %v747 = vsel %vm728, %v734, %v738
    %v748 = vsel %vm729, %v734, %v738
    %v749 = vsel %vm730, %v734, %v738
    %v750 = vmul.f32 %v696, %v739
    %v751 = vmul.f32 %v697, %v740
    %v752 = vmul.f32 %v698, %v741
    %v753 = vmul.f32 %v699, %v742
    %v754 = vmul.f32 %v700, %v743
    %v755 = vmul.f32 %v701, %v744
    %v756 = vmul.f32 %v702, %v745
    %v757 = vmul.f32 %v703, %v746
    %v758 = vmul.f32 %v704, %v747
    %v759 = vmul.f32 %v705, %v748
    %v760 = vmul.f32 %v706, %v749
    %v761 = vld [vmem:[%s8] sm:$0x1]
    %v762 = vld [vmem:[%s8 + $0x1] sm:$0x1]
    %v763 = vlaneseq
    %v764 = vshrl.u32 %v763, 7
    %v765 = vsub.s32 0, %v764
    %v766 = vrot.slane %v761, %v765
    %v767 = vlaneseq
    %v768 = vshrl.u32 %v767, 7
    %v769 = vsub.s32 0, %v768
    %v770 = vrot.slane %v762, %v769
    %v771 = vsel %vm720, %v766, %v770
    %v772 = vsel %vm721, %v766, %v770
    %v773 = vsel %vm722, %v766, %v770
    %v774 = vsel %vm723, %v766, %v770
    %v775 = vsel %vm724, %v766, %v770
    %v776 = vsel %vm725, %v766, %v770
    %v777 = vsel %vm726, %v766, %v770
    %v778 = vsel %vm727, %v766, %v770
    %v779 = vsel %vm728, %v766, %v770
    %v780 = vsel %vm729, %v766, %v770
    %v781 = vsel %vm730, %v766, %v770
    %v782 = vadd.f32 %v750, %v771
    %v783 = vadd.f32 %v751, %v772
    %v784 = vadd.f32 %v752, %v773
    %v785 = vadd.f32 %v753, %v774
    %v786 = vadd.f32 %v754, %v775
    %v787 = vadd.f32 %v755, %v776
    %v788 = vadd.f32 %v756, %v777
    %v789 = vadd.f32 %v757, %v778
    %v790 = vadd.f32 %v758, %v779
    %v791 = vadd.f32 %v759, %v780
    %v792 = vadd.f32 %v760, %v781
    %v793 = vmax.f32 %v782, 0.0
    %v794 = vmax.f32 %v783, 0.0
    %v795 = vmax.f32 %v784, 0.0
    %v796 = vmax.f32 %v785, 0.0
    %v797 = vmax.f32 %v786, 0.0
    %v798 = vmax.f32 %v787, 0.0
    %v799 = vmax.f32 %v788, 0.0
    %v800 = vmax.f32 %v789, 0.0
    %v801 = vmax.f32 %v790, 0.0
    %v802 = vmax.f32 %v791, 0.0
    %v803 = vmax.f32 %v792, 0.0
    %v804 = vmul.f32 %v793, %v644
    %v805 = vmul.f32 %v794, %v649
    %v806 = vmul.f32 %v795, %v654
    %v807 = vmul.f32 %v796, %v659
    %v808 = vmul.f32 %v797, %v664
    %v809 = vmul.f32 %v798, %v669
    %v810 = vmul.f32 %v799, %v674
    %v811 = vmul.f32 %v800, %v679
    %v812 = vmul.f32 %v801, %v684
    %v813 = vmul.f32 %v802, %v689
    %v814 = vmul.f32 %v803, %v694
    %815 = vst.msk [vmem:[#allocation2 + $0x8] sm:$0xff] %vm98, %v804
    %816 = vst.msk [vmem:[#allocation2 + $0x10] sm:$0xff] %vm98, %v805
    %817 = vst.msk [vmem:[#allocation2 + $0x18] sm:$0xff] %vm98, %v806
    %818 = vst.msk [vmem:[#allocation2 + $0x20] sm:$0xff] %vm98, %v807
    %819 = vst.msk [vmem:[#allocation2 + $0x28] sm:$0xff] %vm98, %v808
    %820 = vst.msk [vmem:[#allocation2 + $0x30] sm:$0xff] %vm98, %v809
    %821 = vst.msk [vmem:[#allocation2 + $0x38] sm:$0xff] %vm98, %v810
    %822 = vst.msk [vmem:[#allocation2 + $0x40] sm:$0xff] %vm98, %v811
    %823 = vst.msk [vmem:[#allocation2 + $0x48] sm:$0xff] %vm98, %v812
    %824 = vst.msk [vmem:[#allocation2 + $0x50] sm:$0xff] %vm98, %v813
    %825 = vst.msk [vmem:[#allocation2 + $0x58] sm:$0xff] %vm98, %v814
    %v826 = vld [vmem:[#allocation2 + $0x6] sm:$0xff]
    %v827 = vld [vmem:[#allocation2 + $0xe] sm:$0xff]
    %v828 = vld [vmem:[#allocation2 + $0x16] sm:$0xff]
    %v829 = vld [vmem:[#allocation2 + $0x1e] sm:$0xff]
    %v830 = vld [vmem:[#allocation2 + $0x26] sm:$0xff]
    %v831 = vld [vmem:[#allocation2 + $0x2e] sm:$0xff]
    %v832 = vld [vmem:[#allocation2 + $0x36] sm:$0xff]
    %v833 = vld [vmem:[#allocation2 + $0x3e] sm:$0xff]
    %v834 = vld [vmem:[#allocation2 + $0x46] sm:$0xff]
    %v835 = vld [vmem:[#allocation2 + $0x4e] sm:$0xff]
    %v836 = vld [vmem:[#allocation2 + $0x56] sm:$0xff]
    %v837 = vpack.c.bf16 %v827, %v826
    %v838 = vpack.c.bf16 %v829, %v828
    %v839 = vpack.c.bf16 %v831, %v830
    %v840 = vpack.c.bf16 %v833, %v832
    %v841 = vpack.c.bf16 %v835, %v834
    %v842 = vpack.c.bf16 %v836, %v836
    %v843 = vld [vmem:[%s5] sm:$0xf]
    %v844 = vld [vmem:[%s5 + $0x4] sm:$0xf]
    %v845 = vld [vmem:[%s5 + $0x8] sm:$0xf]
    %v846 = vld [vmem:[%s5 + $0xc] sm:$0xf]
    %v847 = vld [vmem:[%s5 + $0x10] sm:$0xf]
    %v848 = vld [vmem:[%s5 + $0x14] sm:$0xf]
    %v849 = vld [vmem:[%s5 + $0x18] sm:$0xf]
    %v850 = vld [vmem:[%s5 + $0x1c] sm:$0xf]
    %v851 = vld [vmem:[#allocation2 + $0x8] sm:$0xff]
    %v852 = vld [vmem:[#allocation2 + $0x10] sm:$0xff]
    %v853 = vld [vmem:[#allocation2 + $0x18] sm:$0xff]
    %v854 = vld [vmem:[#allocation2 + $0x20] sm:$0xff]
    %v855 = vld [vmem:[#allocation2 + $0x28] sm:$0xff]
    %v856 = vld [vmem:[#allocation2 + $0x30] sm:$0xff]
    %v857 = vld [vmem:[#allocation2 + $0x38] sm:$0xff]
    %v858 = vld [vmem:[#allocation2 + $0x40] sm:$0xff]
    %v859 = vld [vmem:[#allocation2 + $0x48] sm:$0xff]
    %v860 = vld [vmem:[#allocation2 + $0x50] sm:$0xff]
    %v861 = vld [vmem:[#allocation2 + $0x58] sm:$0xff]
    %v862 = vpack.c.bf16 %v852, %v851
    %v863 = vpack.c.bf16 %v854, %v853
    %v864 = vpack.c.bf16 %v856, %v855
    %v865 = vpack.c.bf16 %v858, %v857
    %v866 = vpack.c.bf16 %v860, %v859
    %v867 = vpack.c.bf16 %v861, %v861
    %v868 = vld [vmem:[%s5 + $0x20] sm:$0xf]
    %v869 = vld [vmem:[%s5 + $0x24] sm:$0xf]
    %v870 = vld [vmem:[%s5 + $0x28] sm:$0xf]
    %v871 = vld [vmem:[%s5 + $0x2c] sm:$0xf]
    %v872 = vld [vmem:[%s5 + $0x30] sm:$0xf]
    %v873 = vld [vmem:[%s5 + $0x34] sm:$0xf]
    %v874 = vld [vmem:[%s5 + $0x38] sm:$0xf]
    %v875 = vld [vmem:[%s5 + $0x3c] sm:$0xf]
    %v884 = vunpack.c.l.b16 %v868
    %v885 = vunpack.c.l.b16 %v869
    %v886 = vunpack.c.l.b16 %v870
    %v887 = vunpack.c.l.b16 %v871
    %v888 = vunpack.c.l.b16 %v872
    %v889 = vunpack.c.l.b16 %v873
    %v890 = vunpack.c.l.b16 %v874
    %v891 = vunpack.c.l.b16 %v875
    %v892 = vpack.c.b16 %v885, %v884
    %v893 = vpack.c.b16 %v887, %v886
    %v894 = vpack.c.b16 %v889, %v888
    %v895 = vpack.c.b16 %v891, %v890
    %v901 = vsel %vm98, %v862, 0
    %v904 = vsel %vm98, %v863, 0
    %v907 = vsel %vm98, %v864, 0
    %v910 = vsel %vm98, %v865, 0
    %v913 = vsel %vm98, %v866, 0
    %v916 = vsel %vm98, %v867, 0
    %918 = vmatprep.subr.bf16.mxu0 0
    %919 = vmatpush1.bf16.msra.mxu0 0
    %920 = vmatprep.subr.bf16.mxu0 0
    %921 = vmatpush1.bf16.msra.mxu0 0
    %922 = vmatprep.subr.bf16.mxu0 0
    %923 = vmatpush1.bf16.msra.mxu0 0
    %924 = vmatprep.subr.bf16.mxu0 0
    %925 = vmatpush1.bf16.msra.mxu0 0
    %926 = vmatprep.subr.bf16.mxu0 0
    %927 = vmatpush1.bf16.msra.mxu0 %v895
    %928 = vmatprep.subr.bf16.mxu0 0
    %929 = vmatpush1.bf16.msra.mxu0 %v894
    %930 = vmatprep.subr.bf16.mxu0 0
    %931 = vmatpush1.bf16.msra.mxu0 %v893
    %932 = vmatprep.subr.bf16.mxu0 0
    %933 = vmatpush1.bf16.msra.mxu0 %v892
    %934 = vmatprep.subr.bf16.mxu0 0
    %935 = vmatpush2.bf16.msra.mxu0 0
    %936 = vmatprep.subr.bf16.mxu0 0
    %937 = vmatpush2.bf16.msra.mxu0 0
    %938 = vmatprep.subr.bf16.mxu0 0
    %939 = vmatpush2.bf16.msra.mxu0 0
    %940 = vmatprep.subr.bf16.mxu0 0
    %941 = vmatpush2.bf16.msra.mxu0 0
    %942 = vmatprep.subr.bf16.mxu0 0
    %943 = vmatpush2.bf16.msra.mxu0 0
    %944 = vmatprep.subr.bf16.mxu0 0
    %945 = vmatpush2.bf16.msra.mxu0 0
    %946 = vmatprep.subr.bf16.mxu0 0
    %947 = vmatpush2.bf16.msra.mxu0 0
    %948 = vmatprep.subr.bf16.mxu0 0
    %949 = vmatpush2.bf16.msra.mxu0 0
    %950 = vmatprep.mubr.bf16.mxu0 0
    %951 = vmatmul.mubr.bf16.gmra.mxu0 %v901
    %v952 = vpop.f32.mrf.mxu0
    %v953 = vadd.f32 0.0, %v952
    %v954 = vpop.f32.mrf.mxu0
    %v955 = vpop.f32.mrf.mxu0
    %v956 = vadd.f32 0.0, %v955
    %v957 = vpop.f32.mrf.mxu0
    %958 = vmatprep.mubr.bf16.mxu0 0
    %959 = vmatmul.mubr.bf16.gmra.mxu0 %v904
    %v960 = vpop.f32.mrf.mxu0
    %v961 = vadd.f32 0.0, %v960
    %v962 = vpop.f32.mrf.mxu0
    %v963 = vpop.f32.mrf.mxu0
    %v964 = vadd.f32 0.0, %v963
    %v965 = vpop.f32.mrf.mxu0
    %966 = vmatprep.mubr.bf16.mxu0 0
    %967 = vmatmul.mubr.bf16.gmra.mxu0 %v907
    %v968 = vpop.f32.mrf.mxu0
    %v969 = vadd.f32 0.0, %v968
    %v970 = vpop.f32.mrf.mxu0
    %v971 = vpop.f32.mrf.mxu0
    %v972 = vadd.f32 0.0, %v971
    %v973 = vpop.f32.mrf.mxu0
    %974 = vmatprep.mubr.bf16.mxu0 0
    %975 = vmatmul.mubr.bf16.gmra.mxu0 %v910
    %v976 = vpop.f32.mrf.mxu0
    %v977 = vadd.f32 0.0, %v976
    %v978 = vpop.f32.mrf.mxu0
    %v979 = vpop.f32.mrf.mxu0
    %v980 = vadd.f32 0.0, %v979
    %v981 = vpop.f32.mrf.mxu0
    %982 = vmatprep.mubr.bf16.mxu0 0
    %983 = vmatmul.mubr.bf16.gmra.mxu0 %v913
    %v984 = vpop.f32.mrf.mxu0
    %v985 = vadd.f32 0.0, %v984
    %v986 = vpop.f32.mrf.mxu0
    %v987 = vpop.f32.mrf.mxu0
    %v988 = vadd.f32 0.0, %v987
    %v989 = vpop.f32.mrf.mxu0
    %990 = vmatprep.mubr.bf16.mxu0 0
    %991 = vmatmul.mubr.bf16.gmra.mxu0 %v916
    %v992 = vpop.f32.mrf.mxu0
    %v993 = vadd.f32 0.0, %v992
    %v994 = vpop.f32.mrf.mxu0
    %v995 = vpop.f32.mrf.mxu0
    %v996 = vpop.f32.mrf.mxu0
    %997 = vdwg.mxu0
    %v1006 = vunpack.c.l.b16 %v843
    %v1007 = vunpack.c.l.b16 %v844
    %v1008 = vunpack.c.l.b16 %v845
    %v1009 = vunpack.c.l.b16 %v846
    %v1010 = vunpack.c.l.b16 %v847
    %v1011 = vunpack.c.l.b16 %v848
    %v1012 = vunpack.c.l.b16 %v849
    %v1013 = vunpack.c.l.b16 %v850
    %v1014 = vpack.c.b16 %v1007, %v1006
    %v1015 = vpack.c.b16 %v1009, %v1008
    %v1016 = vpack.c.b16 %v1011, %v1010
    %v1017 = vpack.c.b16 %v1013, %v1012
    %v1023 = vsel %vm98, %v837, 0
    %v1026 = vsel %vm98, %v838, 0
    %v1029 = vsel %vm98, %v839, 0
    %v1032 = vsel %vm98, %v840, 0
    %v1035 = vsel %vm98, %v841, 0
    %v1038 = vsel %vm98, %v842, 0
    %1040 = vmatprep.subr.bf16.mxu0 0
    %1041 = vmatpush1.bf16.msra.mxu0 0
    %1042 = vmatprep.subr.bf16.mxu0 0
    %1043 = vmatpush1.bf16.msra.mxu0 0
    %1044 = vmatprep.subr.bf16.mxu0 0
    %1045 = vmatpush1.bf16.msra.mxu0 0
    %1046 = vmatprep.subr.bf16.mxu0 0
    %1047 = vmatpush1.bf16.msra.mxu0 0
    %1048 = vmatprep.subr.bf16.mxu0 0
    %1049 = vmatpush1.bf16.msra.mxu0 %v1017
    %1050 = vmatprep.subr.bf16.mxu0 0
    %1051 = vmatpush1.bf16.msra.mxu0 %v1016
    %1052 = vmatprep.subr.bf16.mxu0 0
    %1053 = vmatpush1.bf16.msra.mxu0 %v1015
    %1054 = vmatprep.subr.bf16.mxu0 0
    %1055 = vmatpush1.bf16.msra.mxu0 %v1014
    %1056 = vmatprep.subr.bf16.mxu0 0
    %1057 = vmatpush2.bf16.msra.mxu0 0
    %1058 = vmatprep.subr.bf16.mxu0 0
    %1059 = vmatpush2.bf16.msra.mxu0 0
    %1060 = vmatprep.subr.bf16.mxu0 0
    %1061 = vmatpush2.bf16.msra.mxu0 0
    %1062 = vmatprep.subr.bf16.mxu0 0
    %1063 = vmatpush2.bf16.msra.mxu0 0
    %1064 = vmatprep.subr.bf16.mxu0 0
    %1065 = vmatpush2.bf16.msra.mxu0 0
    %1066 = vmatprep.subr.bf16.mxu0 0
    %1067 = vmatpush2.bf16.msra.mxu0 0
    %1068 = vmatprep.subr.bf16.mxu0 0
    %1069 = vmatpush2.bf16.msra.mxu0 0
    %1070 = vmatprep.subr.bf16.mxu0 0
    %1071 = vmatpush2.bf16.msra.mxu0 0
    %1072 = vmatprep.mubr.bf16.mxu0 0
    %1073 = vmatmul.mubr.bf16.gmra.mxu0 %v1023
    %v1074 = vpop.f32.mrf.mxu0
    %v1075 = vadd.f32 %v953, %v1074
    %v1076 = vpop.f32.mrf.mxu0
    %v1077 = vpop.f32.mrf.mxu0
    %v1078 = vadd.f32 %v956, %v1077
    %v1079 = vpop.f32.mrf.mxu0
    %1080 = vmatprep.mubr.bf16.mxu0 0
    %1081 = vmatmul.mubr.bf16.gmra.mxu0 %v1026
    %v1082 = vpop.f32.mrf.mxu0
    %v1083 = vadd.f32 %v961, %v1082
    %v1084 = vpop.f32.mrf.mxu0
    %v1085 = vpop.f32.mrf.mxu0
    %v1086 = vadd.f32 %v964, %v1085
    %v1087 = vpop.f32.mrf.mxu0
    %1088 = vmatprep.mubr.bf16.mxu0 0
    %1089 = vmatmul.mubr.bf16.gmra.mxu0 %v1029
    %v1090 = vpop.f32.mrf.mxu0
    %v1091 = vadd.f32 %v969, %v1090
    %v1092 = vpop.f32.mrf.mxu0
    %v1093 = vpop.f32.mrf.mxu0
    %v1094 = vadd.f32 %v972, %v1093
    %v1095 = vpop.f32.mrf.mxu0
    %1096 = vmatprep.mubr.bf16.mxu0 0
    %1097 = vmatmul.mubr.bf16.gmra.mxu0 %v1032
    %v1098 = vpop.f32.mrf.mxu0
    %v1099 = vadd.f32 %v977, %v1098
    %v1100 = vpop.f32.mrf.mxu0
    %v1101 = vpop.f32.mrf.mxu0
    %v1102 = vadd.f32 %v980, %v1101
    %v1103 = vpop.f32.mrf.mxu0
    %1104 = vmatprep.mubr.bf16.mxu0 0
    %1105 = vmatmul.mubr.bf16.gmra.mxu0 %v1035
    %v1106 = vpop.f32.mrf.mxu0
    %v1107 = vadd.f32 %v985, %v1106
    %v1108 = vpop.f32.mrf.mxu0
    %v1109 = vpop.f32.mrf.mxu0
    %v1110 = vadd.f32 %v988, %v1109
    %v1111 = vpop.f32.mrf.mxu0
    %1112 = vmatprep.mubr.bf16.mxu0 0
    %1113 = vmatmul.mubr.bf16.gmra.mxu0 %v1038
    %v1114 = vpop.f32.mrf.mxu0
    %v1115 = vadd.f32 %v993, %v1114
    %v1116 = vpop.f32.mrf.mxu0
    %v1117 = vpop.f32.mrf.mxu0
    %v1118 = vpop.f32.mrf.mxu0
    %1119 = vdwg.mxu0
    %v1120 = vld [vmem:[#allocation2 + $0xa] sm:$0xff]
    %v1121 = vld [vmem:[#allocation2 + $0x12] sm:$0xff]
    %v1122 = vld [vmem:[#allocation2 + $0x1a] sm:$0xff]
    %v1123 = vld [vmem:[#allocation2 + $0x22] sm:$0xff]
    %v1124 = vld [vmem:[#allocation2 + $0x2a] sm:$0xff]
    %v1125 = vld [vmem:[#allocation2 + $0x32] sm:$0xff]
    %v1126 = vld [vmem:[#allocation2 + $0x3a] sm:$0xff]
    %v1127 = vld [vmem:[#allocation2 + $0x42] sm:$0xff]
    %v1128 = vld [vmem:[#allocation2 + $0x4a] sm:$0xff]
    %v1129 = vld [vmem:[#allocation2 + $0x52] sm:$0xff]
    %v1130 = vld [vmem:[#allocation2 + $0x5a] sm:$0xff]
    %v1131 = vpack.c.bf16 %v1121, %v1120
    %v1132 = vpack.c.bf16 %v1123, %v1122
    %v1133 = vpack.c.bf16 %v1125, %v1124
    %v1134 = vpack.c.bf16 %v1127, %v1126
    %v1135 = vpack.c.bf16 %v1129, %v1128
    %v1136 = vpack.c.bf16 %v1130, %v1130
    %v1137 = vld [vmem:[%s5 + $0x40] sm:$0xf]
    %v1138 = vld [vmem:[%s5 + $0x44] sm:$0xf]
    %v1139 = vld [vmem:[%s5 + $0x48] sm:$0xf]
    %v1140 = vld [vmem:[%s5 + $0x4c] sm:$0xf]
    %v1141 = vld [vmem:[%s5 + $0x50] sm:$0xf]
    %v1142 = vld [vmem:[%s5 + $0x54] sm:$0xf]
    %v1143 = vld [vmem:[%s5 + $0x58] sm:$0xf]
    %v1144 = vld [vmem:[%s5 + $0x5c] sm:$0xf]
    %v1153 = vunpack.c.l.b16 %v1137
    %v1154 = vunpack.c.l.b16 %v1138
    %v1155 = vunpack.c.l.b16 %v1139
    %v1156 = vunpack.c.l.b16 %v1140
    %v1157 = vunpack.c.l.b16 %v1141
    %v1158 = vunpack.c.l.b16 %v1142
    %v1159 = vunpack.c.l.b16 %v1143
    %v1160 = vunpack.c.l.b16 %v1144
    %v1161 = vpack.c.b16 %v1154, %v1153
    %v1162 = vpack.c.b16 %v1156, %v1155
    %v1163 = vpack.c.b16 %v1158, %v1157
    %v1164 = vpack.c.b16 %v1160, %v1159
    %v1170 = vsel %vm98, %v1131, 0
    %v1173 = vsel %vm98, %v1132, 0
    %v1176 = vsel %vm98, %v1133, 0
    %v1179 = vsel %vm98, %v1134, 0
    %v1182 = vsel %vm98, %v1135, 0
    %v1185 = vsel %vm98, %v1136, 0
    %1187 = vmatprep.subr.bf16.mxu0 0
    %1188 = vmatpush1.bf16.msra.mxu0 0
    %1189 = vmatprep.subr.bf16.mxu0 0
    %1190 = vmatpush1.bf16.msra.mxu0 0
    %1191 = vmatprep.subr.bf16.mxu0 0
    %1192 = vmatpush1.bf16.msra.mxu0 0
    %1193 = vmatprep.subr.bf16.mxu0 0
    %1194 = vmatpush1.bf16.msra.mxu0 0
    %1195 = vmatprep.subr.bf16.mxu0 0
    %1196 = vmatpush1.bf16.msra.mxu0 %v1164
    %1197 = vmatprep.subr.bf16.mxu0 0
    %1198 = vmatpush1.bf16.msra.mxu0 %v1163
    %1199 = vmatprep.subr.bf16.mxu0 0
    %1200 = vmatpush1.bf16.msra.mxu0 %v1162
    %1201 = vmatprep.subr.bf16.mxu0 0
    %1202 = vmatpush1.bf16.msra.mxu0 %v1161
    %1203 = vmatprep.subr.bf16.mxu0 0
    %1204 = vmatpush2.bf16.msra.mxu0 0
    %1205 = vmatprep.subr.bf16.mxu0 0
    %1206 = vmatpush2.bf16.msra.mxu0 0
    %1207 = vmatprep.subr.bf16.mxu0 0
    %1208 = vmatpush2.bf16.msra.mxu0 0
    %1209 = vmatprep.subr.bf16.mxu0 0
    %1210 = vmatpush2.bf16.msra.mxu0 0
    %1211 = vmatprep.subr.bf16.mxu0 0
    %1212 = vmatpush2.bf16.msra.mxu0 0
    %1213 = vmatprep.subr.bf16.mxu0 0
    %1214 = vmatpush2.bf16.msra.mxu0 0
    %1215 = vmatprep.subr.bf16.mxu0 0
    %1216 = vmatpush2.bf16.msra.mxu0 0
    %1217 = vmatprep.subr.bf16.mxu0 0
    %1218 = vmatpush2.bf16.msra.mxu0 0
    %1219 = vmatprep.mubr.bf16.mxu0 0
    %1220 = vmatmul.mubr.bf16.gmra.mxu0 %v1170
    %v1221 = vpop.f32.mrf.mxu0
    %v1222 = vadd.f32 0.0, %v1221
    %v1223 = vpop.f32.mrf.mxu0
    %v1224 = vpop.f32.mrf.mxu0
    %v1225 = vadd.f32 0.0, %v1224
    %v1226 = vpop.f32.mrf.mxu0
    %1227 = vmatprep.mubr.bf16.mxu0 0
    %1228 = vmatmul.mubr.bf16.gmra.mxu0 %v1173
    %v1229 = vpop.f32.mrf.mxu0
    %v1230 = vadd.f32 0.0, %v1229
    %v1231 = vpop.f32.mrf.mxu0
    %v1232 = vpop.f32.mrf.mxu0
    %v1233 = vadd.f32 0.0, %v1232
    %v1234 = vpop.f32.mrf.mxu0
    %1235 = vmatprep.mubr.bf16.mxu0 0
    %1236 = vmatmul.mubr.bf16.gmra.mxu0 %v1176
    %v1237 = vpop.f32.mrf.mxu0
    %v1238 = vadd.f32 0.0, %v1237
    %v1239 = vpop.f32.mrf.mxu0
    %v1240 = vpop.f32.mrf.mxu0
    %v1241 = vadd.f32 0.0, %v1240
    %v1242 = vpop.f32.mrf.mxu0
    %1243 = vmatprep.mubr.bf16.mxu0 0
    %1244 = vmatmul.mubr.bf16.gmra.mxu0 %v1179
    %v1245 = vpop.f32.mrf.mxu0
    %v1246 = vadd.f32 0.0, %v1245
    %v1247 = vpop.f32.mrf.mxu0
    %v1248 = vpop.f32.mrf.mxu0
    %v1249 = vadd.f32 0.0, %v1248
    %v1250 = vpop.f32.mrf.mxu0
    %1251 = vmatprep.mubr.bf16.mxu0 0
    %1252 = vmatmul.mubr.bf16.gmra.mxu0 %v1182
    %v1253 = vpop.f32.mrf.mxu0
    %v1254 = vadd.f32 0.0, %v1253
    %v1255 = vpop.f32.mrf.mxu0
    %v1256 = vpop.f32.mrf.mxu0
    %v1257 = vadd.f32 0.0, %v1256
    %v1258 = vpop.f32.mrf.mxu0
    %1259 = vmatprep.mubr.bf16.mxu0 0
    %1260 = vmatmul.mubr.bf16.gmra.mxu0 %v1185
    %v1261 = vpop.f32.mrf.mxu0
    %v1262 = vadd.f32 0.0, %v1261
    %v1263 = vpop.f32.mrf.mxu0
    %v1264 = vpop.f32.mrf.mxu0
    %v1265 = vpop.f32.mrf.mxu0
    %1266 = vdwg.mxu0
    %v1267 = vadd.f32 %v1075, %v1222
    %v1268 = vadd.f32 %v1078, %v1225
    %v1269 = vadd.f32 %v1083, %v1230
    %v1270 = vadd.f32 %v1086, %v1233
    %v1271 = vadd.f32 %v1091, %v1238
    %v1272 = vadd.f32 %v1094, %v1241
    %v1273 = vadd.f32 %v1099, %v1246
    %v1274 = vadd.f32 %v1102, %v1249
    %v1275 = vadd.f32 %v1107, %v1254
    %v1276 = vadd.f32 %v1110, %v1257
    %v1277 = vadd.f32 %v1115, %v1262
    %v1278 = vmul.f32 %v1267, %v644
    %v1279 = vmul.f32 %v1268, %v649
    %v1280 = vmul.f32 %v1269, %v654
    %v1281 = vmul.f32 %v1270, %v659
    %v1282 = vmul.f32 %v1271, %v664
    %v1283 = vmul.f32 %v1272, %v669
    %v1284 = vmul.f32 %v1273, %v674
    %v1285 = vmul.f32 %v1274, %v679
    %v1286 = vmul.f32 %v1275, %v684
    %v1287 = vmul.f32 %v1276, %v689
    %v1288 = vmul.f32 %v1277, %v694
    %v1289 = vld [vmem:[%s9] sm:$0x1]
    %v1290 = vld [vmem:[%s9 + $0x1] sm:$0x1]
    %v1291 = vlaneseq
    %v1292 = vshrl.u32 %v1291, 7
    %v1293 = vsub.s32 0, %v1292
    %v1294 = vrot.slane %v1289, %v1293
    %v1295 = vlaneseq
    %v1296 = vshrl.u32 %v1295, 7
    %v1297 = vsub.s32 0, %v1296
    %v1298 = vrot.slane %v1290, %v1297
    %v1299 = vsel %vm720, %v1294, %v1298
    %v1300 = vsel %vm721, %v1294, %v1298
    %v1301 = vsel %vm722, %v1294, %v1298
    %v1302 = vsel %vm723, %v1294, %v1298
    %v1303 = vsel %vm724, %v1294, %v1298
    %v1304 = vsel %vm725, %v1294, %v1298
    %v1305 = vsel %vm726, %v1294, %v1298
    %v1306 = vsel %vm727, %v1294, %v1298
    %v1307 = vsel %vm728, %v1294, %v1298
    %v1308 = vsel %vm729, %v1294, %v1298
    %v1309 = vsel %vm730, %v1294, %v1298
    %v1310 = vmul.f32 %v1278, %v1299
    %v1311 = vmul.f32 %v1279, %v1300
    %v1312 = vmul.f32 %v1280, %v1301
    %v1313 = vmul.f32 %v1281, %v1302
    %v1314 = vmul.f32 %v1282, %v1303
    %v1315 = vmul.f32 %v1283, %v1304
    %v1316 = vmul.f32 %v1284, %v1305
    %v1317 = vmul.f32 %v1285, %v1306
    %v1318 = vmul.f32 %v1286, %v1307
    %v1319 = vmul.f32 %v1287, %v1308
    %v1320 = vmul.f32 %v1288, %v1309
    %v1321 = vld [vmem:[%s10] sm:$0x1]
    %v1322 = vld [vmem:[%s10 + $0x1] sm:$0x1]
    %v1323 = vlaneseq
    %v1324 = vshrl.u32 %v1323, 7
    %v1325 = vsub.s32 0, %v1324
    %v1326 = vrot.slane %v1321, %v1325
    %v1327 = vlaneseq
    %v1328 = vshrl.u32 %v1327, 7
    %v1329 = vsub.s32 0, %v1328
    %v1330 = vrot.slane %v1322, %v1329
    %v1331 = vsel %vm720, %v1326, %v1330
    %v1332 = vsel %vm721, %v1326, %v1330
    %v1333 = vsel %vm722, %v1326, %v1330
    %v1334 = vsel %vm723, %v1326, %v1330
    %v1335 = vsel %vm724, %v1326, %v1330
    %v1336 = vsel %vm725, %v1326, %v1330
    %v1337 = vsel %vm726, %v1326, %v1330
    %v1338 = vsel %vm727, %v1326, %v1330
    %v1339 = vsel %vm728, %v1326, %v1330
    %v1340 = vsel %vm729, %v1326, %v1330
    %v1341 = vsel %vm730, %v1326, %v1330
    %v1342 = vadd.f32 %v1310, %v1331
    %v1343 = vadd.f32 %v1311, %v1332
    %v1344 = vadd.f32 %v1312, %v1333
    %v1345 = vadd.f32 %v1313, %v1334
    %v1346 = vadd.f32 %v1314, %v1335
    %v1347 = vadd.f32 %v1315, %v1336
    %v1348 = vadd.f32 %v1316, %v1337
    %v1349 = vadd.f32 %v1317, %v1338
    %v1350 = vadd.f32 %v1318, %v1339
    %v1351 = vadd.f32 %v1319, %v1340
    %v1352 = vadd.f32 %v1320, %v1341
    %v1353 = vmax.f32 %v1342, 0.0
    %v1354 = vmax.f32 %v1343, 0.0
    %v1355 = vmax.f32 %v1344, 0.0
    %v1356 = vmax.f32 %v1345, 0.0
    %v1357 = vmax.f32 %v1346, 0.0
    %v1358 = vmax.f32 %v1347, 0.0
    %v1359 = vmax.f32 %v1348, 0.0
    %v1360 = vmax.f32 %v1349, 0.0
    %v1361 = vmax.f32 %v1350, 0.0
    %v1362 = vmax.f32 %v1351, 0.0
    %v1363 = vmax.f32 %v1352, 0.0
    %v1364 = vmul.f32 %v1353, %v644
    %v1365 = vmul.f32 %v1354, %v649
    %v1366 = vmul.f32 %v1355, %v654
    %v1367 = vmul.f32 %v1356, %v659
    %v1368 = vmul.f32 %v1357, %v664
    %v1369 = vmul.f32 %v1358, %v669
    %v1370 = vmul.f32 %v1359, %v674
    %v1371 = vmul.f32 %v1360, %v679
    %v1372 = vmul.f32 %v1361, %v684
    %v1373 = vmul.f32 %v1362, %v689
    %v1374 = vmul.f32 %v1363, %v694
    %1375 = vst [vmem:[#allocation2 + $0x8] sm:$0xff] %v1364
    %1376 = vst [vmem:[#allocation2 + $0x10] sm:$0xff] %v1365
    %1377 = vst [vmem:[#allocation2 + $0x18] sm:$0xff] %v1366
    %1378 = vst [vmem:[#allocation2 + $0x20] sm:$0xff] %v1367
    %1379 = vst [vmem:[#allocation2 + $0x28] sm:$0xff] %v1368
    %1380 = vst [vmem:[#allocation2 + $0x30] sm:$0xff] %v1369
    %1381 = vst [vmem:[#allocation2 + $0x38] sm:$0xff] %v1370
    %1382 = vst [vmem:[#allocation2 + $0x40] sm:$0xff] %v1371
    %1383 = vst [vmem:[#allocation2 + $0x48] sm:$0xff] %v1372
    %1384 = vst [vmem:[#allocation2 + $0x50] sm:$0xff] %v1373
    %1385 = vst [vmem:[#allocation2 + $0x58] sm:$0xff] %v1374
    %v1386 = vld [vmem:[#allocation2 + $0x4] sm:$0xff]
    %v1387 = vld [vmem:[#allocation2 + $0xc] sm:$0xff]
    %v1388 = vld [vmem:[#allocation2 + $0x14] sm:$0xff]
    %v1389 = vld [vmem:[#allocation2 + $0x1c] sm:$0xff]
    %v1390 = vld [vmem:[#allocation2 + $0x24] sm:$0xff]
    %v1391 = vld [vmem:[#allocation2 + $0x2c] sm:$0xff]
    %v1392 = vld [vmem:[#allocation2 + $0x34] sm:$0xff]
    %v1393 = vld [vmem:[#allocation2 + $0x3c] sm:$0xff]
    %v1394 = vld [vmem:[#allocation2 + $0x44] sm:$0xff]
    %v1395 = vld [vmem:[#allocation2 + $0x4c] sm:$0xff]
    %v1396 = vld [vmem:[#allocation2 + $0x54] sm:$0xff]
    %v1397 = vpack.c.bf16 %v1387, %v1386
    %v1398 = vpack.c.bf16 %v1389, %v1388
    %v1399 = vpack.c.bf16 %v1391, %v1390
    %v1400 = vpack.c.bf16 %v1393, %v1392
    %v1401 = vpack.c.bf16 %v1395, %v1394
    %v1402 = vpack.c.bf16 %v1396, %v1396
    %v1403 = vld [vmem:[%s6] sm:$0xff]
    %v1404 = vld [vmem:[%s6 + $0x8] sm:$0xff]
    %v1405 = vld [vmem:[%s6 + $0x10] sm:$0xff]
    %v1406 = vld [vmem:[%s6 + $0x18] sm:$0xff]
    %v1407 = vld [vmem:[%s6 + $0x20] sm:$0xff]
    %v1408 = vld [vmem:[%s6 + $0x28] sm:$0xff]
    %v1409 = vld [vmem:[%s6 + $0x30] sm:$0xff]
    %v1410 = vld [vmem:[%s6 + $0x38] sm:$0xff]
    %v1411 = vld [vmem:[%s6 + $0x40] sm:$0xff]
    %v1412 = vld [vmem:[%s6 + $0x48] sm:$0xff]
    %v1413 = vld [vmem:[%s6 + $0x50] sm:$0xff]
    %v1414 = vld [vmem:[%s6 + $0x58] sm:$0xff]
    %v1415 = vld [vmem:[%s6 + $0x60] sm:$0xff]
    %v1416 = vld [vmem:[%s6 + $0x68] sm:$0xff]
    %v1417 = vld [vmem:[%s6 + $0x70] sm:$0xff]
    %v1418 = vld [vmem:[%s6 + $0x78] sm:$0xff]
    %v1419 = vld [vmem:[#allocation2 + $0x8] sm:$0xff]
    %v1420 = vld [vmem:[#allocation2 + $0x10] sm:$0xff]
    %v1421 = vld [vmem:[#allocation2 + $0x18] sm:$0xff]
    %v1422 = vld [vmem:[#allocation2 + $0x20] sm:$0xff]
    %v1423 = vld [vmem:[#allocation2 + $0x28] sm:$0xff]
    %v1424 = vld [vmem:[#allocation2 + $0x30] sm:$0xff]
    %v1425 = vld [vmem:[#allocation2 + $0x38] sm:$0xff]
    %v1426 = vld [vmem:[#allocation2 + $0x40] sm:$0xff]
    %v1427 = vld [vmem:[#allocation2 + $0x48] sm:$0xff]
    %v1428 = vld [vmem:[#allocation2 + $0x50] sm:$0xff]
    %v1429 = vld [vmem:[#allocation2 + $0x58] sm:$0xff]
    %v1430 = vpack.c.bf16 %v1420, %v1419
    %v1431 = vpack.c.bf16 %v1422, %v1421
    %v1432 = vpack.c.bf16 %v1424, %v1423
    %v1433 = vpack.c.bf16 %v1426, %v1425
    %v1434 = vpack.c.bf16 %v1428, %v1427
    %v1435 = vpack.c.bf16 %v1429, %v1429
    %v1436 = vld [vmem:[%s6 + $0x80] sm:$0xff]
    %v1437 = vld [vmem:[%s6 + $0x88] sm:$0xff]
    %v1438 = vld [vmem:[%s6 + $0x90] sm:$0xff]
    %v1439 = vld [vmem:[%s6 + $0x98] sm:$0xff]
    %v1440 = vld [vmem:[%s6 + $0xa0] sm:$0xff]
    %v1441 = vld [vmem:[%s6 + $0xa8] sm:$0xff]
    %v1442 = vld [vmem:[%s6 + $0xb0] sm:$0xff]
    %v1443 = vld [vmem:[%s6 + $0xb8] sm:$0xff]
    %v1444 = vld [vmem:[%s6 + $0xc0] sm:$0xff]
    %v1445 = vld [vmem:[%s6 + $0xc8] sm:$0xff]
    %v1446 = vld [vmem:[%s6 + $0xd0] sm:$0xff]
    %v1447 = vld [vmem:[%s6 + $0xd8] sm:$0xff]
    %v1448 = vld [vmem:[%s6 + $0xe0] sm:$0xff]
    %v1449 = vld [vmem:[%s6 + $0xe8] sm:$0xff]
    %v1450 = vld [vmem:[%s6 + $0xf0] sm:$0xff]
    %v1451 = vld [vmem:[%s6 + $0xf8] sm:$0xff]
    %v1468 = vunpack.c.l.b16 %v1436
    %v1469 = vunpack.c.h.b16 %v1436
    %v1470 = vunpack.c.l.b16 %v1437
    %v1471 = vunpack.c.h.b16 %v1437
    %v1472 = vunpack.c.l.b16 %v1438
    %v1473 = vunpack.c.h.b16 %v1438
    %v1474 = vunpack.c.l.b16 %v1439
    %v1475 = vunpack.c.h.b16 %v1439
    %v1476 = vunpack.c.l.b16 %v1440
    %v1477 = vunpack.c.h.b16 %v1440
    %v1478 = vunpack.c.l.b16 %v1441
    %v1479 = vunpack.c.h.b16 %v1441
    %v1480 = vunpack.c.l.b16 %v1442
    %v1481 = vunpack.c.h.b16 %v1442
    %v1482 = vunpack.c.l.b16 %v1443
    %v1483 = vunpack.c.h.b16 %v1443
    %v1484 = vunpack.c.l.b16 %v1444
    %v1485 = vunpack.c.h.b16 %v1444
    %v1486 = vunpack.c.l.b16 %v1445
    %v1487 = vunpack.c.h.b16 %v1445
    %v1488 = vunpack.c.l.b16 %v1446
    %v1489 = vunpack.c.h.b16 %v1446
    %v1490 = vunpack.c.l.b16 %v1447
    %v1491 = vunpack.c.h.b16 %v1447
    %v1492 = vunpack.c.l.b16 %v1448
    %v1493 = vunpack.c.h.b16 %v1448
    %v1494 = vunpack.c.l.b16 %v1449
    %v1495 = vunpack.c.h.b16 %v1449
    %v1496 = vunpack.c.l.b16 %v1450
    %v1497 = vunpack.c.h.b16 %v1450
    %v1498 = vunpack.c.l.b16 %v1451
    %v1499 = vunpack.c.h.b16 %v1451
    %v1500 = vpack.c.b16 %v1470, %v1468
    %v1501 = vpack.c.b16 %v1471, %v1469
    %v1502 = vpack.c.b16 %v1474, %v1472
    %v1503 = vpack.c.b16 %v1475, %v1473
    %v1504 = vpack.c.b16 %v1478, %v1476
    %v1505 = vpack.c.b16 %v1479, %v1477
    %v1506 = vpack.c.b16 %v1482, %v1480
    %v1507 = vpack.c.b16 %v1483, %v1481
    %v1508 = vpack.c.b16 %v1486, %v1484
    %v1509 = vpack.c.b16 %v1487, %v1485
    %v1510 = vpack.c.b16 %v1490, %v1488
    %v1511 = vpack.c.b16 %v1491, %v1489
    %v1512 = vpack.c.b16 %v1494, %v1492
    %v1513 = vpack.c.b16 %v1495, %v1493
    %v1514 = vpack.c.b16 %v1498, %v1496
    %v1515 = vpack.c.b16 %v1499, %v1497
    %1532 = vmatprep.subr.bf16.mxu0 %v1515
    %1533 = vmatpush1.bf16.msra.mxu0 %v1514
    %1534 = vmatprep.subr.bf16.mxu0 %v1513
    %1535 = vmatpush1.bf16.msra.mxu0 %v1512
    %1536 = vmatprep.subr.bf16.mxu0 %v1511
    %1537 = vmatpush1.bf16.msra.mxu0 %v1510
    %1538 = vmatprep.subr.bf16.mxu0 %v1509
    %1539 = vmatpush1.bf16.msra.mxu0 %v1508
    %1540 = vmatprep.subr.bf16.mxu0 %v1507
    %1541 = vmatpush1.bf16.msra.mxu0 %v1506
    %1542 = vmatprep.subr.bf16.mxu0 %v1505
    %1543 = vmatpush1.bf16.msra.mxu0 %v1504
    %1544 = vmatprep.subr.bf16.mxu0 %v1503
    %1545 = vmatpush1.bf16.msra.mxu0 %v1502
    %1546 = vmatprep.subr.bf16.mxu0 %v1501
    %1547 = vmatpush1.bf16.msra.mxu0 %v1500
    %1548 = vmatprep.subr.bf16.mxu0 0
    %1549 = vmatpush2.bf16.msra.mxu0 0
    %1550 = vmatprep.subr.bf16.mxu0 0
    %1551 = vmatpush2.bf16.msra.mxu0 0
    %1552 = vmatprep.subr.bf16.mxu0 0
    %1553 = vmatpush2.bf16.msra.mxu0 0
    %1554 = vmatprep.subr.bf16.mxu0 0
    %1555 = vmatpush2.bf16.msra.mxu0 0
    %1556 = vmatprep.subr.bf16.mxu0 0
    %1557 = vmatpush2.bf16.msra.mxu0 0
    %1558 = vmatprep.subr.bf16.mxu0 0
    %1559 = vmatpush2.bf16.msra.mxu0 0
    %1560 = vmatprep.subr.bf16.mxu0 0
    %1561 = vmatpush2.bf16.msra.mxu0 0
    %1562 = vmatprep.subr.bf16.mxu0 0
    %1563 = vmatpush2.bf16.msra.mxu0 0
    %1564 = vmatprep.mubr.bf16.mxu0 0
    %1565 = vmatmul.mubr.bf16.gmra.mxu0 %v1430
    %v1566 = vpop.f32.mrf.mxu0
    %v1567 = vadd.f32 0.0, %v1566
    %v1568 = vpop.f32.mrf.mxu0
    %v1569 = vadd.f32 0.0, %v1568
    %v1570 = vpop.f32.mrf.mxu0
    %v1571 = vadd.f32 0.0, %v1570
    %v1572 = vpop.f32.mrf.mxu0
    %v1573 = vadd.f32 0.0, %v1572
    %1574 = vmatprep.mubr.bf16.mxu0 0
    %1575 = vmatmul.mubr.bf16.gmra.mxu0 %v1431
    %v1576 = vpop.f32.mrf.mxu0
    %v1577 = vadd.f32 0.0, %v1576
    %v1578 = vpop.f32.mrf.mxu0
    %v1579 = vadd.f32 0.0, %v1578
    %v1580 = vpop.f32.mrf.mxu0
    %v1581 = vadd.f32 0.0, %v1580
    %v1582 = vpop.f32.mrf.mxu0
    %v1583 = vadd.f32 0.0, %v1582
    %1584 = vmatprep.mubr.bf16.mxu0 0
    %1585 = vmatmul.mubr.bf16.gmra.mxu0 %v1432
    %v1586 = vpop.f32.mrf.mxu0
    %v1587 = vadd.f32 0.0, %v1586
    %v1588 = vpop.f32.mrf.mxu0
    %v1589 = vadd.f32 0.0, %v1588
    %v1590 = vpop.f32.mrf.mxu0
    %v1591 = vadd.f32 0.0, %v1590
    %v1592 = vpop.f32.mrf.mxu0
    %v1593 = vadd.f32 0.0, %v1592
    %1594 = vmatprep.mubr.bf16.mxu0 0
    %1595 = vmatmul.mubr.bf16.gmra.mxu0 %v1433
    %v1596 = vpop.f32.mrf.mxu0
    %v1597 = vadd.f32 0.0, %v1596
    %v1598 = vpop.f32.mrf.mxu0
    %v1599 = vadd.f32 0.0, %v1598
    %v1600 = vpop.f32.mrf.mxu0
    %v1601 = vadd.f32 0.0, %v1600
    %v1602 = vpop.f32.mrf.mxu0
    %v1603 = vadd.f32 0.0, %v1602
    %1604 = vmatprep.mubr.bf16.mxu0 0
    %1605 = vmatmul.mubr.bf16.gmra.mxu0 %v1434
    %v1606 = vpop.f32.mrf.mxu0
    %v1607 = vadd.f32 0.0, %v1606
    %v1608 = vpop.f32.mrf.mxu0
    %v1609 = vadd.f32 0.0, %v1608
    %v1610 = vpop.f32.mrf.mxu0
    %v1611 = vadd.f32 0.0, %v1610
    %v1612 = vpop.f32.mrf.mxu0
    %v1613 = vadd.f32 0.0, %v1612
    %1614 = vmatprep.mubr.bf16.mxu0 0
    %1615 = vmatmul.mubr.bf16.gmra.mxu0 %v1435
    %v1616 = vpop.f32.mrf.mxu0
    %v1617 = vadd.f32 0.0, %v1616
    %v1618 = vpop.f32.mrf.mxu0
    %v1619 = vadd.f32 0.0, %v1618
    %v1620 = vpop.f32.mrf.mxu0
    %v1621 = vpop.f32.mrf.mxu0
    %1622 = vdwg.mxu0
    %v1639 = vunpack.c.l.b16 %v1403
    %v1640 = vunpack.c.h.b16 %v1403
    %v1641 = vunpack.c.l.b16 %v1404
    %v1642 = vunpack.c.h.b16 %v1404
    %v1643 = vunpack.c.l.b16 %v1405
    %v1644 = vunpack.c.h.b16 %v1405
    %v1645 = vunpack.c.l.b16 %v1406
    %v1646 = vunpack.c.h.b16 %v1406
    %v1647 = vunpack.c.l.b16 %v1407
    %v1648 = vunpack.c.h.b16 %v1407
    %v1649 = vunpack.c.l.b16 %v1408
    %v1650 = vunpack.c.h.b16 %v1408
    %v1651 = vunpack.c.l.b16 %v1409
    %v1652 = vunpack.c.h.b16 %v1409
    %v1653 = vunpack.c.l.b16 %v1410
    %v1654 = vunpack.c.h.b16 %v1410
    %v1655 = vunpack.c.l.b16 %v1411
    %v1656 = vunpack.c.h.b16 %v1411
    %v1657 = vunpack.c.l.b16 %v1412
    %v1658 = vunpack.c.h.b16 %v1412
    %v1659 = vunpack.c.l.b16 %v1413
    %v1660 = vunpack.c.h.b16 %v1413
    %v1661 = vunpack.c.l.b16 %v1414
    %v1662 = vunpack.c.h.b16 %v1414
    %v1663 = vunpack.c.l.b16 %v1415
    %v1664 = vunpack.c.h.b16 %v1415
    %v1665 = vunpack.c.l.b16 %v1416
    %v1666 = vunpack.c.h.b16 %v1416
    %v1667 = vunpack.c.l.b16 %v1417
    %v1668 = vunpack.c.h.b16 %v1417
    %v1669 = vunpack.c.l.b16 %v1418
    %v1670 = vunpack.c.h.b16 %v1418
    %v1671 = vpack.c.b16 %v1641, %v1639
    %v1672 = vpack.c.b16 %v1642, %v1640
    %v1673 = vpack.c.b16 %v1645, %v1643
    %v1674 = vpack.c.b16 %v1646, %v1644
    %v1675 = vpack.c.b16 %v1649, %v1647
    %v1676 = vpack.c.b16 %v1650, %v1648
    %v1677 = vpack.c.b16 %v1653, %v1651
    %v1678 = vpack.c.b16 %v1654, %v1652
    %v1679 = vpack.c.b16 %v1657, %v1655
    %v1680 = vpack.c.b16 %v1658, %v1656
    %v1681 = vpack.c.b16 %v1661, %v1659
    %v1682 = vpack.c.b16 %v1662, %v1660
    %v1683 = vpack.c.b16 %v1665, %v1663
    %v1684 = vpack.c.b16 %v1666, %v1664
    %v1685 = vpack.c.b16 %v1669, %v1667
    %v1686 = vpack.c.b16 %v1670, %v1668
    %1703 = vmatprep.subr.bf16.mxu0 %v1686
    %1704 = vmatpush1.bf16.msra.mxu0 %v1685
    %1705 = vmatprep.subr.bf16.mxu0 %v1684
    %1706 = vmatpush1.bf16.msra.mxu0 %v1683
    %1707 = vmatprep.subr.bf16.mxu0 %v1682
    %1708 = vmatpush1.bf16.msra.mxu0 %v1681
    %1709 = vmatprep.subr.bf16.mxu0 %v1680
    %1710 = vmatpush1.bf16.msra.mxu0 %v1679
    %1711 = vmatprep.subr.bf16.mxu0 %v1678
    %1712 = vmatpush1.bf16.msra.mxu0 %v1677
    %1713 = vmatprep.subr.bf16.mxu0 %v1676
    %1714 = vmatpush1.bf16.msra.mxu0 %v1675
    %1715 = vmatprep.subr.bf16.mxu0 %v1674
    %1716 = vmatpush1.bf16.msra.mxu0 %v1673
    %1717 = vmatprep.subr.bf16.mxu0 %v1672
    %1718 = vmatpush1.bf16.msra.mxu0 %v1671
    %1719 = vmatprep.subr.bf16.mxu0 0
    %1720 = vmatpush2.bf16.msra.mxu0 0
    %1721 = vmatprep.subr.bf16.mxu0 0
    %1722 = vmatpush2.bf16.msra.mxu0 0
    %1723 = vmatprep.subr.bf16.mxu0 0
    %1724 = vmatpush2.bf16.msra.mxu0 0
    %1725 = vmatprep.subr.bf16.mxu0 0
    %1726 = vmatpush2.bf16.msra.mxu0 0
    %1727 = vmatprep.subr.bf16.mxu0 0
    %1728 = vmatpush2.bf16.msra.mxu0 0
    %1729 = vmatprep.subr.bf16.mxu0 0
    %1730 = vmatpush2.bf16.msra.mxu0 0
    %1731 = vmatprep.subr.bf16.mxu0 0
    %1732 = vmatpush2.bf16.msra.mxu0 0
    %1733 = vmatprep.subr.bf16.mxu0 0
    %1734 = vmatpush2.bf16.msra.mxu0 0
    %1735 = vmatprep.mubr.bf16.mxu0 0
    %1736 = vmatmul.mubr.bf16.gmra.mxu0 %v1397
    %v1737 = vpop.f32.mrf.mxu0
    %v1738 = vadd.f32 %v1567, %v1737
    %v1739 = vpop.f32.mrf.mxu0
    %v1740 = vadd.f32 %v1569, %v1739
    %v1741 = vpop.f32.mrf.mxu0
    %v1742 = vadd.f32 %v1571, %v1741
    %v1743 = vpop.f32.mrf.mxu0
    %v1744 = vadd.f32 %v1573, %v1743
    %1745 = vmatprep.mubr.bf16.mxu0 0
    %1746 = vmatmul.mubr.bf16.gmra.mxu0 %v1398
    %v1747 = vpop.f32.mrf.mxu0
    %v1748 = vadd.f32 %v1577, %v1747
    %v1749 = vpop.f32.mrf.mxu0
    %v1750 = vadd.f32 %v1579, %v1749
    %v1751 = vpop.f32.mrf.mxu0
    %v1752 = vadd.f32 %v1581, %v1751
    %v1753 = vpop.f32.mrf.mxu0
    %v1754 = vadd.f32 %v1583, %v1753
    %1755 = vmatprep.mubr.bf16.mxu0 0
    %1756 = vmatmul.mubr.bf16.gmra.mxu0 %v1399
    %v1757 = vpop.f32.mrf.mxu0
    %v1758 = vadd.f32 %v1587, %v1757
    %v1759 = vpop.f32.mrf.mxu0
    %v1760 = vadd.f32 %v1589, %v1759
    %v1761 = vpop.f32.mrf.mxu0
    %v1762 = vadd.f32 %v1591, %v1761
    %v1763 = vpop.f32.mrf.mxu0
    %v1764 = vadd.f32 %v1593, %v1763
    %1765 = vmatprep.mubr.bf16.mxu0 0
    %1766 = vmatmul.mubr.bf16.gmra.mxu0 %v1400
    %v1767 = vpop.f32.mrf.mxu0
    %v1768 = vadd.f32 %v1597, %v1767
    %v1769 = vpop.f32.mrf.mxu0
    %v1770 = vadd.f32 %v1599, %v1769
    %v1771 = vpop.f32.mrf.mxu0
    %v1772 = vadd.f32 %v1601, %v1771
    %v1773 = vpop.f32.mrf.mxu0
    %v1774 = vadd.f32 %v1603, %v1773
    %1775 = vmatprep.mubr.bf16.mxu0 0
    %1776 = vmatmul.mubr.bf16.gmra.mxu0 %v1401
    %v1777 = vpop.f32.mrf.mxu0
    %v1778 = vadd.f32 %v1607, %v1777
    %v1779 = vpop.f32.mrf.mxu0
    %v1780 = vadd.f32 %v1609, %v1779
    %v1781 = vpop.f32.mrf.mxu0
    %v1782 = vadd.f32 %v1611, %v1781
    %v1783 = vpop.f32.mrf.mxu0
    %v1784 = vadd.f32 %v1613, %v1783
    %1785 = vmatprep.mubr.bf16.mxu0 0
    %1786 = vmatmul.mubr.bf16.gmra.mxu0 %v1402
    %v1787 = vpop.f32.mrf.mxu0
    %v1788 = vadd.f32 %v1617, %v1787
    %v1789 = vpop.f32.mrf.mxu0
    %v1790 = vadd.f32 %v1619, %v1789
    %v1791 = vpop.f32.mrf.mxu0
    %v1792 = vpop.f32.mrf.mxu0
    %1793 = vdwg.mxu0
    %v1794 = vld [vmem:[#allocation2 + $0xc] sm:$0xff]
    %v1795 = vld [vmem:[#allocation2 + $0x14] sm:$0xff]
    %v1796 = vld [vmem:[#allocation2 + $0x1c] sm:$0xff]
    %v1797 = vld [vmem:[#allocation2 + $0x24] sm:$0xff]
    %v1798 = vld [vmem:[#allocation2 + $0x2c] sm:$0xff]
    %v1799 = vld [vmem:[#allocation2 + $0x34] sm:$0xff]
    %v1800 = vld [vmem:[#allocation2 + $0x3c] sm:$0xff]
    %v1801 = vld [vmem:[#allocation2 + $0x44] sm:$0xff]
    %v1802 = vld [vmem:[#allocation2 + $0x4c] sm:$0xff]
    %v1803 = vld [vmem:[#allocation2 + $0x54] sm:$0xff]
    %v1804 = vld [vmem:[#allocation2 + $0x5c] sm:$0xff]
    %v1805 = vpack.c.bf16 %v1795, %v1794
    %v1806 = vpack.c.bf16 %v1797, %v1796
    %v1807 = vpack.c.bf16 %v1799, %v1798
    %v1808 = vpack.c.bf16 %v1801, %v1800
    %v1809 = vpack.c.bf16 %v1803, %v1802
    %v1810 = vpack.c.bf16 %v1804, %v1804
    %v1811 = vld [vmem:[%s6 + $0x100] sm:$0xff]
    %v1812 = vld [vmem:[%s6 + $0x108] sm:$0xff]
    %v1813 = vld [vmem:[%s6 + $0x110] sm:$0xff]
    %v1814 = vld [vmem:[%s6 + $0x118] sm:$0xff]
    %v1815 = vld [vmem:[%s6 + $0x120] sm:$0xff]
    %v1816 = vld [vmem:[%s6 + $0x128] sm:$0xff]
    %v1817 = vld [vmem:[%s6 + $0x130] sm:$0xff]
    %v1818 = vld [vmem:[%s6 + $0x138] sm:$0xff]
    %v1819 = vld [vmem:[%s6 + $0x140] sm:$0xff]
    %v1820 = vld [vmem:[%s6 + $0x148] sm:$0xff]
    %v1821 = vld [vmem:[%s6 + $0x150] sm:$0xff]
    %v1822 = vld [vmem:[%s6 + $0x158] sm:$0xff]
    %v1823 = vld [vmem:[%s6 + $0x160] sm:$0xff]
    %v1824 = vld [vmem:[%s6 + $0x168] sm:$0xff]
    %v1825 = vld [vmem:[%s6 + $0x170] sm:$0xff]
    %v1826 = vld [vmem:[%s6 + $0x178] sm:$0xff]
    %v1843 = vunpack.c.l.b16 %v1811
    %v1844 = vunpack.c.h.b16 %v1811
    %v1845 = vunpack.c.l.b16 %v1812
    %v1846 = vunpack.c.h.b16 %v1812
    %v1847 = vunpack.c.l.b16 %v1813
    %v1848 = vunpack.c.h.b16 %v1813
    %v1849 = vunpack.c.l.b16 %v1814
    %v1850 = vunpack.c.h.b16 %v1814
    %v1851 = vunpack.c.l.b16 %v1815
    %v1852 = vunpack.c.h.b16 %v1815
    %v1853 = vunpack.c.l.b16 %v1816
    %v1854 = vunpack.c.h.b16 %v1816
    %v1855 = vunpack.c.l.b16 %v1817
    %v1856 = vunpack.c.h.b16 %v1817
    %v1857 = vunpack.c.l.b16 %v1818
    %v1858 = vunpack.c.h.b16 %v1818
    %v1859 = vunpack.c.l.b16 %v1819
    %v1860 = vunpack.c.h.b16 %v1819
    %v1861 = vunpack.c.l.b16 %v1820
    %v1862 = vunpack.c.h.b16 %v1820
    %v1863 = vunpack.c.l.b16 %v1821
    %v1864 = vunpack.c.h.b16 %v1821
    %v1865 = vunpack.c.l.b16 %v1822
    %v1866 = vunpack.c.h.b16 %v1822
    %v1867 = vunpack.c.l.b16 %v1823
    %v1868 = vunpack.c.h.b16 %v1823
    %v1869 = vunpack.c.l.b16 %v1824
    %v1870 = vunpack.c.h.b16 %v1824
    %v1871 = vunpack.c.l.b16 %v1825
    %v1872 = vunpack.c.h.b16 %v1825
    %v1873 = vunpack.c.l.b16 %v1826
    %v1874 = vunpack.c.h.b16 %v1826
    %v1875 = vpack.c.b16 %v1845, %v1843
    %v1876 = vpack.c.b16 %v1846, %v1844
    %v1877 = vpack.c.b16 %v1849, %v1847
    %v1878 = vpack.c.b16 %v1850, %v1848
    %v1879 = vpack.c.b16 %v1853, %v1851
    %v1880 = vpack.c.b16 %v1854, %v1852
    %v1881 = vpack.c.b16 %v1857, %v1855
    %v1882 = vpack.c.b16 %v1858, %v1856
    %v1883 = vpack.c.b16 %v1861, %v1859
    %v1884 = vpack.c.b16 %v1862, %v1860
    %v1885 = vpack.c.b16 %v1865, %v1863
    %v1886 = vpack.c.b16 %v1866, %v1864
    %v1887 = vpack.c.b16 %v1869, %v1867
    %v1888 = vpack.c.b16 %v1870, %v1868
    %v1889 = vpack.c.b16 %v1873, %v1871
    %v1890 = vpack.c.b16 %v1874, %v1872
    %1907 = vmatprep.subr.bf16.mxu0 %v1890
    %1908 = vmatpush1.bf16.msra.mxu0 %v1889
    %1909 = vmatprep.subr.bf16.mxu0 %v1888
    %1910 = vmatpush1.bf16.msra.mxu0 %v1887
    %1911 = vmatprep.subr.bf16.mxu0 %v1886
    %1912 = vmatpush1.bf16.msra.mxu0 %v1885
    %1913 = vmatprep.subr.bf16.mxu0 %v1884
    %1914 = vmatpush1.bf16.msra.mxu0 %v1883
    %1915 = vmatprep.subr.bf16.mxu0 %v1882
    %1916 = vmatpush1.bf16.msra.mxu0 %v1881
    %1917 = vmatprep.subr.bf16.mxu0 %v1880
    %1918 = vmatpush1.bf16.msra.mxu0 %v1879
    %1919 = vmatprep.subr.bf16.mxu0 %v1878
    %1920 = vmatpush1.bf16.msra.mxu0 %v1877
    %1921 = vmatprep.subr.bf16.mxu0 %v1876
    %1922 = vmatpush1.bf16.msra.mxu0 %v1875
    %1923 = vmatprep.subr.bf16.mxu0 0
    %1924 = vmatpush2.bf16.msra.mxu0 0
    %1925 = vmatprep.subr.bf16.mxu0 0
    %1926 = vmatpush2.bf16.msra.mxu0 0
    %1927 = vmatprep.subr.bf16.mxu0 0
    %1928 = vmatpush2.bf16.msra.mxu0 0
    %1929 = vmatprep.subr.bf16.mxu0 0
    %1930 = vmatpush2.bf16.msra.mxu0 0
    %1931 = vmatprep.subr.bf16.mxu0 0
    %1932 = vmatpush2.bf16.msra.mxu0 0
    %1933 = vmatprep.subr.bf16.mxu0 0
    %1934 = vmatpush2.bf16.msra.mxu0 0
    %1935 = vmatprep.subr.bf16.mxu0 0
    %1936 = vmatpush2.bf16.msra.mxu0 0
    %1937 = vmatprep.subr.bf16.mxu0 0
    %1938 = vmatpush2.bf16.msra.mxu0 0
    %1939 = vmatprep.mubr.bf16.mxu0 0
    %1940 = vmatmul.mubr.bf16.gmra.mxu0 %v1805
    %v1941 = vpop.f32.mrf.mxu0
    %v1942 = vadd.f32 0.0, %v1941
    %v1943 = vpop.f32.mrf.mxu0
    %v1944 = vadd.f32 0.0, %v1943
    %v1945 = vpop.f32.mrf.mxu0
    %v1946 = vadd.f32 0.0, %v1945
    %v1947 = vpop.f32.mrf.mxu0
    %v1948 = vadd.f32 0.0, %v1947
    %1949 = vmatprep.mubr.bf16.mxu0 0
    %1950 = vmatmul.mubr.bf16.gmra.mxu0 %v1806
    %v1951 = vpop.f32.mrf.mxu0
    %v1952 = vadd.f32 0.0, %v1951
    %v1953 = vpop.f32.mrf.mxu0
    %v1954 = vadd.f32 0.0, %v1953
    %v1955 = vpop.f32.mrf.mxu0
    %v1956 = vadd.f32 0.0, %v1955
    %v1957 = vpop.f32.mrf.mxu0
    %v1958 = vadd.f32 0.0, %v1957
    %1959 = vmatprep.mubr.bf16.mxu0 0
    %1960 = vmatmul.mubr.bf16.gmra.mxu0 %v1807
    %v1961 = vpop.f32.mrf.mxu0
    %v1962 = vadd.f32 0.0, %v1961
    %v1963 = vpop.f32.mrf.mxu0
    %v1964 = vadd.f32 0.0, %v1963
    %v1965 = vpop.f32.mrf.mxu0
    %v1966 = vadd.f32 0.0, %v1965
    %v1967 = vpop.f32.mrf.mxu0
    %v1968 = vadd.f32 0.0, %v1967
    %1969 = vmatprep.mubr.bf16.mxu0 0
    %1970 = vmatmul.mubr.bf16.gmra.mxu0 %v1808
    %v1971 = vpop.f32.mrf.mxu0
    %v1972 = vadd.f32 0.0, %v1971
    %v1973 = vpop.f32.mrf.mxu0
    %v1974 = vadd.f32 0.0, %v1973
    %v1975 = vpop.f32.mrf.mxu0
    %v1976 = vadd.f32 0.0, %v1975
    %v1977 = vpop.f32.mrf.mxu0
    %v1978 = vadd.f32 0.0, %v1977
    %1979 = vmatprep.mubr.bf16.mxu0 0
    %1980 = vmatmul.mubr.bf16.gmra.mxu0 %v1809
    %v1981 = vpop.f32.mrf.mxu0
    %v1982 = vadd.f32 0.0, %v1981
    %v1983 = vpop.f32.mrf.mxu0
    %v1984 = vadd.f32 0.0, %v1983
    %v1985 = vpop.f32.mrf.mxu0
    %v1986 = vadd.f32 0.0, %v1985
    %v1987 = vpop.f32.mrf.mxu0
    %v1988 = vadd.f32 0.0, %v1987
    %1989 = vmatprep.mubr.bf16.mxu0 0
    %1990 = vmatmul.mubr.bf16.gmra.mxu0 %v1810
    %v1991 = vpop.f32.mrf.mxu0
    %v1992 = vadd.f32 0.0, %v1991
    %v1993 = vpop.f32.mrf.mxu0
    %v1994 = vadd.f32 0.0, %v1993
    %v1995 = vpop.f32.mrf.mxu0
    %v1996 = vpop.f32.mrf.mxu0
    %1997 = vdwg.mxu0
    %v1998 = vadd.f32 %v1738, %v1942
    %v1999 = vadd.f32 %v1740, %v1944
    %v2000 = vadd.f32 %v1742, %v1946
    %v2001 = vadd.f32 %v1744, %v1948
    %v2002 = vadd.f32 %v1748, %v1952
    %v2003 = vadd.f32 %v1750, %v1954
    %v2004 = vadd.f32 %v1752, %v1956
    %v2005 = vadd.f32 %v1754, %v1958
    %v2006 = vadd.f32 %v1758, %v1962
    %v2007 = vadd.f32 %v1760, %v1964
    %v2008 = vadd.f32 %v1762, %v1966
    %v2009 = vadd.f32 %v1764, %v1968
    %v2010 = vadd.f32 %v1768, %v1972
    %v2011 = vadd.f32 %v1770, %v1974
    %v2012 = vadd.f32 %v1772, %v1976
    %v2013 = vadd.f32 %v1774, %v1978
    %v2014 = vadd.f32 %v1778, %v1982
    %v2015 = vadd.f32 %v1780, %v1984
    %v2016 = vadd.f32 %v1782, %v1986
    %v2017 = vadd.f32 %v1784, %v1988
    %v2018 = vadd.f32 %v1788, %v1992
    %v2019 = vadd.f32 %v1790, %v1994
    %v2020 = vmul.f32 %v1998, %v644
    %v2021 = vmul.f32 %v1999, %v644
    %v2022 = vmul.f32 %v2000, %v649
    %v2023 = vmul.f32 %v2001, %v649
    %v2024 = vmul.f32 %v2002, %v654
    %v2025 = vmul.f32 %v2003, %v654
    %v2026 = vmul.f32 %v2004, %v659
    %v2027 = vmul.f32 %v2005, %v659
    %v2028 = vmul.f32 %v2006, %v664
    %v2029 = vmul.f32 %v2007, %v664
    %v2030 = vmul.f32 %v2008, %v669
    %v2031 = vmul.f32 %v2009, %v669
    %v2032 = vmul.f32 %v2010, %v674
    %v2033 = vmul.f32 %v2011, %v674
    %v2034 = vmul.f32 %v2012, %v679
    %v2035 = vmul.f32 %v2013, %v679
    %v2036 = vmul.f32 %v2014, %v684
    %v2037 = vmul.f32 %v2015, %v684
    %v2038 = vmul.f32 %v2016, %v689
    %v2039 = vmul.f32 %v2017, %v689
    %v2040 = vmul.f32 %v2018, %v694
    %v2041 = vmul.f32 %v2019, %v694
    %v2042 = vld [vmem:[%s11] ss:$2 sm:$0x3]
    %s2043 = scalar_lea.vmem %s11, 1
    %v2044 = vld [vmem:[%s2043] ss:$2 sm:$0x3]
    %v2046 = vlaneseq
    %v2047 = vshrl.u32 %v2046, 7
    %v2048 = vsub.s32 0, %v2047
    %v2049 = vrot.slane %v2042, %v2048
    %v2050 = vlaneseq
    %v2051 = vshrl.u32 %v2050, 7
    %v2052 = vsub.s32 1, %v2051
    %v2053 = vrot.slane %v2042, %v2052
    %v2057 = vlaneseq
    %v2058 = vshrl.u32 %v2057, 7
    %v2059 = vsub.s32 0, %v2058
    %v2060 = vrot.slane %v2044, %v2059
    %v2061 = vlaneseq
    %v2062 = vshrl.u32 %v2061, 7
    %v2063 = vsub.s32 1, %v2062
    %v2064 = vrot.slane %v2044, %v2063
    %v2067 = vsel %vm720, %v2049, %v2060
    %v2068 = vsel %vm720, %v2053, %v2064
    %v2069 = vsel %vm721, %v2049, %v2060
    %v2070 = vsel %vm721, %v2053, %v2064
    %v2071 = vsel %vm722, %v2049, %v2060
    %v2072 = vsel %vm722, %v2053, %v2064
    %v2073 = vsel %vm723, %v2049, %v2060
    %v2074 = vsel %vm723, %v2053, %v2064
    %v2075 = vsel %vm724, %v2049, %v2060
    %v2076 = vsel %vm724, %v2053, %v2064
    %v2077 = vsel %vm725, %v2049, %v2060
    %v2078 = vsel %vm725, %v2053, %v2064
    %v2079 = vsel %vm726, %v2049, %v2060
    %v2080 = vsel %vm726, %v2053, %v2064
    %v2081 = vsel %vm727, %v2049, %v2060
    %v2082 = vsel %vm727, %v2053, %v2064
    %v2083 = vsel %vm728, %v2049, %v2060
    %v2084 = vsel %vm728, %v2053, %v2064
    %v2085 = vsel %vm729, %v2049, %v2060
    %v2086 = vsel %vm729, %v2053, %v2064
    %v2087 = vsel %vm730, %v2049, %v2060
    %v2088 = vsel %vm730, %v2053, %v2064
    %v2089 = vmul.f32 %v2020, %v2067
    %v2090 = vmul.f32 %v2021, %v2068
    %v2091 = vmul.f32 %v2022, %v2069
    %v2092 = vmul.f32 %v2023, %v2070
    %v2093 = vmul.f32 %v2024, %v2071
    %v2094 = vmul.f32 %v2025, %v2072
    %v2095 = vmul.f32 %v2026, %v2073
    %v2096 = vmul.f32 %v2027, %v2074
    %v2097 = vmul.f32 %v2028, %v2075
    %v2098 = vmul.f32 %v2029, %v2076
    %v2099 = vmul.f32 %v2030, %v2077
    %v2100 = vmul.f32 %v2031, %v2078
    %v2101 = vmul.f32 %v2032, %v2079
    %v2102 = vmul.f32 %v2033, %v2080
    %v2103 = vmul.f32 %v2034, %v2081
    %v2104 = vmul.f32 %v2035, %v2082
    %v2105 = vmul.f32 %v2036, %v2083
    %v2106 = vmul.f32 %v2037, %v2084
    %v2107 = vmul.f32 %v2038, %v2085
    %v2108 = vmul.f32 %v2039, %v2086
    %v2109 = vmul.f32 %v2040, %v2087
    %v2110 = vmul.f32 %v2041, %v2088
    %v2111 = vld [vmem:[%s12] ss:$2 sm:$0x3]
    %s2112 = scalar_lea.vmem %s12, 1
    %v2113 = vld [vmem:[%s2112] ss:$2 sm:$0x3]
    %v2115 = vlaneseq
    %v2116 = vshrl.u32 %v2115, 7
    %v2117 = vsub.s32 0, %v2116
    %v2118 = vrot.slane %v2111, %v2117
    %v2119 = vlaneseq
    %v2120 = vshrl.u32 %v2119, 7
    %v2121 = vsub.s32 1, %v2120
    %v2122 = vrot.slane %v2111, %v2121
    %v2126 = vlaneseq
    %v2127 = vshrl.u32 %v2126, 7
    %v2128 = vsub.s32 0, %v2127
    %v2129 = vrot.slane %v2113, %v2128
    %v2130 = vlaneseq
    %v2131 = vshrl.u32 %v2130, 7
    %v2132 = vsub.s32 1, %v2131
    %v2133 = vrot.slane %v2113, %v2132
    %v2136 = vsel %vm720, %v2118, %v2129
    %v2137 = vsel %vm720, %v2122, %v2133
    %v2138 = vsel %vm721, %v2118, %v2129
    %v2139 = vsel %vm721, %v2122, %v2133
    %v2140 = vsel %vm722, %v2118, %v2129
    %v2141 = vsel %vm722, %v2122, %v2133
    %v2142 = vsel %vm723, %v2118, %v2129
    %v2143 = vsel %vm723, %v2122, %v2133
    %v2144 = vsel %vm724, %v2118, %v2129
    %v2145 = vsel %vm724, %v2122, %v2133
    %v2146 = vsel %vm725, %v2118, %v2129
    %v2147 = vsel %vm725, %v2122, %v2133
    %v2148 = vsel %vm726, %v2118, %v2129
    %v2149 = vsel %vm726, %v2122, %v2133
    %v2150 = vsel %vm727, %v2118, %v2129
    %v2151 = vsel %vm727, %v2122, %v2133
    %v2152 = vsel %vm728, %v2118, %v2129
    %v2153 = vsel %vm728, %v2122, %v2133
    %v2154 = vsel %vm729, %v2118, %v2129
    %v2155 = vsel %vm729, %v2122, %v2133
    %v2156 = vsel %vm730, %v2118, %v2129
    %v2157 = vsel %vm730, %v2122, %v2133
    %v2158 = vadd.f32 %v2089, %v2136
    %v2159 = vadd.f32 %v2090, %v2137
    %v2160 = vadd.f32 %v2091, %v2138
    %v2161 = vadd.f32 %v2092, %v2139
    %v2162 = vadd.f32 %v2093, %v2140
    %v2163 = vadd.f32 %v2094, %v2141
    %v2164 = vadd.f32 %v2095, %v2142
    %v2165 = vadd.f32 %v2096, %v2143
    %v2166 = vadd.f32 %v2097, %v2144
    %v2167 = vadd.f32 %v2098, %v2145
    %v2168 = vadd.f32 %v2099, %v2146
    %v2169 = vadd.f32 %v2100, %v2147
    %v2170 = vadd.f32 %v2101, %v2148
    %v2171 = vadd.f32 %v2102, %v2149
    %v2172 = vadd.f32 %v2103, %v2150
    %v2173 = vadd.f32 %v2104, %v2151
    %v2174 = vadd.f32 %v2105, %v2152
    %v2175 = vadd.f32 %v2106, %v2153
    %v2176 = vadd.f32 %v2107, %v2154
    %v2177 = vadd.f32 %v2108, %v2155
    %v2178 = vadd.f32 %v2109, %v2156
    %v2179 = vadd.f32 %v2110, %v2157
    %v2180 = vmax.f32 %v2158, 0.0
    %v2181 = vmax.f32 %v2159, 0.0
    %v2182 = vmax.f32 %v2160, 0.0
    %v2183 = vmax.f32 %v2161, 0.0
    %v2184 = vmax.f32 %v2162, 0.0
    %v2185 = vmax.f32 %v2163, 0.0
    %v2186 = vmax.f32 %v2164, 0.0
    %v2187 = vmax.f32 %v2165, 0.0
    %v2188 = vmax.f32 %v2166, 0.0
    %v2189 = vmax.f32 %v2167, 0.0
    %v2190 = vmax.f32 %v2168, 0.0
    %v2191 = vmax.f32 %v2169, 0.0
    %v2192 = vmax.f32 %v2170, 0.0
    %v2193 = vmax.f32 %v2171, 0.0
    %v2194 = vmax.f32 %v2172, 0.0
    %v2195 = vmax.f32 %v2173, 0.0
    %v2196 = vmax.f32 %v2174, 0.0
    %v2197 = vmax.f32 %v2175, 0.0
    %v2198 = vmax.f32 %v2176, 0.0
    %v2199 = vmax.f32 %v2177, 0.0
    %v2200 = vmax.f32 %v2178, 0.0
    %v2201 = vmax.f32 %v2179, 0.0
    %v2202 = vmul.f32 %v2180, %v644
    %v2203 = vmul.f32 %v2181, %v644
    %v2204 = vmul.f32 %v2182, %v649
    %v2205 = vmul.f32 %v2183, %v649
    %v2206 = vmul.f32 %v2184, %v654
    %v2207 = vmul.f32 %v2185, %v654
    %v2208 = vmul.f32 %v2186, %v659
    %v2209 = vmul.f32 %v2187, %v659
    %v2210 = vmul.f32 %v2188, %v664
    %v2211 = vmul.f32 %v2189, %v664
    %v2212 = vmul.f32 %v2190, %v669
    %v2213 = vmul.f32 %v2191, %v669
    %v2214 = vmul.f32 %v2192, %v674
    %v2215 = vmul.f32 %v2193, %v674
    %v2216 = vmul.f32 %v2194, %v679
    %v2217 = vmul.f32 %v2195, %v679
    %v2218 = vmul.f32 %v2196, %v684
    %v2219 = vmul.f32 %v2197, %v684
    %v2220 = vmul.f32 %v2198, %v689
    %v2221 = vmul.f32 %v2199, %v689
    %v2222 = vmul.f32 %v2200, %v694
    %v2223 = vmul.f32 %v2201, %v694
    %v2224 = vpack.c.bf16 %v2204, %v2202
    %v2225 = vpack.c.bf16 %v2205, %v2203
    %v2226 = vpack.c.bf16 %v2208, %v2206
    %v2227 = vpack.c.bf16 %v2209, %v2207
    %v2228 = vpack.c.bf16 %v2212, %v2210
    %v2229 = vpack.c.bf16 %v2213, %v2211
    %v2230 = vpack.c.bf16 %v2216, %v2214
    %v2231 = vpack.c.bf16 %v2217, %v2215
    %v2232 = vpack.c.bf16 %v2220, %v2218
    %v2233 = vpack.c.bf16 %v2221, %v2219
    %v2234 = vpack.c.bf16 %v2222, %v2222
    %v2235 = vpack.c.bf16 %v2223, %v2223
    %v2236 = vld [vmem:[%s13] sm:$0xf]
    %v2237 = vld [vmem:[%s13 + $0x4] sm:$0xf]
    %v2238 = vld [vmem:[%s13 + $0x8] sm:$0xf]
    %v2239 = vld [vmem:[%s13 + $0xc] sm:$0xf]
    %v2240 = vld [vmem:[%s13 + $0x10] sm:$0xf]
    %v2241 = vld [vmem:[%s13 + $0x14] sm:$0xf]
    %v2242 = vld [vmem:[%s13 + $0x18] sm:$0xf]
    %v2243 = vld [vmem:[%s13 + $0x1c] sm:$0xf]
    %v2244 = vld [vmem:[%s13 + $0x20] sm:$0xf]
    %v2245 = vld [vmem:[%s13 + $0x24] sm:$0xf]
    %v2246 = vld [vmem:[%s13 + $0x28] sm:$0xf]
    %v2247 = vld [vmem:[%s13 + $0x2c] sm:$0xf]
    %v2248 = vld [vmem:[%s13 + $0x30] sm:$0xf]
    %v2249 = vld [vmem:[%s13 + $0x34] sm:$0xf]
    %v2250 = vld [vmem:[%s13 + $0x38] sm:$0xf]
    %v2251 = vld [vmem:[%s13 + $0x3c] sm:$0xf]
    %v2252 = vld [vmem:[%s13 + $0x40] sm:$0xf]
    %v2253 = vld [vmem:[%s13 + $0x44] sm:$0xf]
    %v2254 = vld [vmem:[%s13 + $0x48] sm:$0xf]
    %v2255 = vld [vmem:[%s13 + $0x4c] sm:$0xf]
    %v2256 = vld [vmem:[%s13 + $0x50] sm:$0xf]
    %v2257 = vld [vmem:[%s13 + $0x54] sm:$0xf]
    %v2258 = vld [vmem:[%s13 + $0x58] sm:$0xf]
    %v2259 = vld [vmem:[%s13 + $0x5c] sm:$0xf]
    %v2260 = vld [vmem:[%s13 + $0x60] sm:$0xf]
    %v2261 = vld [vmem:[%s13 + $0x64] sm:$0xf]
    %v2262 = vld [vmem:[%s13 + $0x68] sm:$0xf]
    %v2263 = vld [vmem:[%s13 + $0x6c] sm:$0xf]
    %v2264 = vld [vmem:[%s13 + $0x70] sm:$0xf]
    %v2265 = vld [vmem:[%s13 + $0x74] sm:$0xf]
    %v2266 = vld [vmem:[%s13 + $0x78] sm:$0xf]
    %v2267 = vld [vmem:[%s13 + $0x7c] sm:$0xf]
    %v2268 = vld [vmem:[%s14] sm:$0x1]
    %v2270 = vlaneseq
    %v2271 = vshrl.u32 %v2270, 7
    %v2272 = vsub.s32 0, %v2271
    %v2273 = vrot.slane %v2268, %v2272
    %v2307 = vunpack.c.l.b16 %v2236
    %v2308 = vunpack.c.l.b16 %v2237
    %v2309 = vunpack.c.l.b16 %v2238
    %v2310 = vunpack.c.l.b16 %v2239
    %v2311 = vunpack.c.l.b16 %v2240
    %v2312 = vunpack.c.l.b16 %v2241
    %v2313 = vunpack.c.l.b16 %v2242
    %v2314 = vunpack.c.l.b16 %v2243
    %v2315 = vunpack.c.l.b16 %v2244
    %v2316 = vunpack.c.l.b16 %v2245
    %v2317 = vunpack.c.l.b16 %v2246
    %v2318 = vunpack.c.l.b16 %v2247
    %v2319 = vunpack.c.l.b16 %v2248
    %v2320 = vunpack.c.l.b16 %v2249
    %v2321 = vunpack.c.l.b16 %v2250
    %v2322 = vunpack.c.l.b16 %v2251
    %v2323 = vunpack.c.l.b16 %v2252
    %v2324 = vunpack.c.l.b16 %v2253
    %v2325 = vunpack.c.l.b16 %v2254
    %v2326 = vunpack.c.l.b16 %v2255
    %v2327 = vunpack.c.l.b16 %v2256
    %v2328 = vunpack.c.l.b16 %v2257
    %v2329 = vunpack.c.l.b16 %v2258
    %v2330 = vunpack.c.l.b16 %v2259
    %v2331 = vunpack.c.l.b16 %v2260
    %v2332 = vunpack.c.l.b16 %v2261
    %v2333 = vunpack.c.l.b16 %v2262
    %v2334 = vunpack.c.l.b16 %v2263
    %v2335 = vunpack.c.l.b16 %v2264
    %v2336 = vunpack.c.l.b16 %v2265
    %v2337 = vunpack.c.l.b16 %v2266
    %v2338 = vunpack.c.l.b16 %v2267
    %v2339 = vpack.c.b16 %v2308, %v2307
    %v2340 = vpack.c.b16 %v2310, %v2309
    %v2341 = vpack.c.b16 %v2312, %v2311
    %v2342 = vpack.c.b16 %v2314, %v2313
    %v2343 = vpack.c.b16 %v2316, %v2315
    %v2344 = vpack.c.b16 %v2318, %v2317
    %v2345 = vpack.c.b16 %v2320, %v2319
    %v2346 = vpack.c.b16 %v2322, %v2321
    %v2347 = vpack.c.b16 %v2324, %v2323
    %v2348 = vpack.c.b16 %v2326, %v2325
    %v2349 = vpack.c.b16 %v2328, %v2327
    %v2350 = vpack.c.b16 %v2330, %v2329
    %v2351 = vpack.c.b16 %v2332, %v2331
    %v2352 = vpack.c.b16 %v2334, %v2333
    %v2353 = vpack.c.b16 %v2336, %v2335
    %v2354 = vpack.c.b16 %v2338, %v2337
    %2371 = vmatprep.subr.bf16.mxu0 0
    %2372 = vmatpush1.bf16.msra.mxu0 %v2346
    %2373 = vmatprep.subr.bf16.mxu0 0
    %2374 = vmatpush1.bf16.msra.mxu0 %v2345
    %2375 = vmatprep.subr.bf16.mxu0 0
    %2376 = vmatpush1.bf16.msra.mxu0 %v2344
    %2377 = vmatprep.subr.bf16.mxu0 0
    %2378 = vmatpush1.bf16.msra.mxu0 %v2343
    %2379 = vmatprep.subr.bf16.mxu0 0
    %2380 = vmatpush1.bf16.msra.mxu0 %v2342
    %2381 = vmatprep.subr.bf16.mxu0 0
    %2382 = vmatpush1.bf16.msra.mxu0 %v2341
    %2383 = vmatprep.subr.bf16.mxu0 0
    %2384 = vmatpush1.bf16.msra.mxu0 %v2340
    %2385 = vmatprep.subr.bf16.mxu0 0
    %2386 = vmatpush1.bf16.msra.mxu0 %v2339
    %2387 = vmatprep.subr.bf16.mxu0 0
    %2388 = vmatpush2.bf16.msra.mxu0 %v2354
    %2389 = vmatprep.subr.bf16.mxu0 0
    %2390 = vmatpush2.bf16.msra.mxu0 %v2353
    %2391 = vmatprep.subr.bf16.mxu0 0
    %2392 = vmatpush2.bf16.msra.mxu0 %v2352
    %2393 = vmatprep.subr.bf16.mxu0 0
    %2394 = vmatpush2.bf16.msra.mxu0 %v2351
    %2395 = vmatprep.subr.bf16.mxu0 0
    %2396 = vmatpush2.bf16.msra.mxu0 %v2350
    %2397 = vmatprep.subr.bf16.mxu0 0
    %2398 = vmatpush2.bf16.msra.mxu0 %v2349
    %2399 = vmatprep.subr.bf16.mxu0 0
    %2400 = vmatpush2.bf16.msra.mxu0 %v2348
    %2401 = vmatprep.subr.bf16.mxu0 0
    %2402 = vmatpush2.bf16.msra.mxu0 %v2347
    %2403 = vmatprep.mubr.bf16.mxu0 %v2225
    %2404 = vmatmul.mubr.bf16.gmra.mxu0 %v2224
    %v2405 = vpop.f32.mrf.mxu0
    %v2406 = vadd.f32 %v2273, %v2405
    %v2407 = vpop.f32.mrf.mxu0
    %v2408 = vpop.f32.mrf.mxu0
    %v2409 = vadd.f32 %v2273, %v2408
    %v2410 = vpop.f32.mrf.mxu0
    %2411 = vmatprep.mubr.bf16.mxu0 %v2227
    %2412 = vmatmul.mubr.bf16.gmra.mxu0 %v2226
    %v2413 = vpop.f32.mrf.mxu0
    %v2414 = vpop.f32.mrf.mxu0
    %v2415 = vpop.f32.mrf.mxu0
    %v2416 = vadd.f32 %v2273, %v2415
    %v2417 = vpop.f32.mrf.mxu0
    %2418 = vmatprep.mubr.bf16.mxu0 %v2229
    %2419 = vmatmul.mubr.bf16.gmra.mxu0 %v2228
    %v2420 = vpop.f32.mrf.mxu0
    %v2421 = vadd.f32 %v2273, %v2420
    %v2422 = vpop.f32.mrf.mxu0
    %v2423 = vpop.f32.mrf.mxu0
    %v2424 = vpop.f32.mrf.mxu0
    %2425 = vmatprep.mubr.bf16.mxu0 %v2231
    %2426 = vmatmul.mubr.bf16.gmra.mxu0 %v2230
    %v2427 = vpop.f32.mrf.mxu0
    %v2428 = vadd.f32 %v2273, %v2427
    %v2429 = vpop.f32.mrf.mxu0
    %v2430 = vpop.f32.mrf.mxu0
    %v2431 = vadd.f32 %v2273, %v2430
    %v2432 = vpop.f32.mrf.mxu0
    %2433 = vmatprep.mubr.bf16.mxu0 %v2233
    %2434 = vmatmul.mubr.bf16.gmra.mxu0 %v2232
    %v2435 = vpop.f32.mrf.mxu0
    %v2436 = vpop.f32.mrf.mxu0
    %v2437 = vpop.f32.mrf.mxu0
    %v2438 = vadd.f32 %v2273, %v2437
    %v2439 = vpop.f32.mrf.mxu0
    %2440 = vmatprep.mubr.bf16.mxu0 %v2235
    %2441 = vmatmul.mubr.bf16.gmra.mxu0 %v2234
    %v2442 = vpop.f32.mrf.mxu0
    %v2443 = vadd.f32 %v2273, %v2442
    %v2444 = vpop.f32.mrf.mxu0
    %v2445 = vpop.f32.mrf.mxu0
    %v2446 = vpop.f32.mrf.mxu0
    %2447 = vdwg.mxu0
    %2450 = vrot.lane.b32.xlu0 %v2428, 127
    %v2451 = vpop.permute.xlu0 %2450
    %2452 = vrot.lane.b32.xlu0 %v2431, 127
    %v2453 = vpop.permute.xlu0 %2452
    %v2455 = vsel %vm81, %v2406, 0
    %v2458 = vsel %vm81, %v2409, 0
    %v2460 = vsel %vm81, %v2451, 0
    %v2462 = vsel %vm81, %v2453, 0
    %2464 = vmatprep.subr.mxu0 0.0
    %2465 = vmatpush1.xpose.msra.mxu0 0.0
    %2466 = vmatprep.subr.mxu0 0.0
    %2467 = vmatpush1.xpose.msra.mxu0 0.0
    %2468 = vmatprep.subr.mxu0 0.0
    %2469 = vmatpush1.xpose.msra.mxu0 0.0
    %2470 = vmatprep.subr.mxu0 0.0
    %2471 = vmatpush1.xpose.msra.mxu0 0.0
    %2472 = vmatprep.subr.mxu0 0.0
    %2473 = vmatpush1.xpose.msra.mxu0 0.0
    %2474 = vmatprep.subr.mxu0 0.0
    %2475 = vmatpush1.xpose.msra.mxu0 0.0
    %2476 = vmatprep.subr.mxu0 0.0
    %2477 = vmatpush1.xpose.msra.mxu0 0.0
    %2478 = vmatprep.subr.mxu0 0.0
    %2479 = vmatpush1.xpose.msra.mxu0 0.0
    %2480 = vmatprep.subr.mxu0 0.0
    %2481 = vmatpush1.xpose.msra.mxu0 0.0
    %2482 = vmatprep.subr.mxu0 0.0
    %2483 = vmatpush1.xpose.msra.mxu0 0.0
    %2484 = vmatprep.subr.mxu0 0.0
    %2485 = vmatpush1.xpose.msra.mxu0 0.0
    %2486 = vmatprep.subr.mxu0 0.0
    %2487 = vmatpush1.xpose.msra.mxu0 0.0
    %2488 = vmatprep.subr.mxu0 0.0
    %2489 = vmatpush1.xpose.msra.mxu0 0.0
    %2490 = vmatprep.subr.mxu0 0.0
    %2491 = vmatpush1.xpose.msra.mxu0 0.0
    %2492 = vmatprep.subr.mxu0 0.0
    %2493 = vmatpush1.xpose.msra.mxu0 %v2462
    %2494 = vmatprep.subr.mxu0 0.0
    %2495 = vmatpush1.xpose.msra.mxu0 %v2460
    %2496 = vmatprep.subr.mxu0 0.0
    %2497 = vmatpush2.xpose.msra.mxu0 0.0
    %2498 = vmatprep.subr.mxu0 0.0
    %2499 = vmatpush2.xpose.msra.mxu0 0.0
    %2500 = vmatprep.subr.mxu0 0.0
    %2501 = vmatpush2.xpose.msra.mxu0 0.0
    %2502 = vmatprep.subr.mxu0 0.0
    %2503 = vmatpush2.xpose.msra.mxu0 0.0
    %2504 = vmatprep.subr.mxu0 0.0
    %2505 = vmatpush2.xpose.msra.mxu0 0.0
    %2506 = vmatprep.subr.mxu0 0.0
    %2507 = vmatpush2.xpose.msra.mxu0 0.0
    %2508 = vmatprep.subr.mxu0 0.0
    %2509 = vmatpush2.xpose.msra.mxu0 0.0
    %2510 = vmatprep.subr.mxu0 0.0
    %2511 = vmatpush2.xpose.msra.mxu0 0.0
    %2512 = vmatprep.subr.mxu0 0.0
    %2513 = vmatpush2.xpose.msra.mxu0 0.0
    %2514 = vmatprep.subr.mxu0 0.0
    %2515 = vmatpush2.xpose.msra.mxu0 0.0
    %2516 = vmatprep.subr.mxu0 0.0
    %2517 = vmatpush2.xpose.msra.mxu0 0.0
    %2518 = vmatprep.subr.mxu0 0.0
    %2519 = vmatpush2.xpose.msra.mxu0 0.0
    %2520 = vmatprep.subr.mxu0 0.0
    %2521 = vmatpush2.xpose.msra.mxu0 0.0
    %2522 = vmatprep.subr.mxu0 0.0
    %2523 = vmatpush2.xpose.msra.mxu0 0.0
    %2524 = vmatprep.subr.mxu0 0.0
    %2525 = vmatpush2.xpose.msra.mxu0 0.0
    %2526 = vmatprep.subr.mxu0 0.0
    %2527 = vmatpush2.xpose.msra.mxu0 0.0
    %2528 = vmatprep.mubr.f32.mxu0 0.0
    %2529 = vmatmul.mubr.f32.gmra.mxu0 %v2455
    %v2530 = vpop.f32.mrf.mxu0
    %v2531 = vadd.f32 0.0, %v2530
    %v2532 = vpop.f32.mrf.mxu0
    %2533 = vmatprep.mubr.f32.mxu0 0.0
    %2534 = vmatmul.mubr.f32.gmra.mxu0 %v2458
    %v2535 = vpop.f32.mrf.mxu0
    %v2536 = vadd.f32 0.0, %v2535
    %v2537 = vpop.f32.mrf.mxu0
    %2538 = vdwg.mxu0
    %vm2539 = vcmp.gt.f32.partialorder %v2531, 0.0
    %vm2540 = vcmp.gt.f32.partialorder %v2536, 0.0
    %v2541 = vmul.f32 %v2531, 0.2
    %v2542 = vmul.f32 %v2536, 0.2
    %v2543 = vsel %vm2539, %v2531, %v2541
    %v2544 = vsel %vm2540, %v2536, %v2542
    %vm2545 = vcmask 130048
    %v2546 = vsel %vm2545, %v2543, -inf
    %2547 = vmax.xlane.f32.xlu0 %v2546
    %v2548 = vpop.xlane.xlu0 %2547
    %v2549 = vsel %vm2545, %v2544, -inf
    %2550 = vmax.xlane.f32.xlu0 %v2549
    %v2551 = vpop.xlane.xlu0 %2550
    %v2552 = vsub.f32 %v2543, %v2548
    %v2553 = vsub.f32 %v2544, %v2551
    %v2554 = vmul.f32 %v2552, 1.442695
    %v2555 = vpow.pop %v2554
    %v2556 = vmul.f32 %v2553, 1.442695
    %v2557 = vpow.pop %v2556
    %v2558 = vsel %vm2545, %v2555, 0.0
    %2559 = vadd.xlane.f32.xlu0 %v2558
    %v2560 = vpop.xlane.xlu0 %2559
    %v2561 = vsel %vm2545, %v2557, 0.0
    %2562 = vadd.xlane.f32.xlu0 %v2561
    %v2563 = vpop.xlane.xlu0 %2562
    %v2564 = vrcp.pop %v2560
    %v2565 = vmul.f32 %v2555, %v2564
    %v2566 = vrcp.pop %v2563
    %v2567 = vmul.f32 %v2557, %v2566
    %2568 = vst.msk [vmem:[#allocation5] sm:$0xff] %vm2545, %v2565
    %2569 = vst.msk [vmem:[#allocation5 + $0x8] sm:$0xff] %vm2545, %v2567
    %v2571 = vsel %vm2545, %v2565, 0
    %v2574 = vsel %vm2545, %v2567, 0
    %2576 = vmatprep.subr.mxu0 0.0
    %2577 = vmatpush1.msra.mxu0 0.0
    %2578 = vmatprep.subr.mxu0 0.0
    %2579 = vmatpush1.msra.mxu0 0.0
    %2580 = vmatprep.subr.mxu0 0.0
    %2581 = vmatpush1.msra.mxu0 0.0
    %2582 = vmatprep.subr.mxu0 0.0
    %2583 = vmatpush1.msra.mxu0 0.0
    %2584 = vmatprep.subr.mxu0 0.0
    %2585 = vmatpush1.msra.mxu0 0.0
    %2586 = vmatprep.subr.mxu0 0.0
    %2587 = vmatpush1.msra.mxu0 0.0
    %2588 = vmatprep.subr.mxu0 0.0
    %2589 = vmatpush1.msra.mxu0 0.0
    %2590 = vmatprep.subr.mxu0 0.0
    %2591 = vmatpush1.msra.mxu0 0.0
    %2592 = vmatprep.subr.mxu0 0.0
    %2593 = vmatpush1.msra.mxu0 0.0
    %2594 = vmatprep.subr.mxu0 0.0
    %2595 = vmatpush1.msra.mxu0 0.0
    %2596 = vmatprep.subr.mxu0 0.0
    %2597 = vmatpush1.msra.mxu0 0.0
    %2598 = vmatprep.subr.mxu0 0.0
    %2599 = vmatpush1.msra.mxu0 0.0
    %2600 = vmatprep.subr.mxu0 0.0
    %2601 = vmatpush1.msra.mxu0 0.0
    %2602 = vmatprep.subr.mxu0 0.0
    %2603 = vmatpush1.msra.mxu0 0.0
    %2604 = vmatprep.subr.mxu0 %v2205
    %2605 = vmatpush1.msra.mxu0 %v2204
    %2606 = vmatprep.subr.mxu0 %v2203
    %2607 = vmatpush1.msra.mxu0 %v2202
    %2608 = vmatprep.subr.mxu0 0.0
    %2609 = vmatpush2.msra.mxu0 0.0
    %2610 = vmatprep.subr.mxu0 0.0
    %2611 = vmatpush2.msra.mxu0 0.0
    %2612 = vmatprep.subr.mxu0 0.0
    %2613 = vmatpush2.msra.mxu0 0.0
    %2614 = vmatprep.subr.mxu0 0.0
    %2615 = vmatpush2.msra.mxu0 0.0
    %2616 = vmatprep.subr.mxu0 0.0
    %2617 = vmatpush2.msra.mxu0 0.0
    %2618 = vmatprep.subr.mxu0 0.0
    %2619 = vmatpush2.msra.mxu0 0.0
    %2620 = vmatprep.subr.mxu0 0.0
    %2621 = vmatpush2.msra.mxu0 0.0
    %2622 = vmatprep.subr.mxu0 0.0
    %2623 = vmatpush2.msra.mxu0 0.0
    %2624 = vmatprep.subr.mxu0 0.0
    %2625 = vmatpush2.msra.mxu0 0.0
    %2626 = vmatprep.subr.mxu0 0.0
    %2627 = vmatpush2.msra.mxu0 0.0
    %2628 = vmatprep.subr.mxu0 0.0
    %2629 = vmatpush2.msra.mxu0 0.0
    %2630 = vmatprep.subr.mxu0 0.0
    %2631 = vmatpush2.msra.mxu0 0.0
    %2632 = vmatprep.subr.mxu0 0.0
    %2633 = vmatpush2.msra.mxu0 0.0
    %2634 = vmatprep.subr.mxu0 0.0
    %2635 = vmatpush2.msra.mxu0 0.0
    %2636 = vmatprep.subr.mxu0 0.0
    %2637 = vmatpush2.msra.mxu0 0.0
    %2638 = vmatprep.subr.mxu0 0.0
    %2639 = vmatpush2.msra.mxu0 0.0
    %2640 = vmatprep.mubr.f32.mxu0 0.0
    %2641 = vmatmul.mubr.f32.gmra.mxu0 %v2571
    %v2642 = vpop.f32.mrf.mxu0
    %v2643 = vadd.f32 0.0, %v2642
    %v2644 = vpop.f32.mrf.mxu0
    %v2645 = vadd.f32 0.0, %v2644
    %2646 = vmatprep.mubr.f32.mxu0 0.0
    %2647 = vmatmul.mubr.f32.gmra.mxu0 %v2574
    %v2648 = vpop.f32.mrf.mxu0
    %v2649 = vadd.f32 0.0, %v2648
    %v2650 = vpop.f32.mrf.mxu0
    %v2651 = vadd.f32 0.0, %v2650
    %2652 = vdwg.mxu0
    %2655 = vrot.lane.b32.xlu0 %v2438, 127
    %v2656 = vpop.permute.xlu0 %2655
    %2657 = vrot.lane.b32.xlu0 %v2443, 127
    %v2658 = vpop.permute.xlu0 %2657
    %v2660 = vsel %vm81, %v2416, 0
    %v2663 = vsel %vm81, %v2421, 0
    %v2665 = vsel %vm81, %v2656, 0
    %v2667 = vsel %vm81, %v2658, 0
    %2669 = vmatprep.subr.mxu0 0.0
    %2670 = vmatpush1.xpose.msra.mxu0 0.0
    %2671 = vmatprep.subr.mxu0 0.0
    %2672 = vmatpush1.xpose.msra.mxu0 0.0
    %2673 = vmatprep.subr.mxu0 0.0
    %2674 = vmatpush1.xpose.msra.mxu0 0.0
    %2675 = vmatprep.subr.mxu0 0.0
    %2676 = vmatpush1.xpose.msra.mxu0 0.0
    %2677 = vmatprep.subr.mxu0 0.0
    %2678 = vmatpush1.xpose.msra.mxu0 0.0
    %2679 = vmatprep.subr.mxu0 0.0
    %2680 = vmatpush1.xpose.msra.mxu0 0.0
    %2681 = vmatprep.subr.mxu0 0.0
    %2682 = vmatpush1.xpose.msra.mxu0 0.0
    %2683 = vmatprep.subr.mxu0 0.0
    %2684 = vmatpush1.xpose.msra.mxu0 0.0
    %2685 = vmatprep.subr.mxu0 0.0
    %2686 = vmatpush1.xpose.msra.mxu0 0.0
    %2687 = vmatprep.subr.mxu0 0.0
    %2688 = vmatpush1.xpose.msra.mxu0 0.0
    %2689 = vmatprep.subr.mxu0 0.0
    %2690 = vmatpush1.xpose.msra.mxu0 0.0
    %2691 = vmatprep.subr.mxu0 0.0
    %2692 = vmatpush1.xpose.msra.mxu0 0.0
    %2693 = vmatprep.subr.mxu0 0.0
    %2694 = vmatpush1.xpose.msra.mxu0 0.0
    %2695 = vmatprep.subr.mxu0 0.0
    %2696 = vmatpush1.xpose.msra.mxu0 0.0
    %2697 = vmatprep.subr.mxu0 0.0
    %2698 = vmatpush1.xpose.msra.mxu0 %v2667
    %2699 = vmatprep.subr.mxu0 0.0
    %2700 = vmatpush1.xpose.msra.mxu0 %v2665
    %2701 = vmatprep.subr.mxu0 0.0
    %2702 = vmatpush2.xpose.msra.mxu0 0.0
    %2703 = vmatprep.subr.mxu0 0.0
    %2704 = vmatpush2.xpose.msra.mxu0 0.0
    %2705 = vmatprep.subr.mxu0 0.0
    %2706 = vmatpush2.xpose.msra.mxu0 0.0
    %2707 = vmatprep.subr.mxu0 0.0
    %2708 = vmatpush2.xpose.msra.mxu0 0.0
    %2709 = vmatprep.subr.mxu0 0.0
    %2710 = vmatpush2.xpose.msra.mxu0 0.0
    %2711 = vmatprep.subr.mxu0 0.0
    %2712 = vmatpush2.xpose.msra.mxu0 0.0
    %2713 = vmatprep.subr.mxu0 0.0
    %2714 = vmatpush2.xpose.msra.mxu0 0.0
    %2715 = vmatprep.subr.mxu0 0.0
    %2716 = vmatpush2.xpose.msra.mxu0 0.0
    %2717 = vmatprep.subr.mxu0 0.0
    %2718 = vmatpush2.xpose.msra.mxu0 0.0
    %2719 = vmatprep.subr.mxu0 0.0
    %2720 = vmatpush2.xpose.msra.mxu0 0.0
    %2721 = vmatprep.subr.mxu0 0.0
    %2722 = vmatpush2.xpose.msra.mxu0 0.0
    %2723 = vmatprep.subr.mxu0 0.0
    %2724 = vmatpush2.xpose.msra.mxu0 0.0
    %2725 = vmatprep.subr.mxu0 0.0
    %2726 = vmatpush2.xpose.msra.mxu0 0.0
    %2727 = vmatprep.subr.mxu0 0.0
    %2728 = vmatpush2.xpose.msra.mxu0 0.0
    %2729 = vmatprep.subr.mxu0 0.0
    %2730 = vmatpush2.xpose.msra.mxu0 0.0
    %2731 = vmatprep.subr.mxu0 0.0
    %2732 = vmatpush2.xpose.msra.mxu0 0.0
    %2733 = vmatprep.mubr.f32.mxu0 0.0
    %2734 = vmatmul.mubr.f32.gmra.mxu0 %v2660
    %v2735 = vpop.f32.mrf.mxu0
    %v2736 = vadd.f32 0.0, %v2735
    %v2737 = vpop.f32.mrf.mxu0
    %2738 = vmatprep.mubr.f32.mxu0 0.0
    %2739 = vmatmul.mubr.f32.gmra.mxu0 %v2663
    %v2740 = vpop.f32.mrf.mxu0
    %v2741 = vadd.f32 0.0, %v2740
    %v2742 = vpop.f32.mrf.mxu0
    %2743 = vdwg.mxu0
    %vm2744 = vcmp.gt.f32.partialorder %v2736, 0.0
    %vm2745 = vcmp.gt.f32.partialorder %v2741, 0.0
    %v2746 = vmul.f32 %v2736, 0.2
    %v2747 = vmul.f32 %v2741, 0.2
    %v2748 = vsel %vm2744, %v2736, %v2746
    %v2749 = vsel %vm2745, %v2741, %v2747
    %v2750 = vsel %vm2545, %v2748, -inf
    %2751 = vmax.xlane.f32.xlu0 %v2750
    %v2752 = vpop.xlane.xlu0 %2751
    %v2753 = vsel %vm2545, %v2749, -inf
    %2754 = vmax.xlane.f32.xlu0 %v2753
    %v2755 = vpop.xlane.xlu0 %2754
    %v2756 = vsub.f32 %v2748, %v2752
    %v2757 = vsub.f32 %v2749, %v2755
    %v2758 = vmul.f32 %v2756, 1.442695
    %v2759 = vpow.pop %v2758
    %v2760 = vmul.f32 %v2757, 1.442695
    %v2761 = vpow.pop %v2760
    %v2762 = vsel %vm2545, %v2759, 0.0
    %2763 = vadd.xlane.f32.xlu0 %v2762
    %v2764 = vpop.xlane.xlu0 %2763
    %v2765 = vsel %vm2545, %v2761, 0.0
    %2766 = vadd.xlane.f32.xlu0 %v2765
    %v2767 = vpop.xlane.xlu0 %2766
    %v2768 = vrcp.pop %v2764
    %v2769 = vmul.f32 %v2759, %v2768
    %v2770 = vrcp.pop %v2767
    %v2771 = vmul.f32 %v2761, %v2770
    %s2772 = scalar_lea.vmem [#allocation5], 16
    %2773 = vst.msk [vmem:[%s2772] sm:$0xff] %vm2545, %v2769
    %2774 = vst.msk [vmem:[%s2772 + $0x8] sm:$0xff] %vm2545, %v2771
    %v2776 = vsel %vm2545, %v2769, 0
    %v2779 = vsel %vm2545, %v2771, 0
    %2781 = vmatprep.subr.mxu0 0.0
    %2782 = vmatpush1.msra.mxu0 0.0
    %2783 = vmatprep.subr.mxu0 0.0
    %2784 = vmatpush1.msra.mxu0 0.0
    %2785 = vmatprep.subr.mxu0 0.0
    %2786 = vmatpush1.msra.mxu0 0.0
    %2787 = vmatprep.subr.mxu0 0.0
    %2788 = vmatpush1.msra.mxu0 0.0
    %2789 = vmatprep.subr.mxu0 0.0
    %2790 = vmatpush1.msra.mxu0 0.0
    %2791 = vmatprep.subr.mxu0 0.0
    %2792 = vmatpush1.msra.mxu0 0.0
    %2793 = vmatprep.subr.mxu0 0.0
    %2794 = vmatpush1.msra.mxu0 0.0
    %2795 = vmatprep.subr.mxu0 0.0
    %2796 = vmatpush1.msra.mxu0 0.0
    %2797 = vmatprep.subr.mxu0 0.0
    %2798 = vmatpush1.msra.mxu0 0.0
    %2799 = vmatprep.subr.mxu0 0.0
    %2800 = vmatpush1.msra.mxu0 0.0
    %2801 = vmatprep.subr.mxu0 0.0
    %2802 = vmatpush1.msra.mxu0 0.0
    %2803 = vmatprep.subr.mxu0 0.0
    %2804 = vmatpush1.msra.mxu0 0.0
    %2805 = vmatprep.subr.mxu0 0.0
    %2806 = vmatpush1.msra.mxu0 0.0
    %2807 = vmatprep.subr.mxu0 0.0
    %2808 = vmatpush1.msra.mxu0 0.0
    %2809 = vmatprep.subr.mxu0 %v2211
    %2810 = vmatpush1.msra.mxu0 %v2210
    %2811 = vmatprep.subr.mxu0 %v2209
    %2812 = vmatpush1.msra.mxu0 %v2208
    %2813 = vmatprep.subr.mxu0 0.0
    %2814 = vmatpush2.msra.mxu0 0.0
    %2815 = vmatprep.subr.mxu0 0.0
    %2816 = vmatpush2.msra.mxu0 0.0
    %2817 = vmatprep.subr.mxu0 0.0
    %2818 = vmatpush2.msra.mxu0 0.0
    %2819 = vmatprep.subr.mxu0 0.0
    %2820 = vmatpush2.msra.mxu0 0.0
    %2821 = vmatprep.subr.mxu0 0.0
    %2822 = vmatpush2.msra.mxu0 0.0
    %2823 = vmatprep.subr.mxu0 0.0
    %2824 = vmatpush2.msra.mxu0 0.0
    %2825 = vmatprep.subr.mxu0 0.0
    %2826 = vmatpush2.msra.mxu0 0.0
    %2827 = vmatprep.subr.mxu0 0.0
    %2828 = vmatpush2.msra.mxu0 0.0
    %2829 = vmatprep.subr.mxu0 0.0
    %2830 = vmatpush2.msra.mxu0 0.0
    %2831 = vmatprep.subr.mxu0 0.0
    %2832 = vmatpush2.msra.mxu0 0.0
    %2833 = vmatprep.subr.mxu0 0.0
    %2834 = vmatpush2.msra.mxu0 0.0
    %2835 = vmatprep.subr.mxu0 0.0
    %2836 = vmatpush2.msra.mxu0 0.0
    %2837 = vmatprep.subr.mxu0 0.0
    %2838 = vmatpush2.msra.mxu0 0.0
    %2839 = vmatprep.subr.mxu0 0.0
    %2840 = vmatpush2.msra.mxu0 0.0
    %2841 = vmatprep.subr.mxu0 0.0
    %2842 = vmatpush2.msra.mxu0 0.0
    %2843 = vmatprep.subr.mxu0 0.0
    %2844 = vmatpush2.msra.mxu0 0.0
    %2845 = vmatprep.mubr.f32.mxu0 0.0
    %2846 = vmatmul.mubr.f32.gmra.mxu0 %v2776
    %v2847 = vpop.f32.mrf.mxu0
    %v2848 = vadd.f32 0.0, %v2847
    %v2849 = vpop.f32.mrf.mxu0
    %v2850 = vadd.f32 0.0, %v2849
    %2851 = vmatprep.mubr.f32.mxu0 0.0
    %2852 = vmatmul.mubr.f32.gmra.mxu0 %v2779
    %v2853 = vpop.f32.mrf.mxu0
    %v2854 = vadd.f32 0.0, %v2853
    %v2855 = vpop.f32.mrf.mxu0
    %v2856 = vadd.f32 0.0, %v2855
    %2857 = vdwg.mxu0
    %v2858 = vmul.f32 %v2643, %v674
    %v2859 = vmul.f32 %v2645, %v674
    %v2860 = vmul.f32 %v2214, %v674
    %v2861 = vmul.f32 %v2215, %v674
    %v2862 = vmul.f32 %v2649, %v679
    %v2863 = vmul.f32 %v2651, %v679
    %v2864 = vmul.f32 %v2216, %v679
    %v2865 = vmul.f32 %v2217, %v679
    %v2866 = vmul.f32 %v2848, %v689
    %v2867 = vmul.f32 %v2850, %v689
    %v2868 = vmul.f32 %v2220, %v689
    %v2869 = vmul.f32 %v2221, %v689
    %v2870 = vmul.f32 %v2854, %v694
    %v2871 = vmul.f32 %v2856, %v694
    %v2872 = vmul.f32 %v2222, %v694
    %v2873 = vmul.f32 %v2223, %v694
    %v2874 = vld [vmem:[%s15] sm:$0xf]
    %v2876 = vlaneseq
    %v2877 = vshrl.u32 %v2876, 7
    %v2878 = vsub.s32 0, %v2877
    %v2879 = vrot.slane %v2874, %v2878
    %v2880 = vlaneseq
    %v2881 = vshrl.u32 %v2880, 7
    %v2882 = vsub.s32 1, %v2881
    %v2883 = vrot.slane %v2874, %v2882
    %v2884 = vlaneseq
    %v2885 = vshrl.u32 %v2884, 7
    %v2886 = vsub.s32 2, %v2885
    %v2887 = vrot.slane %v2874, %v2886
    %v2888 = vlaneseq
    %v2889 = vshrl.u32 %v2888, 7
    %v2890 = vsub.s32 3, %v2889
    %v2891 = vrot.slane %v2874, %v2890
    %v2896 = vmul.f32 %v2858, %v2879
    %v2897 = vmul.f32 %v2859, %v2883
    %v2898 = vmul.f32 %v2860, %v2887
    %v2899 = vmul.f32 %v2861, %v2891
    %v2900 = vmul.f32 %v2862, %v2879
    %v2901 = vmul.f32 %v2863, %v2883
    %v2902 = vmul.f32 %v2864, %v2887
    %v2903 = vmul.f32 %v2865, %v2891
    %v2904 = vmul.f32 %v2866, %v2879
    %v2905 = vmul.f32 %v2867, %v2883
    %v2906 = vmul.f32 %v2868, %v2887
    %v2907 = vmul.f32 %v2869, %v2891
    %v2908 = vmul.f32 %v2870, %v2879
    %v2909 = vmul.f32 %v2871, %v2883
    %v2910 = vmul.f32 %v2872, %v2887
    %v2911 = vmul.f32 %v2873, %v2891
    %v2912 = vld [vmem:[%s16] sm:$0xf]
    %v2914 = vlaneseq
    %v2915 = vshrl.u32 %v2914, 7
    %v2916 = vsub.s32 0, %v2915
    %v2917 = vrot.slane %v2912, %v2916
    %v2918 = vlaneseq
    %v2919 = vshrl.u32 %v2918, 7
    %v2920 = vsub.s32 1, %v2919
    %v2921 = vrot.slane %v2912, %v2920
    %v2922 = vlaneseq
    %v2923 = vshrl.u32 %v2922, 7
    %v2924 = vsub.s32 2, %v2923
    %v2925 = vrot.slane %v2912, %v2924
    %v2926 = vlaneseq
    %v2927 = vshrl.u32 %v2926, 7
    %v2928 = vsub.s32 3, %v2927
    %v2929 = vrot.slane %v2912, %v2928
    %v2934 = vadd.f32 %v2896, %v2917
    %v2935 = vadd.f32 %v2897, %v2921
    %v2936 = vadd.f32 %v2898, %v2925
    %v2937 = vadd.f32 %v2899, %v2929
    %v2938 = vadd.f32 %v2900, %v2917
    %v2939 = vadd.f32 %v2901, %v2921
    %v2940 = vadd.f32 %v2902, %v2925
    %v2941 = vadd.f32 %v2903, %v2929
    %v2942 = vadd.f32 %v2904, %v2917
    %v2943 = vadd.f32 %v2905, %v2921
    %v2944 = vadd.f32 %v2906, %v2925
    %v2945 = vadd.f32 %v2907, %v2929
    %v2946 = vadd.f32 %v2908, %v2917
    %v2947 = vadd.f32 %v2909, %v2921
    %v2948 = vadd.f32 %v2910, %v2925
    %v2949 = vadd.f32 %v2911, %v2929
    %v2950 = vmax.f32 %v2934, 0.0
    %v2951 = vmax.f32 %v2935, 0.0
    %v2952 = vmax.f32 %v2936, 0.0
    %v2953 = vmax.f32 %v2937, 0.0
    %v2954 = vmax.f32 %v2938, 0.0
    %v2955 = vmax.f32 %v2939, 0.0
    %v2956 = vmax.f32 %v2940, 0.0
    %v2957 = vmax.f32 %v2941, 0.0
    %v2958 = vmax.f32 %v2942, 0.0
    %v2959 = vmax.f32 %v2943, 0.0
    %v2960 = vmax.f32 %v2944, 0.0
    %v2961 = vmax.f32 %v2945, 0.0
    %v2962 = vmax.f32 %v2946, 0.0
    %v2963 = vmax.f32 %v2947, 0.0
    %v2964 = vmax.f32 %v2948, 0.0
    %v2965 = vmax.f32 %v2949, 0.0
    %v2966 = vmul.f32 %v2950, %v674
    %v2967 = vmul.f32 %v2951, %v674
    %v2968 = vmul.f32 %v2952, %v674
    %v2969 = vmul.f32 %v2953, %v674
    %v2970 = vmul.f32 %v2954, %v679
    %v2971 = vmul.f32 %v2955, %v679
    %v2972 = vmul.f32 %v2956, %v679
    %v2973 = vmul.f32 %v2957, %v679
    %v2974 = vmul.f32 %v2958, %v689
    %v2975 = vmul.f32 %v2959, %v689
    %v2976 = vmul.f32 %v2960, %v689
    %v2977 = vmul.f32 %v2961, %v689
    %v2978 = vmul.f32 %v2962, %v694
    %v2979 = vmul.f32 %v2963, %v694
    %v2980 = vmul.f32 %v2964, %v694
    %v2981 = vmul.f32 %v2965, %v694
    %v2982 = vpack.c.bf16 %v2970, %v2966
    %v2983 = vpack.c.bf16 %v2971, %v2967
    %v2984 = vpack.c.bf16 %v2972, %v2968
    %v2985 = vpack.c.bf16 %v2973, %v2969
    %v2986 = vpack.c.bf16 %v2978, %v2974
    %v2987 = vpack.c.bf16 %v2979, %v2975
    %v2988 = vpack.c.bf16 %v2980, %v2976
    %v2989 = vpack.c.bf16 %v2981, %v2977
    %v2990 = vld [vmem:[%s17] sm:$0xf]
    %v2991 = vld [vmem:[%s17 + $0x4] sm:$0xf]
    %v2992 = vld [vmem:[%s17 + $0x8] sm:$0xf]
    %v2993 = vld [vmem:[%s17 + $0xc] sm:$0xf]
    %v2994 = vld [vmem:[%s17 + $0x10] sm:$0xf]
    %v2995 = vld [vmem:[%s17 + $0x14] sm:$0xf]
    %v2996 = vld [vmem:[%s17 + $0x18] sm:$0xf]
    %v2997 = vld [vmem:[%s17 + $0x1c] sm:$0xf]
    %v2998 = vld [vmem:[%s17 + $0x20] sm:$0xf]
    %v2999 = vld [vmem:[%s17 + $0x24] sm:$0xf]
    %v3000 = vld [vmem:[%s17 + $0x28] sm:$0xf]
    %v3001 = vld [vmem:[%s17 + $0x2c] sm:$0xf]
    %v3002 = vld [vmem:[%s17 + $0x30] sm:$0xf]
    %v3003 = vld [vmem:[%s17 + $0x34] sm:$0xf]
    %v3004 = vld [vmem:[%s17 + $0x38] sm:$0xf]
    %v3005 = vld [vmem:[%s17 + $0x3c] sm:$0xf]
    %v3006 = vld [vmem:[%s17 + $0x40] sm:$0xf]
    %v3007 = vld [vmem:[%s17 + $0x44] sm:$0xf]
    %v3008 = vld [vmem:[%s17 + $0x48] sm:$0xf]
    %v3009 = vld [vmem:[%s17 + $0x4c] sm:$0xf]
    %v3010 = vld [vmem:[%s17 + $0x50] sm:$0xf]
    %v3011 = vld [vmem:[%s17 + $0x54] sm:$0xf]
    %v3012 = vld [vmem:[%s17 + $0x58] sm:$0xf]
    %v3013 = vld [vmem:[%s17 + $0x5c] sm:$0xf]
    %v3014 = vld [vmem:[%s17 + $0x60] sm:$0xf]
    %v3015 = vld [vmem:[%s17 + $0x64] sm:$0xf]
    %v3016 = vld [vmem:[%s17 + $0x68] sm:$0xf]
    %v3017 = vld [vmem:[%s17 + $0x6c] sm:$0xf]
    %v3018 = vld [vmem:[%s17 + $0x70] sm:$0xf]
    %v3019 = vld [vmem:[%s17 + $0x74] sm:$0xf]
    %v3020 = vld [vmem:[%s17 + $0x78] sm:$0xf]
    %v3021 = vld [vmem:[%s17 + $0x7c] sm:$0xf]
    %v3022 = vld [vmem:[%s17 + $0x80] sm:$0xf]
    %v3023 = vld [vmem:[%s17 + $0x84] sm:$0xf]
    %v3024 = vld [vmem:[%s17 + $0x88] sm:$0xf]
    %v3025 = vld [vmem:[%s17 + $0x8c] sm:$0xf]
    %v3026 = vld [vmem:[%s17 + $0x90] sm:$0xf]
    %v3027 = vld [vmem:[%s17 + $0x94] sm:$0xf]
    %v3028 = vld [vmem:[%s17 + $0x98] sm:$0xf]
    %v3029 = vld [vmem:[%s17 + $0x9c] sm:$0xf]
    %v3030 = vld [vmem:[%s17 + $0xa0] sm:$0xf]
    %v3031 = vld [vmem:[%s17 + $0xa4] sm:$0xf]
    %v3032 = vld [vmem:[%s17 + $0xa8] sm:$0xf]
    %v3033 = vld [vmem:[%s17 + $0xac] sm:$0xf]
    %v3034 = vld [vmem:[%s17 + $0xb0] sm:$0xf]
    %v3035 = vld [vmem:[%s17 + $0xb4] sm:$0xf]
    %v3036 = vld [vmem:[%s17 + $0xb8] sm:$0xf]
    %v3037 = vld [vmem:[%s17 + $0xbc] sm:$0xf]
    %v3038 = vld [vmem:[%s17 + $0xc0] sm:$0xf]
    %v3039 = vld [vmem:[%s17 + $0xc4] sm:$0xf]
    %v3040 = vld [vmem:[%s17 + $0xc8] sm:$0xf]
    %v3041 = vld [vmem:[%s17 + $0xcc] sm:$0xf]
    %v3042 = vld [vmem:[%s17 + $0xd0] sm:$0xf]
    %v3043 = vld [vmem:[%s17 + $0xd4] sm:$0xf]
    %v3044 = vld [vmem:[%s17 + $0xd8] sm:$0xf]
    %v3045 = vld [vmem:[%s17 + $0xdc] sm:$0xf]
    %v3046 = vld [vmem:[%s17 + $0xe0] sm:$0xf]
    %v3047 = vld [vmem:[%s17 + $0xe4] sm:$0xf]
    %v3048 = vld [vmem:[%s17 + $0xe8] sm:$0xf]
    %v3049 = vld [vmem:[%s17 + $0xec] sm:$0xf]
    %v3050 = vld [vmem:[%s17 + $0xf0] sm:$0xf]
    %v3051 = vld [vmem:[%s17 + $0xf4] sm:$0xf]
    %v3052 = vld [vmem:[%s17 + $0xf8] sm:$0xf]
    %v3053 = vld [vmem:[%s17 + $0xfc] sm:$0xf]
    %v3054 = vld [vmem:[#allocation4] sm:$0x1]
    %v3056 = vlaneseq
    %v3057 = vshrl.u32 %v3056, 7
    %v3058 = vsub.s32 0, %v3057
    %v3059 = vrot.slane %v3054, %v3058
    %v3125 = vunpack.c.l.b16 %v2990
    %v3126 = vunpack.c.l.b16 %v2991
    %v3127 = vunpack.c.l.b16 %v2992
    %v3128 = vunpack.c.l.b16 %v2993
    %v3129 = vunpack.c.l.b16 %v2994
    %v3130 = vunpack.c.l.b16 %v2995
    %v3131 = vunpack.c.l.b16 %v2996
    %v3132 = vunpack.c.l.b16 %v2997
    %v3133 = vunpack.c.l.b16 %v2998
    %v3134 = vunpack.c.l.b16 %v2999
    %v3135 = vunpack.c.l.b16 %v3000
    %v3136 = vunpack.c.l.b16 %v3001
    %v3137 = vunpack.c.l.b16 %v3002
    %v3138 = vunpack.c.l.b16 %v3003
    %v3139 = vunpack.c.l.b16 %v3004
    %v3140 = vunpack.c.l.b16 %v3005
    %v3141 = vunpack.c.l.b16 %v3006
    %v3142 = vunpack.c.l.b16 %v3007
    %v3143 = vunpack.c.l.b16 %v3008
    %v3144 = vunpack.c.l.b16 %v3009
    %v3145 = vunpack.c.l.b16 %v3010
    %v3146 = vunpack.c.l.b16 %v3011
    %v3147 = vunpack.c.l.b16 %v3012
    %v3148 = vunpack.c.l.b16 %v3013
    %v3149 = vunpack.c.l.b16 %v3014
    %v3150 = vunpack.c.l.b16 %v3015
    %v3151 = vunpack.c.l.b16 %v3016
    %v3152 = vunpack.c.l.b16 %v3017
    %v3153 = vunpack.c.l.b16 %v3018
    %v3154 = vunpack.c.l.b16 %v3019
    %v3155 = vunpack.c.l.b16 %v3020
    %v3156 = vunpack.c.l.b16 %v3021
    %v3157 = vunpack.c.l.b16 %v3022
    %v3158 = vunpack.c.l.b16 %v3023
    %v3159 = vunpack.c.l.b16 %v3024
    %v3160 = vunpack.c.l.b16 %v3025
    %v3161 = vunpack.c.l.b16 %v3026
    %v3162 = vunpack.c.l.b16 %v3027
    %v3163 = vunpack.c.l.b16 %v3028
    %v3164 = vunpack.c.l.b16 %v3029
    %v3165 = vunpack.c.l.b16 %v3030
    %v3166 = vunpack.c.l.b16 %v3031
    %v3167 = vunpack.c.l.b16 %v3032
    %v3168 = vunpack.c.l.b16 %v3033
    %v3169 = vunpack.c.l.b16 %v3034
    %v3170 = vunpack.c.l.b16 %v3035
    %v3171 = vunpack.c.l.b16 %v3036
    %v3172 = vunpack.c.l.b16 %v3037
    %v3173 = vunpack.c.l.b16 %v3038
    %v3174 = vunpack.c.l.b16 %v3039
    %v3175 = vunpack.c.l.b16 %v3040
    %v3176 = vunpack.c.l.b16 %v3041
    %v3177 = vunpack.c.l.b16 %v3042
    %v3178 = vunpack.c.l.b16 %v3043
    %v3179 = vunpack.c.l.b16 %v3044
    %v3180 = vunpack.c.l.b16 %v3045
    %v3181 = vunpack.c.l.b16 %v3046
    %v3182 = vunpack.c.l.b16 %v3047
    %v3183 = vunpack.c.l.b16 %v3048
    %v3184 = vunpack.c.l.b16 %v3049
    %v3185 = vunpack.c.l.b16 %v3050
    %v3186 = vunpack.c.l.b16 %v3051
    %v3187 = vunpack.c.l.b16 %v3052
    %v3188 = vunpack.c.l.b16 %v3053
    %v3189 = vpack.c.b16 %v3126, %v3125
    %v3190 = vpack.c.b16 %v3128, %v3127
    %v3191 = vpack.c.b16 %v3130, %v3129
    %v3192 = vpack.c.b16 %v3132, %v3131
    %v3193 = vpack.c.b16 %v3134, %v3133
    %v3194 = vpack.c.b16 %v3136, %v3135
    %v3195 = vpack.c.b16 %v3138, %v3137
    %v3196 = vpack.c.b16 %v3140, %v3139
    %v3197 = vpack.c.b16 %v3142, %v3141
    %v3198 = vpack.c.b16 %v3144, %v3143
    %v3199 = vpack.c.b16 %v3146, %v3145
    %v3200 = vpack.c.b16 %v3148, %v3147
    %v3201 = vpack.c.b16 %v3150, %v3149
    %v3202 = vpack.c.b16 %v3152, %v3151
    %v3203 = vpack.c.b16 %v3154, %v3153
    %v3204 = vpack.c.b16 %v3156, %v3155
    %v3205 = vpack.c.b16 %v3158, %v3157
    %v3206 = vpack.c.b16 %v3160, %v3159
    %v3207 = vpack.c.b16 %v3162, %v3161
    %v3208 = vpack.c.b16 %v3164, %v3163
    %v3209 = vpack.c.b16 %v3166, %v3165
    %v3210 = vpack.c.b16 %v3168, %v3167
    %v3211 = vpack.c.b16 %v3170, %v3169
    %v3212 = vpack.c.b16 %v3172, %v3171
    %v3213 = vpack.c.b16 %v3174, %v3173
    %v3214 = vpack.c.b16 %v3176, %v3175
    %v3215 = vpack.c.b16 %v3178, %v3177
    %v3216 = vpack.c.b16 %v3180, %v3179
    %v3217 = vpack.c.b16 %v3182, %v3181
    %v3218 = vpack.c.b16 %v3184, %v3183
    %v3219 = vpack.c.b16 %v3186, %v3185
    %v3220 = vpack.c.b16 %v3188, %v3187
    %3253 = vmatprep.subr.bf16.mxu0 0
    %3254 = vmatpush1.bf16.msra.mxu0 %v3196
    %3255 = vmatprep.subr.bf16.mxu0 0
    %3256 = vmatpush1.bf16.msra.mxu0 %v3195
    %3257 = vmatprep.subr.bf16.mxu0 0
    %3258 = vmatpush1.bf16.msra.mxu0 %v3194
    %3259 = vmatprep.subr.bf16.mxu0 0
    %3260 = vmatpush1.bf16.msra.mxu0 %v3193
    %3261 = vmatprep.subr.bf16.mxu0 0
    %3262 = vmatpush1.bf16.msra.mxu0 %v3192
    %3263 = vmatprep.subr.bf16.mxu0 0
    %3264 = vmatpush1.bf16.msra.mxu0 %v3191
    %3265 = vmatprep.subr.bf16.mxu0 0
    %3266 = vmatpush1.bf16.msra.mxu0 %v3190
    %3267 = vmatprep.subr.bf16.mxu0 0
    %3268 = vmatpush1.bf16.msra.mxu0 %v3189
    %3269 = vmatprep.subr.bf16.mxu0 0
    %3270 = vmatpush2.bf16.msra.mxu0 %v3204
    %3271 = vmatprep.subr.bf16.mxu0 0
    %3272 = vmatpush2.bf16.msra.mxu0 %v3203
    %3273 = vmatprep.subr.bf16.mxu0 0
    %3274 = vmatpush2.bf16.msra.mxu0 %v3202
    %3275 = vmatprep.subr.bf16.mxu0 0
    %3276 = vmatpush2.bf16.msra.mxu0 %v3201
    %3277 = vmatprep.subr.bf16.mxu0 0
    %3278 = vmatpush2.bf16.msra.mxu0 %v3200
    %3279 = vmatprep.subr.bf16.mxu0 0
    %3280 = vmatpush2.bf16.msra.mxu0 %v3199
    %3281 = vmatprep.subr.bf16.mxu0 0
    %3282 = vmatpush2.bf16.msra.mxu0 %v3198
    %3283 = vmatprep.subr.bf16.mxu0 0
    %3284 = vmatpush2.bf16.msra.mxu0 %v3197
    %3285 = vmatprep.mubr.bf16.mxu0 %v2983
    %3286 = vmatmul.mubr.bf16.gmra.mxu0 %v2982
    %v3287 = vpop.f32.mrf.mxu0
    %v3288 = vadd.f32 %v3059, %v3287
    %v3289 = vpop.f32.mrf.mxu0
    %v3290 = vpop.f32.mrf.mxu0
    %v3291 = vadd.f32 %v3059, %v3290
    %v3292 = vpop.f32.mrf.mxu0
    %3293 = vmatprep.mubr.bf16.mxu0 %v2987
    %3294 = vmatmul.mubr.bf16.gmra.mxu0 %v2986
    %v3295 = vpop.f32.mrf.mxu0
    %v3296 = vadd.f32 %v3059, %v3295
    %v3297 = vpop.f32.mrf.mxu0
    %v3298 = vpop.f32.mrf.mxu0
    %v3299 = vadd.f32 %v3059, %v3298
    %v3300 = vpop.f32.mrf.mxu0
    %3301 = vdwg.mxu0
    %3302 = vmatprep.subr.bf16.mxu0 0
    %3303 = vmatpush1.bf16.msra.mxu0 %v3212
    %3304 = vmatprep.subr.bf16.mxu0 0
    %3305 = vmatpush1.bf16.msra.mxu0 %v3211
    %3306 = vmatprep.subr.bf16.mxu0 0
    %3307 = vmatpush1.bf16.msra.mxu0 %v3210
    %3308 = vmatprep.subr.bf16.mxu0 0
    %3309 = vmatpush1.bf16.msra.mxu0 %v3209
    %3310 = vmatprep.subr.bf16.mxu0 0
    %3311 = vmatpush1.bf16.msra.mxu0 %v3208
    %3312 = vmatprep.subr.bf16.mxu0 0
    %3313 = vmatpush1.bf16.msra.mxu0 %v3207
    %3314 = vmatprep.subr.bf16.mxu0 0
    %3315 = vmatpush1.bf16.msra.mxu0 %v3206
    %3316 = vmatprep.subr.bf16.mxu0 0
    %3317 = vmatpush1.bf16.msra.mxu0 %v3205
    %3318 = vmatprep.subr.bf16.mxu0 0
    %3319 = vmatpush2.bf16.msra.mxu0 %v3220
    %3320 = vmatprep.subr.bf16.mxu0 0
    %3321 = vmatpush2.bf16.msra.mxu0 %v3219
    %3322 = vmatprep.subr.bf16.mxu0 0
    %3323 = vmatpush2.bf16.msra.mxu0 %v3218
    %3324 = vmatprep.subr.bf16.mxu0 0
    %3325 = vmatpush2.bf16.msra.mxu0 %v3217
    %3326 = vmatprep.subr.bf16.mxu0 0
    %3327 = vmatpush2.bf16.msra.mxu0 %v3216
    %3328 = vmatprep.subr.bf16.mxu0 0
    %3329 = vmatpush2.bf16.msra.mxu0 %v3215
    %3330 = vmatprep.subr.bf16.mxu0 0
    %3331 = vmatpush2.bf16.msra.mxu0 %v3214
    %3332 = vmatprep.subr.bf16.mxu0 0
    %3333 = vmatpush2.bf16.msra.mxu0 %v3213
    %3334 = vmatprep.mubr.bf16.mxu0 %v2985
    %3335 = vmatmul.mubr.bf16.gmra.mxu0 %v2984
    %v3336 = vpop.f32.mrf.mxu0
    %v3337 = vadd.f32 %v3288, %v3336
    %v3338 = vpop.f32.mrf.mxu0
    %v3339 = vpop.f32.mrf.mxu0
    %v3340 = vadd.f32 %v3291, %v3339
    %v3341 = vpop.f32.mrf.mxu0
    %3342 = vmatprep.mubr.bf16.mxu0 %v2989
    %3343 = vmatmul.mubr.bf16.gmra.mxu0 %v2988
    %v3344 = vpop.f32.mrf.mxu0
    %v3345 = vadd.f32 %v3296, %v3344
    %v3346 = vpop.f32.mrf.mxu0
    %v3347 = vpop.f32.mrf.mxu0
    %v3348 = vadd.f32 %v3299, %v3347
    %v3349 = vpop.f32.mrf.mxu0
    %3350 = vdwg.mxu0
    %3351 = vst.msk [vmem:[%s19] sm:$0xff] %vm81, %v3337
    %3352 = vst.msk [vmem:[%s19 + $0x8] sm:$0xff] %vm81, %v3340
    %3353 = vst.msk [vmem:[%s19 + $0x10] sm:$0xff] %vm81, %v3345
    %3354 = vst.msk [vmem:[%s19 + $0x18] sm:$0xff] %vm81, %v3348
    // Predicated region
    $region78: #{tpu_custom_call.1} parent=1 // pred_check
      _
    $region79: #{tpu_custom_call.1} parent=1 // pred_check_branch
      %3356 = sbr.rel (0) target = $region81
    $region80: #{tpu_custom_call.1} parent=1 // pred_region
      _
    $region81: #{tpu_custom_call.1} parent=1 // pred_fallthru
      _
    // Predicated region
    $region82: #{tpu_custom_call.1} parent=1 // pred_check
      _
    $region83: #{tpu_custom_call.1} parent=1 // pred_check_branch
      %3358 = sbr.rel (0) target = $region85
    $region84: #{tpu_custom_call.1} parent=1 // pred_region
      %s3360 = ssub.s32 512, 512
      %3361 = vsyncadd [#allocation6], %s3360
      %s3362 = sshll.u32 [#allocation5], 4
      %s3363 = int_to_ptr.vmem [resolvable:$true] %s3362
      %3368 = dma.vmem_to_hbm [thread:$0]  %s3363, 512, %s20, [#allocation6], 128, 128, 8
    $region85: #{tpu_custom_call.1} parent=1 // pred_fallthru
      _
    // Predicated region
    $region86: #{tpu_custom_call.1} parent=1 // pred_check
      _
    $region87: #{tpu_custom_call.1} parent=1 // pred_check_branch
      %3370 = sbr.rel (0) target = $region89
    $region88: #{tpu_custom_call.1} parent=1 // pred_region
      _
    $region89: #{tpu_custom_call.1} parent=1 // pred_fallthru
      _
    // Predicated region
    $region90: #{tpu_custom_call.1} parent=1 // pred_check
      _
    $region91: #{tpu_custom_call.1} parent=1 // pred_check_branch
      %3372 = sbr.rel (0) target = $region93
    $region92: #{tpu_custom_call.1} parent=1 // pred_region
      %3373 = dma.done [#allocation6], 512
    $region93: #{tpu_custom_call.1} parent=1 // pred_fallthru
      _
    %3374 = vsyncpa [#allocation6], 1

</llo_original>
